<compile_context>
chip_gen: v7x
topology: tpu7x:2x2x1
jax: 0.10.0
libtpu: 0.0.40
codegen_flags: <defaults>
</compile_context>

<pallas_src>
import functools

import numpy as np
import jax
import jax.numpy as jnp
from jax.experimental import pallas as pl
from jax.experimental.pallas import tpu as pltpu

BN_EPS = 1e-5
GUARD = 8  # extra zero rows appended to every flattened 2-D conv input (OOB guard)


# ----------------------------------------------------------------------------
# Feature probe: single-buffered constant operands (pl.Buffered(1))
# ----------------------------------------------------------------------------
_SINGLE_BUF = None


def _single_buffer_ok():
    """Probe once whether pipeline_mode=pl.Buffered(1) is accepted on this jax/TPU."""
    global _SINGLE_BUF
    if _SINGLE_BUF is None:
        try:
            def _cp(x_ref, o_ref):
                o_ref[...] = x_ref[...]

            x = jnp.zeros((8, 128), jnp.float32)
            y = pl.pallas_call(
                _cp,
                out_shape=jax.ShapeDtypeStruct((8, 128), jnp.float32),
                grid=(2,),
                in_specs=[pl.BlockSpec((8, 128), lambda i: (0, 0),
                                       pipeline_mode=pl.Buffered(1))],
                out_specs=pl.BlockSpec((8, 128), lambda i: (0, 0)),
            )(x)
            jax.block_until_ready(y)
            _SINGLE_BUF = True
        except Exception:
            _SINGLE_BUF = False
    return _SINGLE_BUF


def _const_spec(shape, index_map):
    """BlockSpec for operands whose block index never changes across the grid."""
    if _single_buffer_ok():
        return pl.BlockSpec(shape, index_map, pipeline_mode=pl.Buffered(1))
    return pl.BlockSpec(shape, index_map)


def _padded_bytes(shape, itemsize):
    """Upper bound of VMEM bytes for a block, padded to the (8, 128) vreg tiling."""
    shape = tuple(shape)
    if len(shape) == 1:
        shape = (1,) + shape
    lead = 1
    for d in shape[:-2]:
        lead *= d
    sub = -(-shape[-2] // 8) * 8
    lane = -(-shape[-1] // 128) * 128
    return lead * sub * lane * itemsize


# ----------------------------------------------------------------------------
# Pallas kernel: flat tap-accumulation conv + folded BN bias + ReLU
#                (+ optional column mask and fused global mean)
# ----------------------------------------------------------------------------
def _flat_conv_kernel(x_ref, w_ref, b_ref, m_ref, o_ref, acc_ref, *,
                      tap_offsets, m_rows, relu, fuse_mean, inv_denom):
    acc_ref[...] = jnp.zeros_like(acc_ref)
    cin = w_ref.shape[1]
    for t, off in enumerate(tap_offsets):
        xs = x_ref[0, off:off + m_rows, :]          # (M, Cin) bf16, static offset slice
        w_t = w_ref[t]                              # (Cin, Cout) bf16
        if cin == 1:
            # K=1 "matmul" == rank-1 broadcast multiply; keep it off the MXU.
            acc_ref[...] += xs.astype(jnp.float32) * w_t.astype(jnp.float32)
        else:
            acc_ref[...] += jnp.dot(xs, w_t, preferred_element_type=jnp.float32)
    y = acc_ref[...] + b_ref[...]                   # folded conv-bias + BN shift
    if relu:
        y = jnp.maximum(y, 0.0)
    y = y * m_ref[...]                              # zero out garbage columns (2-D convs)
    if fuse_mean:
        o_ref[0] = (jnp.sum(y, axis=0, keepdims=True) * inv_denom).astype(o_ref.dtype)
    else:
        o_ref[0] = y.astype(o_ref.dtype)


def _conv_flat(x_flat, w, bias, mask, m_rows, tap_offsets, *,
               relu=True, fuse_mean=False, mean_denom=1.0):
    """x_flat: (B, Lflat, Cin) bf16, w: (k, Cin, Cout) bf16, bias: (1, Cout) f32,
    mask: (m_rows, 1) f32. Returns (B, m_rows, Cout) bf16, or (B, 1, Cout) f32 if
    fuse_mean (global average over the valid output positions)."""
    B, l_flat, cin = x_flat.shape
    k, _, cout = w.shape
    out_rows = 1 if fuse_mean else m_rows
    out_dtype = jnp.float32 if fuse_mean else jnp.bfloat16

    wbuf = 1 if _single_buffer_ok() else 2
    need = (2 * _padded_bytes((l_flat, cin), 2)            # input  (double-buffered, bf16)
            + wbuf * _padded_bytes((k, cin, cout), 2)      # weights (bf16)
            + wbuf * _padded_bytes((1, cout), 4)           # bias   (f32)
            + wbuf * _padded_bytes((m_rows, 1), 4)         # column mask (f32)
            + 2 * _padded_bytes((out_rows, cout), 4)       # output (double-buffered)
            + _padded_bytes((m_rows, cout), 4))            # f32 accumulator scratch
    # Headroom for compiler temporaries; capped so the request stays valid on v7x (64 MiB).
    vmem_limit = int(min(max(2 * need + (8 << 20), 16 << 20), 48 << 20))

    kernel = functools.partial(
        _flat_conv_kernel,
        tap_offsets=tuple(int(t) for t in tap_offsets),
        m_rows=int(m_rows), relu=relu, fuse_mean=fuse_mean,
        inv_denom=1.0 / float(mean_denom))

    return pl.pallas_call(
        kernel,
        out_shape=jax.ShapeDtypeStruct((B, out_rows, cout), out_dtype),
        grid=(B,),
        in_specs=[
            pl.BlockSpec((1, l_flat, cin), lambda b: (b, 0, 0)),
            _const_spec((k, cin, cout), lambda b: (0, 0, 0)),
            _const_spec((1, cout), lambda b: (0, 0)),
            _const_spec((m_rows, 1), lambda b: (0, 0)),
        ],
        out_specs=pl.BlockSpec((1, out_rows, cout), lambda b: (b, 0, 0)),
        scratch_shapes=[pltpu.VMEM((m_rows, cout), jnp.float32)],
        compiler_params=pltpu.CompilerParams(
            dimension_semantics=("parallel",),
            vmem_limit_bytes=vmem_limit),
    )(x_flat, w, bias, mask)


# ----------------------------------------------------------------------------
# Conv wrappers (1-D and 2-D via flattened padded layout) + cheap host glue
# ----------------------------------------------------------------------------
def conv1d_bn_relu(x, p, *, fuse_mean=False):
    # x: (B, L, Cin) bf16; "same" conv, kernel size inferred from the folded weight.
    B, L, _ = x.shape
    k = p["w"].shape[0]
    pad = (k - 1) // 2
    x_flat = jnp.pad(x, ((0, 0), (pad, pad), (0, 0)))
    mask = jnp.ones((L, 1), jnp.float32)
    return _conv_flat(x_flat, p["w"], p["b"], mask, L, tuple(range(k)),
                      relu=True, fuse_mean=fuse_mean, mean_denom=float(L))


def conv2d_bn_relu(x_flat, p, H, W, *, fuse_mean=False):
    # x_flat: (B, (H+2)*(W+2)+GUARD, Cin) bf16 (padded image flattened row-major).
    Wp = W + 2
    taps = tuple(kh * Wp + kw for kh in range(3) for kw in range(3))
    M = H * Wp
    col = np.arange(M) % Wp
    mask = jnp.asarray((col < W).astype(np.float32).reshape(M, 1))
    return _conv_flat(x_flat, p["w"], p["b"], mask, M, taps,
                      relu=True, fuse_mean=fuse_mean, mean_denom=float(H * W))


def pad_image_flat(x):
    # (B, H, W, C) -> (B, (H+2)*(W+2)+GUARD, C): zero halo pad, flatten, OOB guard.
    B, H, W, C = x.shape
    xp = jnp.pad(x, ((0, 0), (1, 1), (1, 1), (0, 0)))
    xf = xp.reshape(B, (H + 2) * (W + 2), C)
    return jnp.pad(xf, ((0, 0), (0, GUARD), (0, 0)))


def chain_flat(y_flat, W):
    # Masked flat conv output -> next (same-resolution) conv's padded-flat input,
    # using only zero-concat (the masked garbage columns double as the W-padding).
    B, _, C = y_flat.shape
    Wp = W + 2
    front = jnp.zeros((B, Wp + 1, C), y_flat.dtype)
    back = jnp.zeros((B, Wp - 1 + GUARD, C), y_flat.dtype)
    return jnp.concatenate([front, y_flat, back], axis=1)


def unflatten_valid(y_flat, H, W):
    # (B, H*(W+2), C) masked -> (B, H, W, C)
    B, _, C = y_flat.shape
    return y_flat.reshape(B, H, W + 2, C)[:, :, :W, :]


# TODO(synk): the 2x2 max-pools (and flat-M tiling for very large images) are left to
#             XLA rather than fused into the conv epilogue.
def maxpool1d_2(x):      # (B, L, C) -> (B, L//2, C)
    B, L, C = x.shape
    return x.reshape(B, L // 2, 2, C).max(axis=2)


def maxpool2d_2(x):      # (B, H, W, C) -> (B, H//2, W//2, C)
    B, H, W, C = x.shape
    return x.reshape(B, H // 2, 2, W // 2, 2, C).max(axis=(2, 4))


# ----------------------------------------------------------------------------
# Pallas kernel: fused 3-layer classifier (Linear-ReLU-Linear-ReLU-Linear)
# ----------------------------------------------------------------------------
def _classifier_kernel(x_ref, w1_ref, b1_ref, w2_ref, b2_ref, w3_ref, b3_ref, o_ref):
    x = x_ref[...].astype(jnp.bfloat16)
    h = jnp.dot(x, w1_ref[...], preferred_element_type=jnp.float32) + b1_ref[...]
    h = jnp.maximum(h, 0.0).astype(jnp.bfloat16)
    h = jnp.dot(h, w2_ref[...], preferred_element_type=jnp.float32) + b2_ref[...]
    h = jnp.maximum(h, 0.0).astype(jnp.bfloat16)
    out = jnp.dot(h, w3_ref[...], preferred_element_type=jnp.float32) + b3_ref[...]
    o_ref[...] = out.astype(o_ref.dtype)


def classifier_forward(p, fused):
    B = fused.shape[0]
    num_classes = p["fc3"]["w"].shape[1]
    return pl.pallas_call(
        _classifier_kernel,
        out_shape=jax.ShapeDtypeStruct((B, num_classes), jnp.float32),
    )(fused, p["fc1"]["w"], p["fc1"]["b"], p["fc2"]["w"], p["fc2"]["b"],
      p["fc3"]["w"], p["fc3"]["b"])


# ----------------------------------------------------------------------------
# Deterministic parameter construction (mirrors the PyTorch module) + folding
# ----------------------------------------------------------------------------
def make_params(key, num_classes=12):
    keys = iter(jax.random.split(key, 128))

    def nrm(shape, std=0.05):
        return (std * jax.random.normal(next(keys), shape)).astype(jnp.float32)

    def bn(c):
        return dict(gamma=1.0 + nrm((c,), 0.02), beta=nrm((c,), 0.02),
                    mean=nrm((c,), 0.02), var=1.0 + jnp.abs(nrm((c,), 0.02)))

    def conv1d(cin, cout, k):
        return dict(w=nrm((k, cin, cout)), b=nrm((cout,)), **bn(cout))

    def conv2d(cin, cout):
        return dict(w=nrm((9, cin, cout)), b=nrm((cout,)), **bn(cout))

    def linear(cin, cout):
        return dict(w=nrm((cin, cout)), b=nrm((cout,)))

    return dict(
        # IQ branch: Conv2d(1,64,(1,2)) front-end + 4 Conv1d+BN stages
        iqc_w=nrm((2, 64)), iqc_b=nrm((64,)),
        iq_c1=conv1d(64, 128, 7), iq_c2=conv1d(128, 256, 5),
        iq_c3=conv1d(256, 512, 3), iq_c4=conv1d(512, 512, 3),
        # STFT branch (VGG-like 3x3 pairs)
        s11=conv2d(1, 64), s12=conv2d(64, 64),
        s21=conv2d(64, 128), s22=conv2d(128, 128),
        s31=conv2d(128, 256), s32=conv2d(256, 256),
        s41=conv2d(256, 512), s42=conv2d(512, 512),
        # Classifier ('concat' fusion -> 512 + 512 = 1024)
        fc1=linear(1024, 512), fc2=linear(512, 256), fc3=linear(256, num_classes),
    )


def prepare_params(raw):
    """Fold BN + bias into conv weights, compose the IQ front-end into conv1, cast to bf16."""
    def fold_conv(p):
        s = p["gamma"] / jnp.sqrt(p["var"] + BN_EPS)
        w = (p["w"] * s[None, None, :]).astype(jnp.bfloat16)
        b = (p["b"] * s + p["beta"] - p["mean"] * s).reshape(1, -1).astype(jnp.float32)
        return dict(w=w, b=b)

    def fold_linear(p):
        return dict(w=p["w"].astype(jnp.bfloat16),
                    b=p["b"].reshape(1, -1).astype(jnp.float32))

    out = {}
    # Compose Conv2d(1,64,(1,2)) (a per-sample linear 2->64) into iq_c1 exactly, via a
    # bias-augmented input channel: input becomes (I, Q, 1); W0aug = [[W0],[b0]] (3, 64).
    w0_aug = jnp.concatenate([raw["iqc_w"], raw["iqc_b"].reshape(1, -1)], axis=0)  # (3, 64)
    c1 = dict(raw["iq_c1"])
    c1["w"] = jnp.einsum("ac,kcd->kad", w0_aug, raw["iq_c1"]["w"])                 # (7, 3, 128)
    out["iq_c1"] = fold_conv(c1)
    for name in ["iq_c2", "iq_c3", "iq_c4",
                 "s11", "s12", "s21", "s22", "s31", "s32", "s41", "s42"]:
        out[name] = fold_conv(raw[name])
    for name in ["fc1", "fc2", "fc3"]:
        out[name] = fold_linear(raw[name])
    return out


# ----------------------------------------------------------------------------
# Forward pass
# ----------------------------------------------------------------------------
def iq_extractor_forward(p, iq):
    # iq: (B, L, 2) f32 -> bias-augmented (B, L, 3) bf16 (IQ front-end is folded in).
    B, L, _ = iq.shape
    x = jnp.concatenate([iq, jnp.ones((B, L, 1), iq.dtype)], axis=2).astype(jnp.bfloat16)
    x = maxpool1d_2(conv1d_bn_relu(x, p["iq_c1"]))      # k=7 (composed), -> (B, L/2, 128)
    x = maxpool1d_2(conv1d_bn_relu(x, p["iq_c2"]))      # k=5, -> (B, L/4, 256)
    x = maxpool1d_2(conv1d_bn_relu(x, p["iq_c3"]))      # k=3, -> (B, L/8, 512)
    feat = conv1d_bn_relu(x, p["iq_c4"], fuse_mean=True)  # fused AdaptiveAvgPool1d(1)
    return feat.reshape(B, -1)                          # (B, 512) f32


def stft_extractor_forward(p, stft):
    # stft: (B, 1, H, W) NCHW -> NHWC bf16
    x = jnp.transpose(stft, (0, 2, 3, 1)).astype(jnp.bfloat16)
    B, H, W, _ = x.shape

    y = conv2d_bn_relu(pad_image_flat(x), p["s11"], H, W)
    y = conv2d_bn_relu(chain_flat(y, W), p["s12"], H, W)
    x = maxpool2d_2(unflatten_valid(y, H, W)); H //= 2; W //= 2

    y = conv2d_bn_relu(pad_image_flat(x), p["s21"], H, W)
    y = conv2d_bn_relu(chain_flat(y, W), p["s22"], H, W)
    x = maxpool2d_2(unflatten_valid(y, H, W)); H //= 2; W //= 2

    y = conv2d_bn_relu(pad_image_flat(x), p["s31"], H, W)
    y = conv2d_bn_relu(chain_flat(y, W), p["s32"], H, W)
    x = maxpool2d_2(unflatten_valid(y, H, W)); H //= 2; W //= 2

    y = conv2d_bn_relu(pad_image_flat(x), p["s41"], H, W)
    feat = conv2d_bn_relu(chain_flat(y, W), p["s42"], H, W, fuse_mean=True)
    return feat.reshape(B, -1)                          # (B, 512) f32 (fused global mean)


def fusion_model_forward(params, iq_data, stft_data):
    iq_feat = iq_extractor_forward(params, iq_data)
    stft_feat = stft_extractor_forward(params, stft_data)
    fused = jnp.concatenate([iq_feat, stft_feat], axis=1)   # 'concat' fusion -> (B, 1024)
    return classifier_forward(params, fused)                # (B, num_classes) f32


# TODO(synk): 'add'/'attention' fusion modes of FusionModel are not exercised here
#             (module default is 'concat'); they would reuse the same kernels.

if __name__ == "__main__":
    key = jax.random.PRNGKey(0)
    k_params, k_iq, k_stft = jax.random.split(key, 3)

    B, L, H, W = 2, 16, 16, 16
    raw_params = make_params(k_params, num_classes=12)
    params = prepare_params(raw_params)

    iq_data = jax.random.normal(k_iq, (B, L, 2), dtype=jnp.float32)
    stft_data = jax.random.normal(k_stft, (B, 1, H, W), dtype=jnp.float32)

    _single_buffer_ok()   # run the Buffered(1) probe once before tracing the model

    fwd = jax.jit(fusion_model_forward)
    logits = jax.block_until_ready(fwd(params, iq_data, stft_data))
    assert logits.shape == (B, 12), logits.shape
    print("KERNEL_OK")
</pallas_src>

<mosaic_0001>
module attributes {stable_mosaic.version = 11 : i64} {
  func.func @_cp(%arg0: i32, %arg1: memref<8x128xf32, #tpu.memory_space<vmem>>, %arg2: memref<8x128xf32, #tpu.memory_space<vmem>>) attributes {dimension_semantics = [#tpu.dimension_semantics<arbitrary>], iteration_bounds = array<i64: 2>, scalar_prefetch = 0 : i64, scratch_operands = 0 : i64, tpu.core_type = #tpu.core_type<tc>, window_params = [{pipeline_mode = #tpu.pipeline_mode<synchronous>, transform_indices = @transform_0, window_bounds = array<i64: 8, 128>}, {pipeline_mode = #tpu.pipeline_mode<synchronous>, transform_indices = @transform_1, window_bounds = array<i64: 8, 128>}]} {
    %c0 = arith.constant 0 : index
    %c0_0 = arith.constant 0 : index
    %0 = vector.load %arg1[%c0, %c0_0] : memref<8x128xf32, #tpu.memory_space<vmem>>, vector<8x128xf32>
    %c0_1 = arith.constant 0 : index
    %c0_2 = arith.constant 0 : index
    %1 = vector.load %arg2[%c0_1, %c0_2] : memref<8x128xf32, #tpu.memory_space<vmem>>, vector<8x128xf32>
    tpu.vector_store %arg2[%c0_1, %c0_2], %0 {strides = array<i32>} : memref<8x128xf32, #tpu.memory_space<vmem>>, vector<8x128xf32>,
    return
  }
  func.func @transform_0(%arg0: i32) -> (i32, i32) {
    %c0_i32 = arith.constant 0 : i32
    %c0_i32_0 = arith.constant 0 : i32
    %c0_i32_1 = arith.constant 0 : i32
    return %c0_i32, %c0_i32_0 : i32, i32
  }
  func.func @transform_1(%arg0: i32) -> (i32, i32) {
    %c0_i32 = arith.constant 0 : i32
    %c0_i32_0 = arith.constant 0 : i32
    %c0_i32_1 = arith.constant 0 : i32
    return %c0_i32, %c0_i32_0 : i32, i32
  }
}

module attributes {stable_mosaic.version = 11 : i64} {
  func.func @_flat_conv_kernel(%arg0: i32, %arg1: memref<1x332x1xbf16, #tpu.memory_space<vmem>>, %arg2: memref<9x1x64xbf16, #tpu.memory_space<vmem>>, %arg3: memref<1x64xf32, #tpu.memory_space<vmem>>, %arg4: memref<288x1xf32, #tpu.memory_space<vmem>>, %arg5: memref<1x288x64xbf16, #tpu.memory_space<vmem>>, %arg6: memref<288x64xf32, #tpu.memory_space<vmem>>) attributes {dimension_semantics = [#tpu.dimension_semantics<parallel>], iteration_bounds = array<i64: 2>, scalar_prefetch = 0 : i64, scratch_operands = 1 : i64, tpu.core_type = #tpu.core_type<tc>, window_params = [{transform_indices = @transform_0, window_bounds = array<i64: 1, 332, 1>}, {pipeline_mode = #tpu.pipeline_mode<synchronous>, transform_indices = @transform_1, window_bounds = array<i64: 9, 1, 64>}, {pipeline_mode = #tpu.pipeline_mode<synchronous>, transform_indices = @transform_2, window_bounds = array<i64: 1, 64>}, {pipeline_mode = #tpu.pipeline_mode<synchronous>, transform_indices = @transform_3, window_bounds = array<i64: 288, 1>}, {transform_indices = @transform_4, window_bounds = array<i64: 1, 288, 64>}]} {
    %cst = arith.constant 0.000000e+00 : f32
    %0 = vector.broadcast %cst : f32 to vector<288x64xf32>
    %c0 = arith.constant 0 : index
    %c0_0 = arith.constant 0 : index
    %1 = vector.load %arg6[%c0, %c0_0] : memref<288x64xf32, #tpu.memory_space<vmem>>, vector<288x64xf32>
    tpu.vector_store %arg6[%c0, %c0_0], %0 {strides = array<i32>} : memref<288x64xf32, #tpu.memory_space<vmem>>, vector<288x64xf32>,
    %c0_1 = arith.constant 0 : index
    %c0_2 = arith.constant 0 : index
    %c0_3 = arith.constant 0 : index
    %2 = vector.load %arg1[%c0_1, %c0_2, %c0_3] : memref<1x332x1xbf16, #tpu.memory_space<vmem>>, vector<1x288x1xbf16>
    %3 = vector.shape_cast %2 : vector<1x288x1xbf16> to vector<288x1xbf16>
    %c0_4 = arith.constant 0 : index
    %c0_5 = arith.constant 0 : index
    %c0_6 = arith.constant 0 : index
    %4 = vector.load %arg2[%c0_4, %c0_5, %c0_6] : memref<9x1x64xbf16, #tpu.memory_space<vmem>>, vector<1x1x64xbf16>
    %5 = vector.shape_cast %4 : vector<1x1x64xbf16> to vector<1x64xbf16>
    %c0_7 = arith.constant 0 : index
    %c0_8 = arith.constant 0 : index
    %6 = vector.load %arg6[%c0_7, %c0_8] : memref<288x64xf32, #tpu.memory_space<vmem>>, vector<288x64xf32>
    %7 = arith.extf %3 : vector<288x1xbf16> to vector<288x1xf32>
    %8 = arith.extf %5 : vector<1x64xbf16> to vector<1x64xf32>
    %9 = vector.broadcast %7 : vector<288x1xf32> to vector<288x64xf32>
    %10 = vector.broadcast %8 : vector<1x64xf32> to vector<288x64xf32>
    %11 = arith.mulf %9, %10 : vector<288x64xf32>
    %12 = arith.addf %6, %11 : vector<288x64xf32>
    %c0_9 = arith.constant 0 : index
    %c0_10 = arith.constant 0 : index
    %13 = vector.load %arg6[%c0_9, %c0_10] : memref<288x64xf32, #tpu.memory_space<vmem>>, vector<288x64xf32>
    tpu.vector_store %arg6[%c0_9, %c0_10], %12 {strides = array<i32>} : memref<288x64xf32, #tpu.memory_space<vmem>>, vector<288x64xf32>,
    %c0_11 = arith.constant 0 : index
    %c1 = arith.constant 1 : index
    %c0_12 = arith.constant 0 : index
    %14 = vector.load %arg1[%c0_11, %c1, %c0_12] : memref<1x332x1xbf16, #tpu.memory_space<vmem>>, vector<1x288x1xbf16>
    %15 = vector.shape_cast %14 : vector<1x288x1xbf16> to vector<288x1xbf16>
    %c1_13 = arith.constant 1 : index
    %c0_14 = arith.constant 0 : index
    %c0_15 = arith.constant 0 : index
    %16 = vector.load %arg2[%c1_13, %c0_14, %c0_15] : memref<9x1x64xbf16, #tpu.memory_space<vmem>>, vector<1x1x64xbf16>
    %17 = vector.shape_cast %16 : vector<1x1x64xbf16> to vector<1x64xbf16>
    %c0_16 = arith.constant 0 : index
    %c0_17 = arith.constant 0 : index
    %18 = vector.load %arg6[%c0_16, %c0_17] : memref<288x64xf32, #tpu.memory_space<vmem>>, vector<288x64xf32>
    %19 = arith.extf %15 : vector<288x1xbf16> to vector<288x1xf32>
    %20 = arith.extf %17 : vector<1x64xbf16> to vector<1x64xf32>
    %21 = vector.broadcast %19 : vector<288x1xf32> to vector<288x64xf32>
    %22 = vector.broadcast %20 : vector<1x64xf32> to vector<288x64xf32>
    %23 = arith.mulf %21, %22 : vector<288x64xf32>
    %24 = arith.addf %18, %23 : vector<288x64xf32>
    %c0_18 = arith.constant 0 : index
    %c0_19 = arith.constant 0 : index
    %25 = vector.load %arg6[%c0_18, %c0_19] : memref<288x64xf32, #tpu.memory_space<vmem>>, vector<288x64xf32>
    tpu.vector_store %arg6[%c0_18, %c0_19], %24 {strides = array<i32>} : memref<288x64xf32, #tpu.memory_space<vmem>>, vector<288x64xf32>,
    %c0_20 = arith.constant 0 : index
    %c2 = arith.constant 2 : index
    %c0_21 = arith.constant 0 : index
    %26 = vector.load %arg1[%c0_20, %c2, %c0_21] : memref<1x332x1xbf16, #tpu.memory_space<vmem>>, vector<1x288x1xbf16>
    %27 = vector.shape_cast %26 : vector<1x288x1xbf16> to vector<288x1xbf16>
    %c2_22 = arith.constant 2 : index
    %c0_23 = arith.constant 0 : index
    %c0_24 = arith.constant 0 : index
    %28 = vector.load %arg2[%c2_22, %c0_23, %c0_24] : memref<9x1x64xbf16, #tpu.memory_space<vmem>>, vector<1x1x64xbf16>
    %29 = vector.shape_cast %28 : vector<1x1x64xbf16> to vector<1x64xbf16>
    %c0_25 = arith.constant 0 : index
    %c0_26 = arith.constant 0 : index
    %30 = vector.load %arg6[%c0_25, %c0_26] : memref<288x64xf32, #tpu.memory_space<vmem>>, vector<288x64xf32>
    %31 = arith.extf %27 : vector<288x1xbf16> to vector<288x1xf32>
    %32 = arith.extf %29 : vector<1x64xbf16> to vector<1x64xf32>
    %33 = vector.broadcast %31 : vector<288x1xf32> to vector<288x64xf32>
    %34 = vector.broadcast %32 : vector<1x64xf32> to vector<288x64xf32>
    %35 = arith.mulf %33, %34 : vector<288x64xf32>
    %36 = arith.addf %30, %35 : vector<288x64xf32>
    %c0_27 = arith.constant 0 : index
    %c0_28 = arith.constant 0 : index
    %37 = vector.load %arg6[%c0_27, %c0_28] : memref<288x64xf32, #tpu.memory_space<vmem>>, vector<288x64xf32>
    tpu.vector_store %arg6[%c0_27, %c0_28], %36 {strides = array<i32>} : memref<288x64xf32, #tpu.memory_space<vmem>>, vector<288x64xf32>,
    %c0_29 = arith.constant 0 : index
    %c18 = arith.constant 18 : index
    %c0_30 = arith.constant 0 : index
    %38 = vector.load %arg1[%c0_29, %c18, %c0_30] : memref<1x332x1xbf16, #tpu.memory_space<vmem>>, vector<1x288x1xbf16>
    %39 = vector.shape_cast %38 : vector<1x288x1xbf16> to vector<288x1xbf16>
    %c3 = arith.constant 3 : index
    %c0_31 = arith.constant 0 : index
    %c0_32 = arith.constant 0 : index
    %40 = vector.load %arg2[%c3, %c0_31, %c0_32] : memref<9x1x64xbf16, #tpu.memory_space<vmem>>, vector<1x1x64xbf16>
    %41 = vector.shape_cast %40 : vector<1x1x64xbf16> to vector<1x64xbf16>
    %c0_33 = arith.constant 0 : index
    %c0_34 = arith.constant 0 : index
    %42 = vector.load %arg6[%c0_33, %c0_34] : memref<288x64xf32, #tpu.memory_space<vmem>>, vector<288x64xf32>
    %43 = arith.extf %39 : vector<288x1xbf16> to vector<288x1xf32>
    %44 = arith.extf %41 : vector<1x64xbf16> to vector<1x64xf32>
    %45 = vector.broadcast %43 : vector<288x1xf32> to vector<288x64xf32>
    %46 = vector.broadcast %44 : vector<1x64xf32> to vector<288x64xf32>
    %47 = arith.mulf %45, %46 : vector<288x64xf32>
    %48 = arith.addf %42, %47 : vector<288x64xf32>
    %c0_35 = arith.constant 0 : index
    %c0_36 = arith.constant 0 : index
    %49 = vector.load %arg6[%c0_35, %c0_36] : memref<288x64xf32, #tpu.memory_space<vmem>>, vector<288x64xf32>
    tpu.vector_store %arg6[%c0_35, %c0_36], %48 {strides = array<i32>} : memref<288x64xf32, #tpu.memory_space<vmem>>, vector<288x64xf32>,
    %c0_37 = arith.constant 0 : index
    %c19 = arith.constant 19 : index
    %c0_38 = arith.constant 0 : index
    %50 = vector.load %arg1[%c0_37, %c19, %c0_38] : memref<1x332x1xbf16, #tpu.memory_space<vmem>>, vector<1x288x1xbf16>
    %51 = vector.shape_cast %50 : vector<1x288x1xbf16> to vector<288x1xbf16>
    %c4 = arith.constant 4 : index
    %c0_39 = arith.constant 0 : index
    %c0_40 = arith.constant 0 : index
    %52 = vector.load %arg2[%c4, %c0_39, %c0_40] : memref<9x1x64xbf16, #tpu.memory_space<vmem>>, vector<1x1x64xbf16>
    %53 = vector.shape_cast %52 : vector<1x1x64xbf16> to vector<1x64xbf16>
    %c0_41 = arith.constant 0 : index
    %c0_42 = arith.constant 0 : index
    %54 = vector.load %arg6[%c0_41, %c0_42] : memref<288x64xf32, #tpu.memory_space<vmem>>, vector<288x64xf32>
    %55 = arith.extf %51 : vector<288x1xbf16> to vector<288x1xf32>
    %56 = arith.extf %53 : vector<1x64xbf16> to vector<1x64xf32>
    %57 = vector.broadcast %55 : vector<288x1xf32> to vector<288x64xf32>
    %58 = vector.broadcast %56 : vector<1x64xf32> to vector<288x64xf32>
    %59 = arith.mulf %57, %58 : vector<288x64xf32>
    %60 = arith.addf %54, %59 : vector<288x64xf32>
    %c0_43 = arith.constant 0 : index
    %c0_44 = arith.constant 0 : index
    %61 = vector.load %arg6[%c0_43, %c0_44] : memref<288x64xf32, #tpu.memory_space<vmem>>, vector<288x64xf32>
    tpu.vector_store %arg6[%c0_43, %c0_44], %60 {strides = array<i32>} : memref<288x64xf32, #tpu.memory_space<vmem>>, vector<288x64xf32>,
    %c0_45 = arith.constant 0 : index
    %c20 = arith.constant 20 : index
    %c0_46 = arith.constant 0 : index
    %62 = vector.load %arg1[%c0_45, %c20, %c0_46] : memref<1x332x1xbf16, #tpu.memory_space<vmem>>, vector<1x288x1xbf16>
    %63 = vector.shape_cast %62 : vector<1x288x1xbf16> to vector<288x1xbf16>
    %c5 = arith.constant 5 : index
    %c0_47 = arith.constant 0 : index
    %c0_48 = arith.constant 0 : index
    %64 = vector.load %arg2[%c5, %c0_47, %c0_48] : memref<9x1x64xbf16, #tpu.memory_space<vmem>>, vector<1x1x64xbf16>
    %65 = vector.shape_cast %64 : vector<1x1x64xbf16> to vector<1x64xbf16>
    %c0_49 = arith.constant 0 : index
    %c0_50 = arith.constant 0 : index
    %66 = vector.load %arg6[%c0_49, %c0_50] : memref<288x64xf32, #tpu.memory_space<vmem>>, vector<288x64xf32>
    %67 = arith.extf %63 : vector<288x1xbf16> to vector<288x1xf32>
    %68 = arith.extf %65 : vector<1x64xbf16> to vector<1x64xf32>
    %69 = vector.broadcast %67 : vector<288x1xf32> to vector<288x64xf32>
    %70 = vector.broadcast %68 : vector<1x64xf32> to vector<288x64xf32>
    %71 = arith.mulf %69, %70 : vector<288x64xf32>
    %72 = arith.addf %66, %71 : vector<288x64xf32>
    %c0_51 = arith.constant 0 : index
    %c0_52 = arith.constant 0 : index
    %73 = vector.load %arg6[%c0_51, %c0_52] : memref<288x64xf32, #tpu.memory_space<vmem>>, vector<288x64xf32>
    tpu.vector_store %arg6[%c0_51, %c0_52], %72 {strides = array<i32>} : memref<288x64xf32, #tpu.memory_space<vmem>>, vector<288x64xf32>,
    %c0_53 = arith.constant 0 : index
    %c36 = arith.constant 36 : index
    %c0_54 = arith.constant 0 : index
    %74 = vector.load %arg1[%c0_53, %c36, %c0_54] : memref<1x332x1xbf16, #tpu.memory_space<vmem>>, vector<1x288x1xbf16>
    %75 = vector.shape_cast %74 : vector<1x288x1xbf16> to vector<288x1xbf16>
    %c6 = arith.constant 6 : index
    %c0_55 = arith.constant 0 : index
    %c0_56 = arith.constant 0 : index
    %76 = vector.load %arg2[%c6, %c0_55, %c0_56] : memref<9x1x64xbf16, #tpu.memory_space<vmem>>, vector<1x1x64xbf16>
    %77 = vector.shape_cast %76 : vector<1x1x64xbf16> to vector<1x64xbf16>
    %c0_57 = arith.constant 0 : index
    %c0_58 = arith.constant 0 : index
    %78 = vector.load %arg6[%c0_57, %c0_58] : memref<288x64xf32, #tpu.memory_space<vmem>>, vector<288x64xf32>
    %79 = arith.extf %75 : vector<288x1xbf16> to vector<288x1xf32>
    %80 = arith.extf %77 : vector<1x64xbf16> to vector<1x64xf32>
    %81 = vector.broadcast %79 : vector<288x1xf32> to vector<288x64xf32>
    %82 = vector.broadcast %80 : vector<1x64xf32> to vector<288x64xf32>
    %83 = arith.mulf %81, %82 : vector<288x64xf32>
    %84 = arith.addf %78, %83 : vector<288x64xf32>
    %c0_59 = arith.constant 0 : index
    %c0_60 = arith.constant 0 : index
    %85 = vector.load %arg6[%c0_59, %c0_60] : memref<288x64xf32, #tpu.memory_space<vmem>>, vector<288x64xf32>
    tpu.vector_store %arg6[%c0_59, %c0_60], %84 {strides = array<i32>} : memref<288x64xf32, #tpu.memory_space<vmem>>, vector<288x64xf32>,
    %c0_61 = arith.constant 0 : index
    %c37 = arith.constant 37 : index
    %c0_62 = arith.constant 0 : index
    %86 = vector.load %arg1[%c0_61, %c37, %c0_62] : memref<1x332x1xbf16, #tpu.memory_space<vmem>>, vector<1x288x1xbf16>
    %87 = vector.shape_cast %86 : vector<1x288x1xbf16> to vector<288x1xbf16>
    %c7 = arith.constant 7 : index
    %c0_63 = arith.constant 0 : index
    %c0_64 = arith.constant 0 : index
    %88 = vector.load %arg2[%c7, %c0_63, %c0_64] : memref<9x1x64xbf16, #tpu.memory_space<vmem>>, vector<1x1x64xbf16>
    %89 = vector.shape_cast %88 : vector<1x1x64xbf16> to vector<1x64xbf16>
    %c0_65 = arith.constant 0 : index
    %c0_66 = arith.constant 0 : index
    %90 = vector.load %arg6[%c0_65, %c0_66] : memref<288x64xf32, #tpu.memory_space<vmem>>, vector<288x64xf32>
    %91 = arith.extf %87 : vector<288x1xbf16> to vector<288x1xf32>
    %92 = arith.extf %89 : vector<1x64xbf16> to vector<1x64xf32>
    %93 = vector.broadcast %91 : vector<288x1xf32> to vector<288x64xf32>
    %94 = vector.broadcast %92 : vector<1x64xf32> to vector<288x64xf32>
    %95 = arith.mulf %93, %94 : vector<288x64xf32>
    %96 = arith.addf %90, %95 : vector<288x64xf32>
    %c0_67 = arith.constant 0 : index
    %c0_68 = arith.constant 0 : index
    %97 = vector.load %arg6[%c0_67, %c0_68] : memref<288x64xf32, #tpu.memory_space<vmem>>, vector<288x64xf32>
    tpu.vector_store %arg6[%c0_67, %c0_68], %96 {strides = array<i32>} : memref<288x64xf32, #tpu.memory_space<vmem>>, vector<288x64xf32>,
    %c0_69 = arith.constant 0 : index
    %c38 = arith.constant 38 : index
    %c0_70 = arith.constant 0 : index
    %98 = vector.load %arg1[%c0_69, %c38, %c0_70] : memref<1x332x1xbf16, #tpu.memory_space<vmem>>, vector<1x288x1xbf16>
    %99 = vector.shape_cast %98 : vector<1x288x1xbf16> to vector<288x1xbf16>
    %c8 = arith.constant 8 : index
    %c0_71 = arith.constant 0 : index
    %c0_72 = arith.constant 0 : index
    %100 = vector.load %arg2[%c8, %c0_71, %c0_72] : memref<9x1x64xbf16, #tpu.memory_space<vmem>>, vector<1x1x64xbf16>
    %101 = vector.shape_cast %100 : vector<1x1x64xbf16> to vector<1x64xbf16>
    %c0_73 = arith.constant 0 : index
    %c0_74 = arith.constant 0 : index
    %102 = vector.load %arg6[%c0_73, %c0_74] : memref<288x64xf32, #tpu.memory_space<vmem>>, vector<288x64xf32>
    %103 = arith.extf %99 : vector<288x1xbf16> to vector<288x1xf32>
    %104 = arith.extf %101 : vector<1x64xbf16> to vector<1x64xf32>
    %105 = vector.broadcast %103 : vector<288x1xf32> to vector<288x64xf32>
    %106 = vector.broadcast %104 : vector<1x64xf32> to vector<288x64xf32>
    %107 = arith.mulf %105, %106 : vector<288x64xf32>
    %108 = arith.addf %102, %107 : vector<288x64xf32>
    %c0_75 = arith.constant 0 : index
    %c0_76 = arith.constant 0 : index
    %109 = vector.load %arg6[%c0_75, %c0_76] : memref<288x64xf32, #tpu.memory_space<vmem>>, vector<288x64xf32>
    tpu.vector_store %arg6[%c0_75, %c0_76], %108 {strides = array<i32>} : memref<288x64xf32, #tpu.memory_space<vmem>>, vector<288x64xf32>,
    %c0_77 = arith.constant 0 : index
    %c0_78 = arith.constant 0 : index
    %110 = vector.load %arg6[%c0_77, %c0_78] : memref<288x64xf32, #tpu.memory_space<vmem>>, vector<288x64xf32>
    %c0_79 = arith.constant 0 : index
    %c0_80 = arith.constant 0 : index
    %111 = vector.load %arg3[%c0_79, %c0_80] : memref<1x64xf32, #tpu.memory_space<vmem>>, vector<1x64xf32>
    %112 = vector.broadcast %111 : vector<1x64xf32> to vector<288x64xf32>
    %113 = arith.addf %110, %112 : vector<288x64xf32>
    %cst_81 = arith.constant 0.000000e+00 : f32
    %114 = vector.broadcast %cst_81 : f32 to vector<288x64xf32>
    %115 = arith.maximumf %113, %114 : vector<288x64xf32>
    %c0_82 = arith.constant 0 : index
    %c0_83 = arith.constant 0 : index
    %116 = vector.load %arg4[%c0_82, %c0_83] : memref<288x1xf32, #tpu.memory_space<vmem>>, vector<288x1xf32>
    %117 = vector.broadcast %116 : vector<288x1xf32> to vector<288x64xf32>
    %118 = arith.mulf %115, %117 : vector<288x64xf32>
    %119 = arith.truncf %118 : vector<288x64xf32> to vector<288x64xbf16>
    %c0_84 = arith.constant 0 : index
    %c0_85 = arith.constant 0 : index
    %c0_86 = arith.constant 0 : index
    %120 = vector.load %arg5[%c0_84, %c0_85, %c0_86] : memref<1x288x64xbf16, #tpu.memory_space<vmem>>, vector<1x288x64xbf16>
    %121 = vector.shape_cast %120 : vector<1x288x64xbf16> to vector<288x64xbf16>
    %122 = vector.shape_cast %119 : vector<288x64xbf16> to vector<1x288x64xbf16>
    tpu.vector_store %arg5[%c0_84, %c0_85, %c0_86], %122 {strides = array<i32>} : memref<1x288x64xbf16, #tpu.memory_space<vmem>>, vector<1x288x64xbf16>,
    return
  }
  func.func @transform_0(%arg0: i32) -> (i32, i32, i32) {
    %c0_i32 = arith.constant 0 : i32
    %c0_i32_0 = arith.constant 0 : i32
    %c0_i32_1 = arith.constant 0 : i32
    return %arg0, %c0_i32, %c0_i32_0 : i32, i32, i32
  }
  func.func @transform_1(%arg0: i32) -> (i32, i32, i32) {
    %c0_i32 = arith.constant 0 : i32
    %c0_i32_0 = arith.constant 0 : i32
    %c0_i32_1 = arith.constant 0 : i32
    %c0_i32_2 = arith.constant 0 : i32
    return %c0_i32, %c0_i32_0, %c0_i32_1 : i32, i32, i32
  }
  func.func @transform_2(%arg0: i32) -> (i32, i32) {
    %c0_i32 = arith.constant 0 : i32
    %c0_i32_0 = arith.constant 0 : i32
    %c0_i32_1 = arith.constant 0 : i32
    return %c0_i32, %c0_i32_0 : i32, i32
  }
  func.func @transform_3(%arg0: i32) -> (i32, i32) {
    %c0_i32 = arith.constant 0 : i32
    %c0_i32_0 = arith.constant 0 : i32
    %c0_i32_1 = arith.constant 0 : i32
    return %c0_i32, %c0_i32_0 : i32, i32
  }
  func.func @transform_4(%arg0: i32) -> (i32, i32, i32) {
    %c0_i32 = arith.constant 0 : i32
    %c0_i32_0 = arith.constant 0 : i32
    %c0_i32_1 = arith.constant 0 : i32
    return %arg0, %c0_i32, %c0_i32_0 : i32, i32, i32
  }
}

module attributes {stable_mosaic.version = 11 : i64} {
  func.func @_flat_conv_kernel(%arg0: i32, %arg1: memref<1x332x64xbf16, #tpu.memory_space<vmem>>, %arg2: memref<9x64x64xbf16, #tpu.memory_space<vmem>>, %arg3: memref<1x64xf32, #tpu.memory_space<vmem>>, %arg4: memref<288x1xf32, #tpu.memory_space<vmem>>, %arg5: memref<1x288x64xbf16, #tpu.memory_space<vmem>>, %arg6: memref<288x64xf32, #tpu.memory_space<vmem>>) attributes {dimension_semantics = [#tpu.dimension_semantics<parallel>], iteration_bounds = array<i64: 2>, scalar_prefetch = 0 : i64, scratch_operands = 1 : i64, tpu.core_type = #tpu.core_type<tc>, window_params = [{transform_indices = @transform_0, window_bounds = array<i64: 1, 332, 64>}, {pipeline_mode = #tpu.pipeline_mode<synchronous>, transform_indices = @transform_1, window_bounds = array<i64: 9, 64, 64>}, {pipeline_mode = #tpu.pipeline_mode<synchronous>, transform_indices = @transform_2, window_bounds = array<i64: 1, 64>}, {pipeline_mode = #tpu.pipeline_mode<synchronous>, transform_indices = @transform_3, window_bounds = array<i64: 288, 1>}, {transform_indices = @transform_4, window_bounds = array<i64: 1, 288, 64>}]} {
    %cst = arith.constant 0.000000e+00 : f32
    %0 = vector.broadcast %cst : f32 to vector<288x64xf32>
    %c0 = arith.constant 0 : index
    %c0_0 = arith.constant 0 : index
    %1 = vector.load %arg6[%c0, %c0_0] : memref<288x64xf32, #tpu.memory_space<vmem>>, vector<288x64xf32>
    tpu.vector_store %arg6[%c0, %c0_0], %0 {strides = array<i32>} : memref<288x64xf32, #tpu.memory_space<vmem>>, vector<288x64xf32>,
    %c0_1 = arith.constant 0 : index
    %c0_2 = arith.constant 0 : index
    %c0_3 = arith.constant 0 : index
    %2 = vector.load %arg1[%c0_1, %c0_2, %c0_3] : memref<1x332x64xbf16, #tpu.memory_space<vmem>>, vector<1x288x64xbf16>
    %3 = vector.shape_cast %2 : vector<1x288x64xbf16> to vector<288x64xbf16>
    %c0_4 = arith.constant 0 : index
    %c0_5 = arith.constant 0 : index
    %c0_6 = arith.constant 0 : index
    %4 = vector.load %arg2[%c0_4, %c0_5, %c0_6] : memref<9x64x64xbf16, #tpu.memory_space<vmem>>, vector<1x64x64xbf16>
    %5 = vector.shape_cast %4 : vector<1x64x64xbf16> to vector<64x64xbf16>
    %c0_7 = arith.constant 0 : index
    %c0_8 = arith.constant 0 : index
    %6 = vector.load %arg6[%c0_7, %c0_8] : memref<288x64xf32, #tpu.memory_space<vmem>>, vector<288x64xf32>
    %cst_9 = arith.constant dense<0.000000e+00> : vector<288x64xf32>
    %7 = tpu.matmul %3, %5, %cst_9 {dimension_numbers = #tpu.dot_dimension_numbers<[1], [0], [0], [1], [0, 0, 1, 1], [], []>} : vector<288x64xbf16>, vector<64x64xbf16>, vector<288x64xf32> -> vector<288x64xf32>
    %8 = arith.addf %6, %7 : vector<288x64xf32>
    %c0_10 = arith.constant 0 : index
    %c0_11 = arith.constant 0 : index
    %9 = vector.load %arg6[%c0_10, %c0_11] : memref<288x64xf32, #tpu.memory_space<vmem>>, vector<288x64xf32>
    tpu.vector_store %arg6[%c0_10, %c0_11], %8 {strides = array<i32>} : memref<288x64xf32, #tpu.memory_space<vmem>>, vector<288x64xf32>,
    %c0_12 = arith.constant 0 : index
    %c1 = arith.constant 1 : index
    %c0_13 = arith.constant 0 : index
    %10 = vector.load %arg1[%c0_12, %c1, %c0_13] : memref<1x332x64xbf16, #tpu.memory_space<vmem>>, vector<1x288x64xbf16>
    %11 = vector.shape_cast %10 : vector<1x288x64xbf16> to vector<288x64xbf16>
    %c1_14 = arith.constant 1 : index
    %c0_15 = arith.constant 0 : index
    %c0_16 = arith.constant 0 : index
    %12 = vector.load %arg2[%c1_14, %c0_15, %c0_16] : memref<9x64x64xbf16, #tpu.memory_space<vmem>>, vector<1x64x64xbf16>
    %13 = vector.shape_cast %12 : vector<1x64x64xbf16> to vector<64x64xbf16>
    %c0_17 = arith.constant 0 : index
    %c0_18 = arith.constant 0 : index
    %14 = vector.load %arg6[%c0_17, %c0_18] : memref<288x64xf32, #tpu.memory_space<vmem>>, vector<288x64xf32>
    %cst_19 = arith.constant dense<0.000000e+00> : vector<288x64xf32>
    %15 = tpu.matmul %11, %13, %cst_19 {dimension_numbers = #tpu.dot_dimension_numbers<[1], [0], [0], [1], [0, 0, 1, 1], [], []>} : vector<288x64xbf16>, vector<64x64xbf16>, vector<288x64xf32> -> vector<288x64xf32>
    %16 = arith.addf %14, %15 : vector<288x64xf32>
    %c0_20 = arith.constant 0 : index
    %c0_21 = arith.constant 0 : index
    %17 = vector.load %arg6[%c0_20, %c0_21] : memref<288x64xf32, #tpu.memory_space<vmem>>, vector<288x64xf32>
    tpu.vector_store %arg6[%c0_20, %c0_21], %16 {strides = array<i32>} : memref<288x64xf32, #tpu.memory_space<vmem>>, vector<288x64xf32>,
    %c0_22 = arith.constant 0 : index
    %c2 = arith.constant 2 : index
    %c0_23 = arith.constant 0 : index
    %18 = vector.load %arg1[%c0_22, %c2, %c0_23] : memref<1x332x64xbf16, #tpu.memory_space<vmem>>, vector<1x288x64xbf16>
    %19 = vector.shape_cast %18 : vector<1x288x64xbf16> to vector<288x64xbf16>
    %c2_24 = arith.constant 2 : index
    %c0_25 = arith.constant 0 : index
    %c0_26 = arith.constant 0 : index
    %20 = vector.load %arg2[%c2_24, %c0_25, %c0_26] : memref<9x64x64xbf16, #tpu.memory_space<vmem>>, vector<1x64x64xbf16>
    %21 = vector.shape_cast %20 : vector<1x64x64xbf16> to vector<64x64xbf16>
    %c0_27 = arith.constant 0 : index
    %c0_28 = arith.constant 0 : index
    %22 = vector.load %arg6[%c0_27, %c0_28] : memref<288x64xf32, #tpu.memory_space<vmem>>, vector<288x64xf32>
    %cst_29 = arith.constant dense<0.000000e+00> : vector<288x64xf32>
    %23 = tpu.matmul %19, %21, %cst_29 {dimension_numbers = #tpu.dot_dimension_numbers<[1], [0], [0], [1], [0, 0, 1, 1], [], []>} : vector<288x64xbf16>, vector<64x64xbf16>, vector<288x64xf32> -> vector<288x64xf32>
    %24 = arith.addf %22, %23 : vector<288x64xf32>
    %c0_30 = arith.constant 0 : index
    %c0_31 = arith.constant 0 : index
    %25 = vector.load %arg6[%c0_30, %c0_31] : memref<288x64xf32, #tpu.memory_space<vmem>>, vector<288x64xf32>
    tpu.vector_store %arg6[%c0_30, %c0_31], %24 {strides = array<i32>} : memref<288x64xf32, #tpu.memory_space<vmem>>, vector<288x64xf32>,
    %c0_32 = arith.constant 0 : index
    %c18 = arith.constant 18 : index
    %c0_33 = arith.constant 0 : index
    %26 = vector.load %arg1[%c0_32, %c18, %c0_33] : memref<1x332x64xbf16, #tpu.memory_space<vmem>>, vector<1x288x64xbf16>
    %27 = vector.shape_cast %26 : vector<1x288x64xbf16> to vector<288x64xbf16>
    %c3 = arith.constant 3 : index
    %c0_34 = arith.constant 0 : index
    %c0_35 = arith.constant 0 : index
    %28 = vector.load %arg2[%c3, %c0_34, %c0_35] : memref<9x64x64xbf16, #tpu.memory_space<vmem>>, vector<1x64x64xbf16>
    %29 = vector.shape_cast %28 : vector<1x64x64xbf16> to vector<64x64xbf16>
    %c0_36 = arith.constant 0 : index
    %c0_37 = arith.constant 0 : index
    %30 = vector.load %arg6[%c0_36, %c0_37] : memref<288x64xf32, #tpu.memory_space<vmem>>, vector<288x64xf32>
    %cst_38 = arith.constant dense<0.000000e+00> : vector<288x64xf32>
    %31 = tpu.matmul %27, %29, %cst_38 {dimension_numbers = #tpu.dot_dimension_numbers<[1], [0], [0], [1], [0, 0, 1, 1], [], []>} : vector<288x64xbf16>, vector<64x64xbf16>, vector<288x64xf32> -> vector<288x64xf32>
    %32 = arith.addf %30, %31 : vector<288x64xf32>
    %c0_39 = arith.constant 0 : index
    %c0_40 = arith.constant 0 : index
    %33 = vector.load %arg6[%c0_39, %c0_40] : memref<288x64xf32, #tpu.memory_space<vmem>>, vector<288x64xf32>
    tpu.vector_store %arg6[%c0_39, %c0_40], %32 {strides = array<i32>} : memref<288x64xf32, #tpu.memory_space<vmem>>, vector<288x64xf32>,
    %c0_41 = arith.constant 0 : index
    %c19 = arith.constant 19 : index
    %c0_42 = arith.constant 0 : index
    %34 = vector.load %arg1[%c0_41, %c19, %c0_42] : memref<1x332x64xbf16, #tpu.memory_space<vmem>>, vector<1x288x64xbf16>
    %35 = vector.shape_cast %34 : vector<1x288x64xbf16> to vector<288x64xbf16>
    %c4 = arith.constant 4 : index
    %c0_43 = arith.constant 0 : index
    %c0_44 = arith.constant 0 : index
    %36 = vector.load %arg2[%c4, %c0_43, %c0_44] : memref<9x64x64xbf16, #tpu.memory_space<vmem>>, vector<1x64x64xbf16>
    %37 = vector.shape_cast %36 : vector<1x64x64xbf16> to vector<64x64xbf16>
    %c0_45 = arith.constant 0 : index
    %c0_46 = arith.constant 0 : index
    %38 = vector.load %arg6[%c0_45, %c0_46] : memref<288x64xf32, #tpu.memory_space<vmem>>, vector<288x64xf32>
    %cst_47 = arith.constant dense<0.000000e+00> : vector<288x64xf32>
    %39 = tpu.matmul %35, %37, %cst_47 {dimension_numbers = #tpu.dot_dimension_numbers<[1], [0], [0], [1], [0, 0, 1, 1], [], []>} : vector<288x64xbf16>, vector<64x64xbf16>, vector<288x64xf32> -> vector<288x64xf32>
    %40 = arith.addf %38, %39 : vector<288x64xf32>
    %c0_48 = arith.constant 0 : index
    %c0_49 = arith.constant 0 : index
    %41 = vector.load %arg6[%c0_48, %c0_49] : memref<288x64xf32, #tpu.memory_space<vmem>>, vector<288x64xf32>
    tpu.vector_store %arg6[%c0_48, %c0_49], %40 {strides = array<i32>} : memref<288x64xf32, #tpu.memory_space<vmem>>, vector<288x64xf32>,
    %c0_50 = arith.constant 0 : index
    %c20 = arith.constant 20 : index
    %c0_51 = arith.constant 0 : index
    %42 = vector.load %arg1[%c0_50, %c20, %c0_51] : memref<1x332x64xbf16, #tpu.memory_space<vmem>>, vector<1x288x64xbf16>
    %43 = vector.shape_cast %42 : vector<1x288x64xbf16> to vector<288x64xbf16>
    %c5 = arith.constant 5 : index
    %c0_52 = arith.constant 0 : index
    %c0_53 = arith.constant 0 : index
    %44 = vector.load %arg2[%c5, %c0_52, %c0_53] : memref<9x64x64xbf16, #tpu.memory_space<vmem>>, vector<1x64x64xbf16>
    %45 = vector.shape_cast %44 : vector<1x64x64xbf16> to vector<64x64xbf16>
    %c0_54 = arith.constant 0 : index
    %c0_55 = arith.constant 0 : index
    %46 = vector.load %arg6[%c0_54, %c0_55] : memref<288x64xf32, #tpu.memory_space<vmem>>, vector<288x64xf32>
    %cst_56 = arith.constant dense<0.000000e+00> : vector<288x64xf32>
    %47 = tpu.matmul %43, %45, %cst_56 {dimension_numbers = #tpu.dot_dimension_numbers<[1], [0], [0], [1], [0, 0, 1, 1], [], []>} : vector<288x64xbf16>, vector<64x64xbf16>, vector<288x64xf32> -> vector<288x64xf32>
    %48 = arith.addf %46, %47 : vector<288x64xf32>
    %c0_57 = arith.constant 0 : index
    %c0_58 = arith.constant 0 : index
    %49 = vector.load %arg6[%c0_57, %c0_58] : memref<288x64xf32, #tpu.memory_space<vmem>>, vector<288x64xf32>
    tpu.vector_store %arg6[%c0_57, %c0_58], %48 {strides = array<i32>} : memref<288x64xf32, #tpu.memory_space<vmem>>, vector<288x64xf32>,
    %c0_59 = arith.constant 0 : index
    %c36 = arith.constant 36 : index
    %c0_60 = arith.constant 0 : index
    %50 = vector.load %arg1[%c0_59, %c36, %c0_60] : memref<1x332x64xbf16, #tpu.memory_space<vmem>>, vector<1x288x64xbf16>
    %51 = vector.shape_cast %50 : vector<1x288x64xbf16> to vector<288x64xbf16>
    %c6 = arith.constant 6 : index
    %c0_61 = arith.constant 0 : index
    %c0_62 = arith.constant 0 : index
    %52 = vector.load %arg2[%c6, %c0_61, %c0_62] : memref<9x64x64xbf16, #tpu.memory_space<vmem>>, vector<1x64x64xbf16>
    %53 = vector.shape_cast %52 : vector<1x64x64xbf16> to vector<64x64xbf16>
    %c0_63 = arith.constant 0 : index
    %c0_64 = arith.constant 0 : index
    %54 = vector.load %arg6[%c0_63, %c0_64] : memref<288x64xf32, #tpu.memory_space<vmem>>, vector<288x64xf32>
    %cst_65 = arith.constant dense<0.000000e+00> : vector<288x64xf32>
    %55 = tpu.matmul %51, %53, %cst_65 {dimension_numbers = #tpu.dot_dimension_numbers<[1], [0], [0], [1], [0, 0, 1, 1], [], []>} : vector<288x64xbf16>, vector<64x64xbf16>, vector<288x64xf32> -> vector<288x64xf32>
    %56 = arith.addf %54, %55 : vector<288x64xf32>
    %c0_66 = arith.constant 0 : index
    %c0_67 = arith.constant 0 : index
    %57 = vector.load %arg6[%c0_66, %c0_67] : memref<288x64xf32, #tpu.memory_space<vmem>>, vector<288x64xf32>
    tpu.vector_store %arg6[%c0_66, %c0_67], %56 {strides = array<i32>} : memref<288x64xf32, #tpu.memory_space<vmem>>, vector<288x64xf32>,
    %c0_68 = arith.constant 0 : index
    %c37 = arith.constant 37 : index
    %c0_69 = arith.constant 0 : index
    %58 = vector.load %arg1[%c0_68, %c37, %c0_69] : memref<1x332x64xbf16, #tpu.memory_space<vmem>>, vector<1x288x64xbf16>
    %59 = vector.shape_cast %58 : vector<1x288x64xbf16> to vector<288x64xbf16>
    %c7 = arith.constant 7 : index
    %c0_70 = arith.constant 0 : index
    %c0_71 = arith.constant 0 : index
    %60 = vector.load %arg2[%c7, %c0_70, %c0_71] : memref<9x64x64xbf16, #tpu.memory_space<vmem>>, vector<1x64x64xbf16>
    %61 = vector.shape_cast %60 : vector<1x64x64xbf16> to vector<64x64xbf16>
    %c0_72 = arith.constant 0 : index
    %c0_73 = arith.constant 0 : index
    %62 = vector.load %arg6[%c0_72, %c0_73] : memref<288x64xf32, #tpu.memory_space<vmem>>, vector<288x64xf32>
    %cst_74 = arith.constant dense<0.000000e+00> : vector<288x64xf32>
    %63 = tpu.matmul %59, %61, %cst_74 {dimension_numbers = #tpu.dot_dimension_numbers<[1], [0], [0], [1], [0, 0, 1, 1], [], []>} : vector<288x64xbf16>, vector<64x64xbf16>, vector<288x64xf32> -> vector<288x64xf32>
    %64 = arith.addf %62, %63 : vector<288x64xf32>
    %c0_75 = arith.constant 0 : index
    %c0_76 = arith.constant 0 : index
    %65 = vector.load %arg6[%c0_75, %c0_76] : memref<288x64xf32, #tpu.memory_space<vmem>>, vector<288x64xf32>
    tpu.vector_store %arg6[%c0_75, %c0_76], %64 {strides = array<i32>} : memref<288x64xf32, #tpu.memory_space<vmem>>, vector<288x64xf32>,
    %c0_77 = arith.constant 0 : index
    %c38 = arith.constant 38 : index
    %c0_78 = arith.constant 0 : index
    %66 = vector.load %arg1[%c0_77, %c38, %c0_78] : memref<1x332x64xbf16, #tpu.memory_space<vmem>>, vector<1x288x64xbf16>
    %67 = vector.shape_cast %66 : vector<1x288x64xbf16> to vector<288x64xbf16>
    %c8 = arith.constant 8 : index
    %c0_79 = arith.constant 0 : index
    %c0_80 = arith.constant 0 : index
    %68 = vector.load %arg2[%c8, %c0_79, %c0_80] : memref<9x64x64xbf16, #tpu.memory_space<vmem>>, vector<1x64x64xbf16>
    %69 = vector.shape_cast %68 : vector<1x64x64xbf16> to vector<64x64xbf16>
    %c0_81 = arith.constant 0 : index
    %c0_82 = arith.constant 0 : index
    %70 = vector.load %arg6[%c0_81, %c0_82] : memref<288x64xf32, #tpu.memory_space<vmem>>, vector<288x64xf32>
    %cst_83 = arith.constant dense<0.000000e+00> : vector<288x64xf32>
    %71 = tpu.matmul %67, %69, %cst_83 {dimension_numbers = #tpu.dot_dimension_numbers<[1], [0], [0], [1], [0, 0, 1, 1], [], []>} : vector<288x64xbf16>, vector<64x64xbf16>, vector<288x64xf32> -> vector<288x64xf32>
    %72 = arith.addf %70, %71 : vector<288x64xf32>
    %c0_84 = arith.constant 0 : index
    %c0_85 = arith.constant 0 : index
    %73 = vector.load %arg6[%c0_84, %c0_85] : memref<288x64xf32, #tpu.memory_space<vmem>>, vector<288x64xf32>
    tpu.vector_store %arg6[%c0_84, %c0_85], %72 {strides = array<i32>} : memref<288x64xf32, #tpu.memory_space<vmem>>, vector<288x64xf32>,
    %c0_86 = arith.constant 0 : index
    %c0_87 = arith.constant 0 : index
    %74 = vector.load %arg6[%c0_86, %c0_87] : memref<288x64xf32, #tpu.memory_space<vmem>>, vector<288x64xf32>
    %c0_88 = arith.constant 0 : index
    %c0_89 = arith.constant 0 : index
    %75 = vector.load %arg3[%c0_88, %c0_89] : memref<1x64xf32, #tpu.memory_space<vmem>>, vector<1x64xf32>
    %76 = vector.broadcast %75 : vector<1x64xf32> to vector<288x64xf32>
    %77 = arith.addf %74, %76 : vector<288x64xf32>
    %cst_90 = arith.constant 0.000000e+00 : f32
    %78 = vector.broadcast %cst_90 : f32 to vector<288x64xf32>
    %79 = arith.maximumf %77, %78 : vector<288x64xf32>
    %c0_91 = arith.constant 0 : index
    %c0_92 = arith.constant 0 : index
    %80 = vector.load %arg4[%c0_91, %c0_92] : memref<288x1xf32, #tpu.memory_space<vmem>>, vector<288x1xf32>
    %81 = vector.broadcast %80 : vector<288x1xf32> to vector<288x64xf32>
    %82 = arith.mulf %79, %81 : vector<288x64xf32>
    %83 = arith.truncf %82 : vector<288x64xf32> to vector<288x64xbf16>
    %c0_93 = arith.constant 0 : index
    %c0_94 = arith.constant 0 : index
    %c0_95 = arith.constant 0 : index
    %84 = vector.load %arg5[%c0_93, %c0_94, %c0_95] : memref<1x288x64xbf16, #tpu.memory_space<vmem>>, vector<1x288x64xbf16>
    %85 = vector.shape_cast %84 : vector<1x288x64xbf16> to vector<288x64xbf16>
    %86 = vector.shape_cast %83 : vector<288x64xbf16> to vector<1x288x64xbf16>
    tpu.vector_store %arg5[%c0_93, %c0_94, %c0_95], %86 {strides = array<i32>} : memref<1x288x64xbf16, #tpu.memory_space<vmem>>, vector<1x288x64xbf16>,
    return
  }
  func.func @transform_0(%arg0: i32) -> (i32, i32, i32) {
    %c0_i32 = arith.constant 0 : i32
    %c0_i32_0 = arith.constant 0 : i32
    %c0_i32_1 = arith.constant 0 : i32
    return %arg0, %c0_i32, %c0_i32_0 : i32, i32, i32
  }
  func.func @transform_1(%arg0: i32) -> (i32, i32, i32) {
    %c0_i32 = arith.constant 0 : i32
    %c0_i32_0 = arith.constant 0 : i32
    %c0_i32_1 = arith.constant 0 : i32
    %c0_i32_2 = arith.constant 0 : i32
    return %c0_i32, %c0_i32_0, %c0_i32_1 : i32, i32, i32
  }
  func.func @transform_2(%arg0: i32) -> (i32, i32) {
    %c0_i32 = arith.constant 0 : i32
    %c0_i32_0 = arith.constant 0 : i32
    %c0_i32_1 = arith.constant 0 : i32
    return %c0_i32, %c0_i32_0 : i32, i32
  }
  func.func @transform_3(%arg0: i32) -> (i32, i32) {
    %c0_i32 = arith.constant 0 : i32
    %c0_i32_0 = arith.constant 0 : i32
    %c0_i32_1 = arith.constant 0 : i32
    return %c0_i32, %c0_i32_0 : i32, i32
  }
  func.func @transform_4(%arg0: i32) -> (i32, i32, i32) {
    %c0_i32 = arith.constant 0 : i32
    %c0_i32_0 = arith.constant 0 : i32
    %c0_i32_1 = arith.constant 0 : i32
    return %arg0, %c0_i32, %c0_i32_0 : i32, i32, i32
  }
}

module attributes {stable_mosaic.version = 11 : i64} {
  func.func @_flat_conv_kernel(%arg0: i32, %arg1: memref<1x108x64xbf16, #tpu.memory_space<vmem>>, %arg2: memref<9x64x128xbf16, #tpu.memory_space<vmem>>, %arg3: memref<1x128xf32, #tpu.memory_space<vmem>>, %arg4: memref<80x1xf32, #tpu.memory_space<vmem>>, %arg5: memref<1x80x128xbf16, #tpu.memory_space<vmem>>, %arg6: memref<80x128xf32, #tpu.memory_space<vmem>>) attributes {dimension_semantics = [#tpu.dimension_semantics<parallel>], iteration_bounds = array<i64: 2>, scalar_prefetch = 0 : i64, scratch_operands = 1 : i64, tpu.core_type = #tpu.core_type<tc>, window_params = [{transform_indices = @transform_0, window_bounds = array<i64: 1, 108, 64>}, {pipeline_mode = #tpu.pipeline_mode<synchronous>, transform_indices = @transform_1, window_bounds = array<i64: 9, 64, 128>}, {pipeline_mode = #tpu.pipeline_mode<synchronous>, transform_indices = @transform_2, window_bounds = array<i64: 1, 128>}, {pipeline_mode = #tpu.pipeline_mode<synchronous>, transform_indices = @transform_3, window_bounds = array<i64: 80, 1>}, {transform_indices = @transform_4, window_bounds = array<i64: 1, 80, 128>}]} {
    %cst = arith.constant 0.000000e+00 : f32
    %0 = vector.broadcast %cst : f32 to vector<80x128xf32>
    %c0 = arith.constant 0 : index
    %c0_0 = arith.constant 0 : index
    %1 = vector.load %arg6[%c0, %c0_0] : memref<80x128xf32, #tpu.memory_space<vmem>>, vector<80x128xf32>
    tpu.vector_store %arg6[%c0, %c0_0], %0 {strides = array<i32>} : memref<80x128xf32, #tpu.memory_space<vmem>>, vector<80x128xf32>,
    %c0_1 = arith.constant 0 : index
    %c0_2 = arith.constant 0 : index
    %c0_3 = arith.constant 0 : index
    %2 = vector.load %arg1[%c0_1, %c0_2, %c0_3] : memref<1x108x64xbf16, #tpu.memory_space<vmem>>, vector<1x80x64xbf16>
    %3 = vector.shape_cast %2 : vector<1x80x64xbf16> to vector<80x64xbf16>
    %c0_4 = arith.constant 0 : index
    %c0_5 = arith.constant 0 : index
    %c0_6 = arith.constant 0 : index
    %4 = vector.load %arg2[%c0_4, %c0_5, %c0_6] : memref<9x64x128xbf16, #tpu.memory_space<vmem>>, vector<1x64x128xbf16>
    %5 = vector.shape_cast %4 : vector<1x64x128xbf16> to vector<64x128xbf16>
    %c0_7 = arith.constant 0 : index
    %c0_8 = arith.constant 0 : index
    %6 = vector.load %arg6[%c0_7, %c0_8] : memref<80x128xf32, #tpu.memory_space<vmem>>, vector<80x128xf32>
    %cst_9 = arith.constant dense<0.000000e+00> : vector<80x128xf32>
    %7 = tpu.matmul %3, %5, %cst_9 {dimension_numbers = #tpu.dot_dimension_numbers<[1], [0], [0], [1], [0, 0, 1, 1], [], []>} : vector<80x64xbf16>, vector<64x128xbf16>, vector<80x128xf32> -> vector<80x128xf32>
    %8 = arith.addf %6, %7 : vector<80x128xf32>
    %c0_10 = arith.constant 0 : index
    %c0_11 = arith.constant 0 : index
    %9 = vector.load %arg6[%c0_10, %c0_11] : memref<80x128xf32, #tpu.memory_space<vmem>>, vector<80x128xf32>
    tpu.vector_store %arg6[%c0_10, %c0_11], %8 {strides = array<i32>} : memref<80x128xf32, #tpu.memory_space<vmem>>, vector<80x128xf32>,
    %c0_12 = arith.constant 0 : index
    %c1 = arith.constant 1 : index
    %c0_13 = arith.constant 0 : index
    %10 = vector.load %arg1[%c0_12, %c1, %c0_13] : memref<1x108x64xbf16, #tpu.memory_space<vmem>>, vector<1x80x64xbf16>
    %11 = vector.shape_cast %10 : vector<1x80x64xbf16> to vector<80x64xbf16>
    %c1_14 = arith.constant 1 : index
    %c0_15 = arith.constant 0 : index
    %c0_16 = arith.constant 0 : index
    %12 = vector.load %arg2[%c1_14, %c0_15, %c0_16] : memref<9x64x128xbf16, #tpu.memory_space<vmem>>, vector<1x64x128xbf16>
    %13 = vector.shape_cast %12 : vector<1x64x128xbf16> to vector<64x128xbf16>
    %c0_17 = arith.constant 0 : index
    %c0_18 = arith.constant 0 : index
    %14 = vector.load %arg6[%c0_17, %c0_18] : memref<80x128xf32, #tpu.memory_space<vmem>>, vector<80x128xf32>
    %cst_19 = arith.constant dense<0.000000e+00> : vector<80x128xf32>
    %15 = tpu.matmul %11, %13, %cst_19 {dimension_numbers = #tpu.dot_dimension_numbers<[1], [0], [0], [1], [0, 0, 1, 1], [], []>} : vector<80x64xbf16>, vector<64x128xbf16>, vector<80x128xf32> -> vector<80x128xf32>
    %16 = arith.addf %14, %15 : vector<80x128xf32>
    %c0_20 = arith.constant 0 : index
    %c0_21 = arith.constant 0 : index
    %17 = vector.load %arg6[%c0_20, %c0_21] : memref<80x128xf32, #tpu.memory_space<vmem>>, vector<80x128xf32>
    tpu.vector_store %arg6[%c0_20, %c0_21], %16 {strides = array<i32>} : memref<80x128xf32, #tpu.memory_space<vmem>>, vector<80x128xf32>,
    %c0_22 = arith.constant 0 : index
    %c2 = arith.constant 2 : index
    %c0_23 = arith.constant 0 : index
    %18 = vector.load %arg1[%c0_22, %c2, %c0_23] : memref<1x108x64xbf16, #tpu.memory_space<vmem>>, vector<1x80x64xbf16>
    %19 = vector.shape_cast %18 : vector<1x80x64xbf16> to vector<80x64xbf16>
    %c2_24 = arith.constant 2 : index
    %c0_25 = arith.constant 0 : index
    %c0_26 = arith.constant 0 : index
    %20 = vector.load %arg2[%c2_24, %c0_25, %c0_26] : memref<9x64x128xbf16, #tpu.memory_space<vmem>>, vector<1x64x128xbf16>
    %21 = vector.shape_cast %20 : vector<1x64x128xbf16> to vector<64x128xbf16>
    %c0_27 = arith.constant 0 : index
    %c0_28 = arith.constant 0 : index
    %22 = vector.load %arg6[%c0_27, %c0_28] : memref<80x128xf32, #tpu.memory_space<vmem>>, vector<80x128xf32>
    %cst_29 = arith.constant dense<0.000000e+00> : vector<80x128xf32>
    %23 = tpu.matmul %19, %21, %cst_29 {dimension_numbers = #tpu.dot_dimension_numbers<[1], [0], [0], [1], [0, 0, 1, 1], [], []>} : vector<80x64xbf16>, vector<64x128xbf16>, vector<80x128xf32> -> vector<80x128xf32>
    %24 = arith.addf %22, %23 : vector<80x128xf32>
    %c0_30 = arith.constant 0 : index
    %c0_31 = arith.constant 0 : index
    %25 = vector.load %arg6[%c0_30, %c0_31] : memref<80x128xf32, #tpu.memory_space<vmem>>, vector<80x128xf32>
    tpu.vector_store %arg6[%c0_30, %c0_31], %24 {strides = array<i32>} : memref<80x128xf32, #tpu.memory_space<vmem>>, vector<80x128xf32>,
    %c0_32 = arith.constant 0 : index
    %c10 = arith.constant 10 : index
    %c0_33 = arith.constant 0 : index
    %26 = vector.load %arg1[%c0_32, %c10, %c0_33] : memref<1x108x64xbf16, #tpu.memory_space<vmem>>, vector<1x80x64xbf16>
    %27 = vector.shape_cast %26 : vector<1x80x64xbf16> to vector<80x64xbf16>
    %c3 = arith.constant 3 : index
    %c0_34 = arith.constant 0 : index
    %c0_35 = arith.constant 0 : index
    %28 = vector.load %arg2[%c3, %c0_34, %c0_35] : memref<9x64x128xbf16, #tpu.memory_space<vmem>>, vector<1x64x128xbf16>
    %29 = vector.shape_cast %28 : vector<1x64x128xbf16> to vector<64x128xbf16>
    %c0_36 = arith.constant 0 : index
    %c0_37 = arith.constant 0 : index
    %30 = vector.load %arg6[%c0_36, %c0_37] : memref<80x128xf32, #tpu.memory_space<vmem>>, vector<80x128xf32>
    %cst_38 = arith.constant dense<0.000000e+00> : vector<80x128xf32>
    %31 = tpu.matmul %27, %29, %cst_38 {dimension_numbers = #tpu.dot_dimension_numbers<[1], [0], [0], [1], [0, 0, 1, 1], [], []>} : vector<80x64xbf16>, vector<64x128xbf16>, vector<80x128xf32> -> vector<80x128xf32>
    %32 = arith.addf %30, %31 : vector<80x128xf32>
    %c0_39 = arith.constant 0 : index
    %c0_40 = arith.constant 0 : index
    %33 = vector.load %arg6[%c0_39, %c0_40] : memref<80x128xf32, #tpu.memory_space<vmem>>, vector<80x128xf32>
    tpu.vector_store %arg6[%c0_39, %c0_40], %32 {strides = array<i32>} : memref<80x128xf32, #tpu.memory_space<vmem>>, vector<80x128xf32>,
    %c0_41 = arith.constant 0 : index
    %c11 = arith.constant 11 : index
    %c0_42 = arith.constant 0 : index
    %34 = vector.load %arg1[%c0_41, %c11, %c0_42] : memref<1x108x64xbf16, #tpu.memory_space<vmem>>, vector<1x80x64xbf16>
    %35 = vector.shape_cast %34 : vector<1x80x64xbf16> to vector<80x64xbf16>
    %c4 = arith.constant 4 : index
    %c0_43 = arith.constant 0 : index
    %c0_44 = arith.constant 0 : index
    %36 = vector.load %arg2[%c4, %c0_43, %c0_44] : memref<9x64x128xbf16, #tpu.memory_space<vmem>>, vector<1x64x128xbf16>
    %37 = vector.shape_cast %36 : vector<1x64x128xbf16> to vector<64x128xbf16>
    %c0_45 = arith.constant 0 : index
    %c0_46 = arith.constant 0 : index
    %38 = vector.load %arg6[%c0_45, %c0_46] : memref<80x128xf32, #tpu.memory_space<vmem>>, vector<80x128xf32>
    %cst_47 = arith.constant dense<0.000000e+00> : vector<80x128xf32>
    %39 = tpu.matmul %35, %37, %cst_47 {dimension_numbers = #tpu.dot_dimension_numbers<[1], [0], [0], [1], [0, 0, 1, 1], [], []>} : vector<80x64xbf16>, vector<64x128xbf16>, vector<80x128xf32> -> vector<80x128xf32>
    %40 = arith.addf %38, %39 : vector<80x128xf32>
    %c0_48 = arith.constant 0 : index
    %c0_49 = arith.constant 0 : index
    %41 = vector.load %arg6[%c0_48, %c0_49] : memref<80x128xf32, #tpu.memory_space<vmem>>, vector<80x128xf32>
    tpu.vector_store %arg6[%c0_48, %c0_49], %40 {strides = array<i32>} : memref<80x128xf32, #tpu.memory_space<vmem>>, vector<80x128xf32>,
    %c0_50 = arith.constant 0 : index
    %c12 = arith.constant 12 : index
    %c0_51 = arith.constant 0 : index
    %42 = vector.load %arg1[%c0_50, %c12, %c0_51] : memref<1x108x64xbf16, #tpu.memory_space<vmem>>, vector<1x80x64xbf16>
    %43 = vector.shape_cast %42 : vector<1x80x64xbf16> to vector<80x64xbf16>
    %c5 = arith.constant 5 : index
    %c0_52 = arith.constant 0 : index
    %c0_53 = arith.constant 0 : index
    %44 = vector.load %arg2[%c5, %c0_52, %c0_53] : memref<9x64x128xbf16, #tpu.memory_space<vmem>>, vector<1x64x128xbf16>
    %45 = vector.shape_cast %44 : vector<1x64x128xbf16> to vector<64x128xbf16>
    %c0_54 = arith.constant 0 : index
    %c0_55 = arith.constant 0 : index
    %46 = vector.load %arg6[%c0_54, %c0_55] : memref<80x128xf32, #tpu.memory_space<vmem>>, vector<80x128xf32>
    %cst_56 = arith.constant dense<0.000000e+00> : vector<80x128xf32>
    %47 = tpu.matmul %43, %45, %cst_56 {dimension_numbers = #tpu.dot_dimension_numbers<[1], [0], [0], [1], [0, 0, 1, 1], [], []>} : vector<80x64xbf16>, vector<64x128xbf16>, vector<80x128xf32> -> vector<80x128xf32>
    %48 = arith.addf %46, %47 : vector<80x128xf32>
    %c0_57 = arith.constant 0 : index
    %c0_58 = arith.constant 0 : index
    %49 = vector.load %arg6[%c0_57, %c0_58] : memref<80x128xf32, #tpu.memory_space<vmem>>, vector<80x128xf32>
    tpu.vector_store %arg6[%c0_57, %c0_58], %48 {strides = array<i32>} : memref<80x128xf32, #tpu.memory_space<vmem>>, vector<80x128xf32>,
    %c0_59 = arith.constant 0 : index
    %c20 = arith.constant 20 : index
    %c0_60 = arith.constant 0 : index
    %50 = vector.load %arg1[%c0_59, %c20, %c0_60] : memref<1x108x64xbf16, #tpu.memory_space<vmem>>, vector<1x80x64xbf16>
    %51 = vector.shape_cast %50 : vector<1x80x64xbf16> to vector<80x64xbf16>
    %c6 = arith.constant 6 : index
    %c0_61 = arith.constant 0 : index
    %c0_62 = arith.constant 0 : index
    %52 = vector.load %arg2[%c6, %c0_61, %c0_62] : memref<9x64x128xbf16, #tpu.memory_space<vmem>>, vector<1x64x128xbf16>
    %53 = vector.shape_cast %52 : vector<1x64x128xbf16> to vector<64x128xbf16>
    %c0_63 = arith.constant 0 : index
    %c0_64 = arith.constant 0 : index
    %54 = vector.load %arg6[%c0_63, %c0_64] : memref<80x128xf32, #tpu.memory_space<vmem>>, vector<80x128xf32>
    %cst_65 = arith.constant dense<0.000000e+00> : vector<80x128xf32>
    %55 = tpu.matmul %51, %53, %cst_65 {dimension_numbers = #tpu.dot_dimension_numbers<[1], [0], [0], [1], [0, 0, 1, 1], [], []>} : vector<80x64xbf16>, vector<64x128xbf16>, vector<80x128xf32> -> vector<80x128xf32>
    %56 = arith.addf %54, %55 : vector<80x128xf32>
    %c0_66 = arith.constant 0 : index
    %c0_67 = arith.constant 0 : index
    %57 = vector.load %arg6[%c0_66, %c0_67] : memref<80x128xf32, #tpu.memory_space<vmem>>, vector<80x128xf32>
    tpu.vector_store %arg6[%c0_66, %c0_67], %56 {strides = array<i32>} : memref<80x128xf32, #tpu.memory_space<vmem>>, vector<80x128xf32>,
    %c0_68 = arith.constant 0 : index
    %c21 = arith.constant 21 : index
    %c0_69 = arith.constant 0 : index
    %58 = vector.load %arg1[%c0_68, %c21, %c0_69] : memref<1x108x64xbf16, #tpu.memory_space<vmem>>, vector<1x80x64xbf16>
    %59 = vector.shape_cast %58 : vector<1x80x64xbf16> to vector<80x64xbf16>
    %c7 = arith.constant 7 : index
    %c0_70 = arith.constant 0 : index
    %c0_71 = arith.constant 0 : index
    %60 = vector.load %arg2[%c7, %c0_70, %c0_71] : memref<9x64x128xbf16, #tpu.memory_space<vmem>>, vector<1x64x128xbf16>
    %61 = vector.shape_cast %60 : vector<1x64x128xbf16> to vector<64x128xbf16>
    %c0_72 = arith.constant 0 : index
    %c0_73 = arith.constant 0 : index
    %62 = vector.load %arg6[%c0_72, %c0_73] : memref<80x128xf32, #tpu.memory_space<vmem>>, vector<80x128xf32>
    %cst_74 = arith.constant dense<0.000000e+00> : vector<80x128xf32>
    %63 = tpu.matmul %59, %61, %cst_74 {dimension_numbers = #tpu.dot_dimension_numbers<[1], [0], [0], [1], [0, 0, 1, 1], [], []>} : vector<80x64xbf16>, vector<64x128xbf16>, vector<80x128xf32> -> vector<80x128xf32>
    %64 = arith.addf %62, %63 : vector<80x128xf32>
    %c0_75 = arith.constant 0 : index
    %c0_76 = arith.constant 0 : index
    %65 = vector.load %arg6[%c0_75, %c0_76] : memref<80x128xf32, #tpu.memory_space<vmem>>, vector<80x128xf32>
    tpu.vector_store %arg6[%c0_75, %c0_76], %64 {strides = array<i32>} : memref<80x128xf32, #tpu.memory_space<vmem>>, vector<80x128xf32>,
    %c0_77 = arith.constant 0 : index
    %c22 = arith.constant 22 : index
    %c0_78 = arith.constant 0 : index
    %66 = vector.load %arg1[%c0_77, %c22, %c0_78] : memref<1x108x64xbf16, #tpu.memory_space<vmem>>, vector<1x80x64xbf16>
    %67 = vector.shape_cast %66 : vector<1x80x64xbf16> to vector<80x64xbf16>
    %c8 = arith.constant 8 : index
    %c0_79 = arith.constant 0 : index
    %c0_80 = arith.constant 0 : index
    %68 = vector.load %arg2[%c8, %c0_79, %c0_80] : memref<9x64x128xbf16, #tpu.memory_space<vmem>>, vector<1x64x128xbf16>
    %69 = vector.shape_cast %68 : vector<1x64x128xbf16> to vector<64x128xbf16>
    %c0_81 = arith.constant 0 : index
    %c0_82 = arith.constant 0 : index
    %70 = vector.load %arg6[%c0_81, %c0_82] : memref<80x128xf32, #tpu.memory_space<vmem>>, vector<80x128xf32>
    %cst_83 = arith.constant dense<0.000000e+00> : vector<80x128xf32>
    %71 = tpu.matmul %67, %69, %cst_83 {dimension_numbers = #tpu.dot_dimension_numbers<[1], [0], [0], [1], [0, 0, 1, 1], [], []>} : vector<80x64xbf16>, vector<64x128xbf16>, vector<80x128xf32> -> vector<80x128xf32>
    %72 = arith.addf %70, %71 : vector<80x128xf32>
    %c0_84 = arith.constant 0 : index
    %c0_85 = arith.constant 0 : index
    %73 = vector.load %arg6[%c0_84, %c0_85] : memref<80x128xf32, #tpu.memory_space<vmem>>, vector<80x128xf32>
    tpu.vector_store %arg6[%c0_84, %c0_85], %72 {strides = array<i32>} : memref<80x128xf32, #tpu.memory_space<vmem>>, vector<80x128xf32>,
    %c0_86 = arith.constant 0 : index
    %c0_87 = arith.constant 0 : index
    %74 = vector.load %arg6[%c0_86, %c0_87] : memref<80x128xf32, #tpu.memory_space<vmem>>, vector<80x128xf32>
    %c0_88 = arith.constant 0 : index
    %c0_89 = arith.constant 0 : index
    %75 = vector.load %arg3[%c0_88, %c0_89] : memref<1x128xf32, #tpu.memory_space<vmem>>, vector<1x128xf32>
    %76 = vector.broadcast %75 : vector<1x128xf32> to vector<80x128xf32>
    %77 = arith.addf %74, %76 : vector<80x128xf32>
    %cst_90 = arith.constant 0.000000e+00 : f32
    %78 = vector.broadcast %cst_90 : f32 to vector<80x128xf32>
    %79 = arith.maximumf %77, %78 : vector<80x128xf32>
    %c0_91 = arith.constant 0 : index
    %c0_92 = arith.constant 0 : index
    %80 = vector.load %arg4[%c0_91, %c0_92] : memref<80x1xf32, #tpu.memory_space<vmem>>, vector<80x1xf32>
    %81 = vector.broadcast %80 : vector<80x1xf32> to vector<80x128xf32>
    %82 = arith.mulf %79, %81 : vector<80x128xf32>
    %83 = arith.truncf %82 : vector<80x128xf32> to vector<80x128xbf16>
    %c0_93 = arith.constant 0 : index
    %c0_94 = arith.constant 0 : index
    %c0_95 = arith.constant 0 : index
    %84 = vector.load %arg5[%c0_93, %c0_94, %c0_95] : memref<1x80x128xbf16, #tpu.memory_space<vmem>>, vector<1x80x128xbf16>
    %85 = vector.shape_cast %84 : vector<1x80x128xbf16> to vector<80x128xbf16>
    %86 = vector.shape_cast %83 : vector<80x128xbf16> to vector<1x80x128xbf16>
    tpu.vector_store %arg5[%c0_93, %c0_94, %c0_95], %86 {strides = array<i32>} : memref<1x80x128xbf16, #tpu.memory_space<vmem>>, vector<1x80x128xbf16>,
    return
  }
  func.func @transform_0(%arg0: i32) -> (i32, i32, i32) {
    %c0_i32 = arith.constant 0 : i32
    %c0_i32_0 = arith.constant 0 : i32
    %c0_i32_1 = arith.constant 0 : i32
    return %arg0, %c0_i32, %c0_i32_0 : i32, i32, i32
  }
  func.func @transform_1(%arg0: i32) -> (i32, i32, i32) {
    %c0_i32 = arith.constant 0 : i32
    %c0_i32_0 = arith.constant 0 : i32
    %c0_i32_1 = arith.constant 0 : i32
    %c0_i32_2 = arith.constant 0 : i32
    return %c0_i32, %c0_i32_0, %c0_i32_1 : i32, i32, i32
  }
  func.func @transform_2(%arg0: i32) -> (i32, i32) {
    %c0_i32 = arith.constant 0 : i32
    %c0_i32_0 = arith.constant 0 : i32
    %c0_i32_1 = arith.constant 0 : i32
    return %c0_i32, %c0_i32_0 : i32, i32
  }
  func.func @transform_3(%arg0: i32) -> (i32, i32) {
    %c0_i32 = arith.constant 0 : i32
    %c0_i32_0 = arith.constant 0 : i32
    %c0_i32_1 = arith.constant 0 : i32
    return %c0_i32, %c0_i32_0 : i32, i32
  }
  func.func @transform_4(%arg0: i32) -> (i32, i32, i32) {
    %c0_i32 = arith.constant 0 : i32
    %c0_i32_0 = arith.constant 0 : i32
    %c0_i32_1 = arith.constant 0 : i32
    return %arg0, %c0_i32, %c0_i32_0 : i32, i32, i32
  }
}

module attributes {stable_mosaic.version = 11 : i64} {
  func.func @_flat_conv_kernel(%arg0: i32, %arg1: memref<1x108x128xbf16, #tpu.memory_space<vmem>>, %arg2: memref<9x128x128xbf16, #tpu.memory_space<vmem>>, %arg3: memref<1x128xf32, #tpu.memory_space<vmem>>, %arg4: memref<80x1xf32, #tpu.memory_space<vmem>>, %arg5: memref<1x80x128xbf16, #tpu.memory_space<vmem>>, %arg6: memref<80x128xf32, #tpu.memory_space<vmem>>) attributes {dimension_semantics = [#tpu.dimension_semantics<parallel>], iteration_bounds = array<i64: 2>, scalar_prefetch = 0 : i64, scratch_operands = 1 : i64, tpu.core_type = #tpu.core_type<tc>, window_params = [{transform_indices = @transform_0, window_bounds = array<i64: 1, 108, 128>}, {pipeline_mode = #tpu.pipeline_mode<synchronous>, transform_indices = @transform_1, window_bounds = array<i64: 9, 128, 128>}, {pipeline_mode = #tpu.pipeline_mode<synchronous>, transform_indices = @transform_2, window_bounds = array<i64: 1, 128>}, {pipeline_mode = #tpu.pipeline_mode<synchronous>, transform_indices = @transform_3, window_bounds = array<i64: 80, 1>}, {transform_indices = @transform_4, window_bounds = array<i64: 1, 80, 128>}]} {
    %cst = arith.constant 0.000000e+00 : f32
    %0 = vector.broadcast %cst : f32 to vector<80x128xf32>
    %c0 = arith.constant 0 : index
    %c0_0 = arith.constant 0 : index
    %1 = vector.load %arg6[%c0, %c0_0] : memref<80x128xf32, #tpu.memory_space<vmem>>, vector<80x128xf32>
    tpu.vector_store %arg6[%c0, %c0_0], %0 {strides = array<i32>} : memref<80x128xf32, #tpu.memory_space<vmem>>, vector<80x128xf32>,
    %c0_1 = arith.constant 0 : index
    %c0_2 = arith.constant 0 : index
    %c0_3 = arith.constant 0 : index
    %2 = vector.load %arg1[%c0_1, %c0_2, %c0_3] : memref<1x108x128xbf16, #tpu.memory_space<vmem>>, vector<1x80x128xbf16>
    %3 = vector.shape_cast %2 : vector<1x80x128xbf16> to vector<80x128xbf16>
    %c0_4 = arith.constant 0 : index
    %c0_5 = arith.constant 0 : index
    %c0_6 = arith.constant 0 : index
    %4 = vector.load %arg2[%c0_4, %c0_5, %c0_6] : memref<9x128x128xbf16, #tpu.memory_space<vmem>>, vector<1x128x128xbf16>
    %5 = vector.shape_cast %4 : vector<1x128x128xbf16> to vector<128x128xbf16>
    %c0_7 = arith.constant 0 : index
    %c0_8 = arith.constant 0 : index
    %6 = vector.load %arg6[%c0_7, %c0_8] : memref<80x128xf32, #tpu.memory_space<vmem>>, vector<80x128xf32>
    %cst_9 = arith.constant dense<0.000000e+00> : vector<80x128xf32>
    %7 = tpu.matmul %3, %5, %cst_9 {dimension_numbers = #tpu.dot_dimension_numbers<[1], [0], [0], [1], [0, 0, 1, 1], [], []>} : vector<80x128xbf16>, vector<128x128xbf16>, vector<80x128xf32> -> vector<80x128xf32>
    %8 = arith.addf %6, %7 : vector<80x128xf32>
    %c0_10 = arith.constant 0 : index
    %c0_11 = arith.constant 0 : index
    %9 = vector.load %arg6[%c0_10, %c0_11] : memref<80x128xf32, #tpu.memory_space<vmem>>, vector<80x128xf32>
    tpu.vector_store %arg6[%c0_10, %c0_11], %8 {strides = array<i32>} : memref<80x128xf32, #tpu.memory_space<vmem>>, vector<80x128xf32>,
    %c0_12 = arith.constant 0 : index
    %c1 = arith.constant 1 : index
    %c0_13 = arith.constant 0 : index
    %10 = vector.load %arg1[%c0_12, %c1, %c0_13] : memref<1x108x128xbf16, #tpu.memory_space<vmem>>, vector<1x80x128xbf16>
    %11 = vector.shape_cast %10 : vector<1x80x128xbf16> to vector<80x128xbf16>
    %c1_14 = arith.constant 1 : index
    %c0_15 = arith.constant 0 : index
    %c0_16 = arith.constant 0 : index
    %12 = vector.load %arg2[%c1_14, %c0_15, %c0_16] : memref<9x128x128xbf16, #tpu.memory_space<vmem>>, vector<1x128x128xbf16>
    %13 = vector.shape_cast %12 : vector<1x128x128xbf16> to vector<128x128xbf16>
    %c0_17 = arith.constant 0 : index
    %c0_18 = arith.constant 0 : index
    %14 = vector.load %arg6[%c0_17, %c0_18] : memref<80x128xf32, #tpu.memory_space<vmem>>, vector<80x128xf32>
    %cst_19 = arith.constant dense<0.000000e+00> : vector<80x128xf32>
    %15 = tpu.matmul %11, %13, %cst_19 {dimension_numbers = #tpu.dot_dimension_numbers<[1], [0], [0], [1], [0, 0, 1, 1], [], []>} : vector<80x128xbf16>, vector<128x128xbf16>, vector<80x128xf32> -> vector<80x128xf32>
    %16 = arith.addf %14, %15 : vector<80x128xf32>
    %c0_20 = arith.constant 0 : index
    %c0_21 = arith.constant 0 : index
    %17 = vector.load %arg6[%c0_20, %c0_21] : memref<80x128xf32, #tpu.memory_space<vmem>>, vector<80x128xf32>
    tpu.vector_store %arg6[%c0_20, %c0_21], %16 {strides = array<i32>} : memref<80x128xf32, #tpu.memory_space<vmem>>, vector<80x128xf32>,
    %c0_22 = arith.constant 0 : index
    %c2 = arith.constant 2 : index
    %c0_23 = arith.constant 0 : index
    %18 = vector.load %arg1[%c0_22, %c2, %c0_23] : memref<1x108x128xbf16, #tpu.memory_space<vmem>>, vector<1x80x128xbf16>
    %19 = vector.shape_cast %18 : vector<1x80x128xbf16> to vector<80x128xbf16>
    %c2_24 = arith.constant 2 : index
    %c0_25 = arith.constant 0 : index
    %c0_26 = arith.constant 0 : index
    %20 = vector.load %arg2[%c2_24, %c0_25, %c0_26] : memref<9x128x128xbf16, #tpu.memory_space<vmem>>, vector<1x128x128xbf16>
    %21 = vector.shape_cast %20 : vector<1x128x128xbf16> to vector<128x128xbf16>
    %c0_27 = arith.constant 0 : index
    %c0_28 = arith.constant 0 : index
    %22 = vector.load %arg6[%c0_27, %c0_28] : memref<80x128xf32, #tpu.memory_space<vmem>>, vector<80x128xf32>
    %cst_29 = arith.constant dense<0.000000e+00> : vector<80x128xf32>
    %23 = tpu.matmul %19, %21, %cst_29 {dimension_numbers = #tpu.dot_dimension_numbers<[1], [0], [0], [1], [0, 0, 1, 1], [], []>} : vector<80x128xbf16>, vector<128x128xbf16>, vector<80x128xf32> -> vector<80x128xf32>
    %24 = arith.addf %22, %23 : vector<80x128xf32>
    %c0_30 = arith.constant 0 : index
    %c0_31 = arith.constant 0 : index
    %25 = vector.load %arg6[%c0_30, %c0_31] : memref<80x128xf32, #tpu.memory_space<vmem>>, vector<80x128xf32>
    tpu.vector_store %arg6[%c0_30, %c0_31], %24 {strides = array<i32>} : memref<80x128xf32, #tpu.memory_space<vmem>>, vector<80x128xf32>,
    %c0_32 = arith.constant 0 : index
    %c10 = arith.constant 10 : index
    %c0_33 = arith.constant 0 : index
    %26 = vector.load %arg1[%c0_32, %c10, %c0_33] : memref<1x108x128xbf16, #tpu.memory_space<vmem>>, vector<1x80x128xbf16>
    %27 = vector.shape_cast %26 : vector<1x80x128xbf16> to vector<80x128xbf16>
    %c3 = arith.constant 3 : index
    %c0_34 = arith.constant 0 : index
    %c0_35 = arith.constant 0 : index
    %28 = vector.load %arg2[%c3, %c0_34, %c0_35] : memref<9x128x128xbf16, #tpu.memory_space<vmem>>, vector<1x128x128xbf16>
    %29 = vector.shape_cast %28 : vector<1x128x128xbf16> to vector<128x128xbf16>
    %c0_36 = arith.constant 0 : index
    %c0_37 = arith.constant 0 : index
    %30 = vector.load %arg6[%c0_36, %c0_37] : memref<80x128xf32, #tpu.memory_space<vmem>>, vector<80x128xf32>
    %cst_38 = arith.constant dense<0.000000e+00> : vector<80x128xf32>
    %31 = tpu.matmul %27, %29, %cst_38 {dimension_numbers = #tpu.dot_dimension_numbers<[1], [0], [0], [1], [0, 0, 1, 1], [], []>} : vector<80x128xbf16>, vector<128x128xbf16>, vector<80x128xf32> -> vector<80x128xf32>
    %32 = arith.addf %30, %31 : vector<80x128xf32>
    %c0_39 = arith.constant 0 : index
    %c0_40 = arith.constant 0 : index
    %33 = vector.load %arg6[%c0_39, %c0_40] : memref<80x128xf32, #tpu.memory_space<vmem>>, vector<80x128xf32>
    tpu.vector_store %arg6[%c0_39, %c0_40], %32 {strides = array<i32>} : memref<80x128xf32, #tpu.memory_space<vmem>>, vector<80x128xf32>,
    %c0_41 = arith.constant 0 : index
    %c11 = arith.constant 11 : index
    %c0_42 = arith.constant 0 : index
    %34 = vector.load %arg1[%c0_41, %c11, %c0_42] : memref<1x108x128xbf16, #tpu.memory_space<vmem>>, vector<1x80x128xbf16>
    %35 = vector.shape_cast %34 : vector<1x80x128xbf16> to vector<80x128xbf16>
    %c4 = arith.constant 4 : index
    %c0_43 = arith.constant 0 : index
    %c0_44 = arith.constant 0 : index
    %36 = vector.load %arg2[%c4, %c0_43, %c0_44] : memref<9x128x128xbf16, #tpu.memory_space<vmem>>, vector<1x128x128xbf16>
    %37 = vector.shape_cast %36 : vector<1x128x128xbf16> to vector<128x128xbf16>
    %c0_45 = arith.constant 0 : index
    %c0_46 = arith.constant 0 : index
    %38 = vector.load %arg6[%c0_45, %c0_46] : memref<80x128xf32, #tpu.memory_space<vmem>>, vector<80x128xf32>
    %cst_47 = arith.constant dense<0.000000e+00> : vector<80x128xf32>
    %39 = tpu.matmul %35, %37, %cst_47 {dimension_numbers = #tpu.dot_dimension_numbers<[1], [0], [0], [1], [0, 0, 1, 1], [], []>} : vector<80x128xbf16>, vector<128x128xbf16>, vector<80x128xf32> -> vector<80x128xf32>
    %40 = arith.addf %38, %39 : vector<80x128xf32>
    %c0_48 = arith.constant 0 : index
    %c0_49 = arith.constant 0 : index
    %41 = vector.load %arg6[%c0_48, %c0_49] : memref<80x128xf32, #tpu.memory_space<vmem>>, vector<80x128xf32>
    tpu.vector_store %arg6[%c0_48, %c0_49], %40 {strides = array<i32>} : memref<80x128xf32, #tpu.memory_space<vmem>>, vector<80x128xf32>,
    %c0_50 = arith.constant 0 : index
    %c12 = arith.constant 12 : index
    %c0_51 = arith.constant 0 : index
    %42 = vector.load %arg1[%c0_50, %c12, %c0_51] : memref<1x108x128xbf16, #tpu.memory_space<vmem>>, vector<1x80x128xbf16>
    %43 = vector.shape_cast %42 : vector<1x80x128xbf16> to vector<80x128xbf16>
    %c5 = arith.constant 5 : index
    %c0_52 = arith.constant 0 : index
    %c0_53 = arith.constant 0 : index
    %44 = vector.load %arg2[%c5, %c0_52, %c0_53] : memref<9x128x128xbf16, #tpu.memory_space<vmem>>, vector<1x128x128xbf16>
    %45 = vector.shape_cast %44 : vector<1x128x128xbf16> to vector<128x128xbf16>
    %c0_54 = arith.constant 0 : index
    %c0_55 = arith.constant 0 : index
    %46 = vector.load %arg6[%c0_54, %c0_55] : memref<80x128xf32, #tpu.memory_space<vmem>>, vector<80x128xf32>
    %cst_56 = arith.constant dense<0.000000e+00> : vector<80x128xf32>
    %47 = tpu.matmul %43, %45, %cst_56 {dimension_numbers = #tpu.dot_dimension_numbers<[1], [0], [0], [1], [0, 0, 1, 1], [], []>} : vector<80x128xbf16>, vector<128x128xbf16>, vector<80x128xf32> -> vector<80x128xf32>
    %48 = arith.addf %46, %47 : vector<80x128xf32>
    %c0_57 = arith.constant 0 : index
    %c0_58 = arith.constant 0 : index
    %49 = vector.load %arg6[%c0_57, %c0_58] : memref<80x128xf32, #tpu.memory_space<vmem>>, vector<80x128xf32>
    tpu.vector_store %arg6[%c0_57, %c0_58], %48 {strides = array<i32>} : memref<80x128xf32, #tpu.memory_space<vmem>>, vector<80x128xf32>,
    %c0_59 = arith.constant 0 : index
    %c20 = arith.constant 20 : index
    %c0_60 = arith.constant 0 : index
    %50 = vector.load %arg1[%c0_59, %c20, %c0_60] : memref<1x108x128xbf16, #tpu.memory_space<vmem>>, vector<1x80x128xbf16>
    %51 = vector.shape_cast %50 : vector<1x80x128xbf16> to vector<80x128xbf16>
    %c6 = arith.constant 6 : index
    %c0_61 = arith.constant 0 : index
    %c0_62 = arith.constant 0 : index
    %52 = vector.load %arg2[%c6, %c0_61, %c0_62] : memref<9x128x128xbf16, #tpu.memory_space<vmem>>, vector<1x128x128xbf16>
    %53 = vector.shape_cast %52 : vector<1x128x128xbf16> to vector<128x128xbf16>
    %c0_63 = arith.constant 0 : index
    %c0_64 = arith.constant 0 : index
    %54 = vector.load %arg6[%c0_63, %c0_64] : memref<80x128xf32, #tpu.memory_space<vmem>>, vector<80x128xf32>
    %cst_65 = arith.constant dense<0.000000e+00> : vector<80x128xf32>
    %55 = tpu.matmul %51, %53, %cst_65 {dimension_numbers = #tpu.dot_dimension_numbers<[1], [0], [0], [1], [0, 0, 1, 1], [], []>} : vector<80x128xbf16>, vector<128x128xbf16>, vector<80x128xf32> -> vector<80x128xf32>
    %56 = arith.addf %54, %55 : vector<80x128xf32>
    %c0_66 = arith.constant 0 : index
    %c0_67 = arith.constant 0 : index
    %57 = vector.load %arg6[%c0_66, %c0_67] : memref<80x128xf32, #tpu.memory_space<vmem>>, vector<80x128xf32>
    tpu.vector_store %arg6[%c0_66, %c0_67], %56 {strides = array<i32>} : memref<80x128xf32, #tpu.memory_space<vmem>>, vector<80x128xf32>,
    %c0_68 = arith.constant 0 : index
    %c21 = arith.constant 21 : index
    %c0_69 = arith.constant 0 : index
    %58 = vector.load %arg1[%c0_68, %c21, %c0_69] : memref<1x108x128xbf16, #tpu.memory_space<vmem>>, vector<1x80x128xbf16>
    %59 = vector.shape_cast %58 : vector<1x80x128xbf16> to vector<80x128xbf16>
    %c7 = arith.constant 7 : index
    %c0_70 = arith.constant 0 : index
    %c0_71 = arith.constant 0 : index
    %60 = vector.load %arg2[%c7, %c0_70, %c0_71] : memref<9x128x128xbf16, #tpu.memory_space<vmem>>, vector<1x128x128xbf16>
    %61 = vector.shape_cast %60 : vector<1x128x128xbf16> to vector<128x128xbf16>
    %c0_72 = arith.constant 0 : index
    %c0_73 = arith.constant 0 : index
    %62 = vector.load %arg6[%c0_72, %c0_73] : memref<80x128xf32, #tpu.memory_space<vmem>>, vector<80x128xf32>
    %cst_74 = arith.constant dense<0.000000e+00> : vector<80x128xf32>
    %63 = tpu.matmul %59, %61, %cst_74 {dimension_numbers = #tpu.dot_dimension_numbers<[1], [0], [0], [1], [0, 0, 1, 1], [], []>} : vector<80x128xbf16>, vector<128x128xbf16>, vector<80x128xf32> -> vector<80x128xf32>
    %64 = arith.addf %62, %63 : vector<80x128xf32>
    %c0_75 = arith.constant 0 : index
    %c0_76 = arith.constant 0 : index
    %65 = vector.load %arg6[%c0_75, %c0_76] : memref<80x128xf32, #tpu.memory_space<vmem>>, vector<80x128xf32>
    tpu.vector_store %arg6[%c0_75, %c0_76], %64 {strides = array<i32>} : memref<80x128xf32, #tpu.memory_space<vmem>>, vector<80x128xf32>,
    %c0_77 = arith.constant 0 : index
    %c22 = arith.constant 22 : index
    %c0_78 = arith.constant 0 : index
    %66 = vector.load %arg1[%c0_77, %c22, %c0_78] : memref<1x108x128xbf16, #tpu.memory_space<vmem>>, vector<1x80x128xbf16>
    %67 = vector.shape_cast %66 : vector<1x80x128xbf16> to vector<80x128xbf16>
    %c8 = arith.constant 8 : index
    %c0_79 = arith.constant 0 : index
    %c0_80 = arith.constant 0 : index
    %68 = vector.load %arg2[%c8, %c0_79, %c0_80] : memref<9x128x128xbf16, #tpu.memory_space<vmem>>, vector<1x128x128xbf16>
    %69 = vector.shape_cast %68 : vector<1x128x128xbf16> to vector<128x128xbf16>
    %c0_81 = arith.constant 0 : index
    %c0_82 = arith.constant 0 : index
    %70 = vector.load %arg6[%c0_81, %c0_82] : memref<80x128xf32, #tpu.memory_space<vmem>>, vector<80x128xf32>
    %cst_83 = arith.constant dense<0.000000e+00> : vector<80x128xf32>
    %71 = tpu.matmul %67, %69, %cst_83 {dimension_numbers = #tpu.dot_dimension_numbers<[1], [0], [0], [1], [0, 0, 1, 1], [], []>} : vector<80x128xbf16>, vector<128x128xbf16>, vector<80x128xf32> -> vector<80x128xf32>
    %72 = arith.addf %70, %71 : vector<80x128xf32>
    %c0_84 = arith.constant 0 : index
    %c0_85 = arith.constant 0 : index
    %73 = vector.load %arg6[%c0_84, %c0_85] : memref<80x128xf32, #tpu.memory_space<vmem>>, vector<80x128xf32>
    tpu.vector_store %arg6[%c0_84, %c0_85], %72 {strides = array<i32>} : memref<80x128xf32, #tpu.memory_space<vmem>>, vector<80x128xf32>,
    %c0_86 = arith.constant 0 : index
    %c0_87 = arith.constant 0 : index
    %74 = vector.load %arg6[%c0_86, %c0_87] : memref<80x128xf32, #tpu.memory_space<vmem>>, vector<80x128xf32>
    %c0_88 = arith.constant 0 : index
    %c0_89 = arith.constant 0 : index
    %75 = vector.load %arg3[%c0_88, %c0_89] : memref<1x128xf32, #tpu.memory_space<vmem>>, vector<1x128xf32>
    %76 = vector.broadcast %75 : vector<1x128xf32> to vector<80x128xf32>
    %77 = arith.addf %74, %76 : vector<80x128xf32>
    %cst_90 = arith.constant 0.000000e+00 : f32
    %78 = vector.broadcast %cst_90 : f32 to vector<80x128xf32>
    %79 = arith.maximumf %77, %78 : vector<80x128xf32>
    %c0_91 = arith.constant 0 : index
    %c0_92 = arith.constant 0 : index
    %80 = vector.load %arg4[%c0_91, %c0_92] : memref<80x1xf32, #tpu.memory_space<vmem>>, vector<80x1xf32>
    %81 = vector.broadcast %80 : vector<80x1xf32> to vector<80x128xf32>
    %82 = arith.mulf %79, %81 : vector<80x128xf32>
    %83 = arith.truncf %82 : vector<80x128xf32> to vector<80x128xbf16>
    %c0_93 = arith.constant 0 : index
    %c0_94 = arith.constant 0 : index
    %c0_95 = arith.constant 0 : index
    %84 = vector.load %arg5[%c0_93, %c0_94, %c0_95] : memref<1x80x128xbf16, #tpu.memory_space<vmem>>, vector<1x80x128xbf16>
    %85 = vector.shape_cast %84 : vector<1x80x128xbf16> to vector<80x128xbf16>
    %86 = vector.shape_cast %83 : vector<80x128xbf16> to vector<1x80x128xbf16>
    tpu.vector_store %arg5[%c0_93, %c0_94, %c0_95], %86 {strides = array<i32>} : memref<1x80x128xbf16, #tpu.memory_space<vmem>>, vector<1x80x128xbf16>,
    return
  }
  func.func @transform_0(%arg0: i32) -> (i32, i32, i32) {
    %c0_i32 = arith.constant 0 : i32
    %c0_i32_0 = arith.constant 0 : i32
    %c0_i32_1 = arith.constant 0 : i32
    return %arg0, %c0_i32, %c0_i32_0 : i32, i32, i32
  }
  func.func @transform_1(%arg0: i32) -> (i32, i32, i32) {
    %c0_i32 = arith.constant 0 : i32
    %c0_i32_0 = arith.constant 0 : i32
    %c0_i32_1 = arith.constant 0 : i32
    %c0_i32_2 = arith.constant 0 : i32
    return %c0_i32, %c0_i32_0, %c0_i32_1 : i32, i32, i32
  }
  func.func @transform_2(%arg0: i32) -> (i32, i32) {
    %c0_i32 = arith.constant 0 : i32
    %c0_i32_0 = arith.constant 0 : i32
    %c0_i32_1 = arith.constant 0 : i32
    return %c0_i32, %c0_i32_0 : i32, i32
  }
  func.func @transform_3(%arg0: i32) -> (i32, i32) {
    %c0_i32 = arith.constant 0 : i32
    %c0_i32_0 = arith.constant 0 : i32
    %c0_i32_1 = arith.constant 0 : i32
    return %c0_i32, %c0_i32_0 : i32, i32
  }
  func.func @transform_4(%arg0: i32) -> (i32, i32, i32) {
    %c0_i32 = arith.constant 0 : i32
    %c0_i32_0 = arith.constant 0 : i32
    %c0_i32_1 = arith.constant 0 : i32
    return %arg0, %c0_i32, %c0_i32_0 : i32, i32, i32
  }
}

module attributes {stable_mosaic.version = 11 : i64} {
  func.func @_flat_conv_kernel(%arg0: i32, %arg1: memref<1x44x128xbf16, #tpu.memory_space<vmem>>, %arg2: memref<9x128x256xbf16, #tpu.memory_space<vmem>>, %arg3: memref<1x256xf32, #tpu.memory_space<vmem>>, %arg4: memref<24x1xf32, #tpu.memory_space<vmem>>, %arg5: memref<1x24x256xbf16, #tpu.memory_space<vmem>>, %arg6: memref<24x256xf32, #tpu.memory_space<vmem>>) attributes {dimension_semantics = [#tpu.dimension_semantics<parallel>], iteration_bounds = array<i64: 2>, scalar_prefetch = 0 : i64, scratch_operands = 1 : i64, tpu.core_type = #tpu.core_type<tc>, window_params = [{transform_indices = @transform_0, window_bounds = array<i64: 1, 44, 128>}, {pipeline_mode = #tpu.pipeline_mode<synchronous>, transform_indices = @transform_1, window_bounds = array<i64: 9, 128, 256>}, {pipeline_mode = #tpu.pipeline_mode<synchronous>, transform_indices = @transform_2, window_bounds = array<i64: 1, 256>}, {pipeline_mode = #tpu.pipeline_mode<synchronous>, transform_indices = @transform_3, window_bounds = array<i64: 24, 1>}, {transform_indices = @transform_4, window_bounds = array<i64: 1, 24, 256>}]} {
    %cst = arith.constant 0.000000e+00 : f32
    %0 = vector.broadcast %cst : f32 to vector<24x256xf32>
    %c0 = arith.constant 0 : index
    %c0_0 = arith.constant 0 : index
    %1 = vector.load %arg6[%c0, %c0_0] : memref<24x256xf32, #tpu.memory_space<vmem>>, vector<24x256xf32>
    tpu.vector_store %arg6[%c0, %c0_0], %0 {strides = array<i32>} : memref<24x256xf32, #tpu.memory_space<vmem>>, vector<24x256xf32>,
    %c0_1 = arith.constant 0 : index
    %c0_2 = arith.constant 0 : index
    %c0_3 = arith.constant 0 : index
    %2 = vector.load %arg1[%c0_1, %c0_2, %c0_3] : memref<1x44x128xbf16, #tpu.memory_space<vmem>>, vector<1x24x128xbf16>
    %3 = vector.shape_cast %2 : vector<1x24x128xbf16> to vector<24x128xbf16>
    %c0_4 = arith.constant 0 : index
    %c0_5 = arith.constant 0 : index
    %c0_6 = arith.constant 0 : index
    %4 = vector.load %arg2[%c0_4, %c0_5, %c0_6] : memref<9x128x256xbf16, #tpu.memory_space<vmem>>, vector<1x128x256xbf16>
    %5 = vector.shape_cast %4 : vector<1x128x256xbf16> to vector<128x256xbf16>
    %c0_7 = arith.constant 0 : index
    %c0_8 = arith.constant 0 : index
    %6 = vector.load %arg6[%c0_7, %c0_8] : memref<24x256xf32, #tpu.memory_space<vmem>>, vector<24x256xf32>
    %cst_9 = arith.constant dense<0.000000e+00> : vector<24x256xf32>
    %7 = tpu.matmul %3, %5, %cst_9 {dimension_numbers = #tpu.dot_dimension_numbers<[1], [0], [0], [1], [0, 0, 1, 1], [], []>} : vector<24x128xbf16>, vector<128x256xbf16>, vector<24x256xf32> -> vector<24x256xf32>
    %8 = arith.addf %6, %7 : vector<24x256xf32>
    %c0_10 = arith.constant 0 : index
    %c0_11 = arith.constant 0 : index
    %9 = vector.load %arg6[%c0_10, %c0_11] : memref<24x256xf32, #tpu.memory_space<vmem>>, vector<24x256xf32>
    tpu.vector_store %arg6[%c0_10, %c0_11], %8 {strides = array<i32>} : memref<24x256xf32, #tpu.memory_space<vmem>>, vector<24x256xf32>,
    %c0_12 = arith.constant 0 : index
    %c1 = arith.constant 1 : index
    %c0_13 = arith.constant 0 : index
    %10 = vector.load %arg1[%c0_12, %c1, %c0_13] : memref<1x44x128xbf16, #tpu.memory_space<vmem>>, vector<1x24x128xbf16>
    %11 = vector.shape_cast %10 : vector<1x24x128xbf16> to vector<24x128xbf16>
    %c1_14 = arith.constant 1 : index
    %c0_15 = arith.constant 0 : index
    %c0_16 = arith.constant 0 : index
    %12 = vector.load %arg2[%c1_14, %c0_15, %c0_16] : memref<9x128x256xbf16, #tpu.memory_space<vmem>>, vector<1x128x256xbf16>
    %13 = vector.shape_cast %12 : vector<1x128x256xbf16> to vector<128x256xbf16>
    %c0_17 = arith.constant 0 : index
    %c0_18 = arith.constant 0 : index
    %14 = vector.load %arg6[%c0_17, %c0_18] : memref<24x256xf32, #tpu.memory_space<vmem>>, vector<24x256xf32>
    %cst_19 = arith.constant dense<0.000000e+00> : vector<24x256xf32>
    %15 = tpu.matmul %11, %13, %cst_19 {dimension_numbers = #tpu.dot_dimension_numbers<[1], [0], [0], [1], [0, 0, 1, 1], [], []>} : vector<24x128xbf16>, vector<128x256xbf16>, vector<24x256xf32> -> vector<24x256xf32>
    %16 = arith.addf %14, %15 : vector<24x256xf32>
    %c0_20 = arith.constant 0 : index
    %c0_21 = arith.constant 0 : index
    %17 = vector.load %arg6[%c0_20, %c0_21] : memref<24x256xf32, #tpu.memory_space<vmem>>, vector<24x256xf32>
    tpu.vector_store %arg6[%c0_20, %c0_21], %16 {strides = array<i32>} : memref<24x256xf32, #tpu.memory_space<vmem>>, vector<24x256xf32>,
    %c0_22 = arith.constant 0 : index
    %c2 = arith.constant 2 : index
    %c0_23 = arith.constant 0 : index
    %18 = vector.load %arg1[%c0_22, %c2, %c0_23] : memref<1x44x128xbf16, #tpu.memory_space<vmem>>, vector<1x24x128xbf16>
    %19 = vector.shape_cast %18 : vector<1x24x128xbf16> to vector<24x128xbf16>
    %c2_24 = arith.constant 2 : index
    %c0_25 = arith.constant 0 : index
    %c0_26 = arith.constant 0 : index
    %20 = vector.load %arg2[%c2_24, %c0_25, %c0_26] : memref<9x128x256xbf16, #tpu.memory_space<vmem>>, vector<1x128x256xbf16>
    %21 = vector.shape_cast %20 : vector<1x128x256xbf16> to vector<128x256xbf16>
    %c0_27 = arith.constant 0 : index
    %c0_28 = arith.constant 0 : index
    %22 = vector.load %arg6[%c0_27, %c0_28] : memref<24x256xf32, #tpu.memory_space<vmem>>, vector<24x256xf32>
    %cst_29 = arith.constant dense<0.000000e+00> : vector<24x256xf32>
    %23 = tpu.matmul %19, %21, %cst_29 {dimension_numbers = #tpu.dot_dimension_numbers<[1], [0], [0], [1], [0, 0, 1, 1], [], []>} : vector<24x128xbf16>, vector<128x256xbf16>, vector<24x256xf32> -> vector<24x256xf32>
    %24 = arith.addf %22, %23 : vector<24x256xf32>
    %c0_30 = arith.constant 0 : index
    %c0_31 = arith.constant 0 : index
    %25 = vector.load %arg6[%c0_30, %c0_31] : memref<24x256xf32, #tpu.memory_space<vmem>>, vector<24x256xf32>
    tpu.vector_store %arg6[%c0_30, %c0_31], %24 {strides = array<i32>} : memref<24x256xf32, #tpu.memory_space<vmem>>, vector<24x256xf32>,
    %c0_32 = arith.constant 0 : index
    %c6 = arith.constant 6 : index
    %c0_33 = arith.constant 0 : index
    %26 = vector.load %arg1[%c0_32, %c6, %c0_33] : memref<1x44x128xbf16, #tpu.memory_space<vmem>>, vector<1x24x128xbf16>
    %27 = vector.shape_cast %26 : vector<1x24x128xbf16> to vector<24x128xbf16>
    %c3 = arith.constant 3 : index
    %c0_34 = arith.constant 0 : index
    %c0_35 = arith.constant 0 : index
    %28 = vector.load %arg2[%c3, %c0_34, %c0_35] : memref<9x128x256xbf16, #tpu.memory_space<vmem>>, vector<1x128x256xbf16>
    %29 = vector.shape_cast %28 : vector<1x128x256xbf16> to vector<128x256xbf16>
    %c0_36 = arith.constant 0 : index
    %c0_37 = arith.constant 0 : index
    %30 = vector.load %arg6[%c0_36, %c0_37] : memref<24x256xf32, #tpu.memory_space<vmem>>, vector<24x256xf32>
    %cst_38 = arith.constant dense<0.000000e+00> : vector<24x256xf32>
    %31 = tpu.matmul %27, %29, %cst_38 {dimension_numbers = #tpu.dot_dimension_numbers<[1], [0], [0], [1], [0, 0, 1, 1], [], []>} : vector<24x128xbf16>, vector<128x256xbf16>, vector<24x256xf32> -> vector<24x256xf32>
    %32 = arith.addf %30, %31 : vector<24x256xf32>
    %c0_39 = arith.constant 0 : index
    %c0_40 = arith.constant 0 : index
    %33 = vector.load %arg6[%c0_39, %c0_40] : memref<24x256xf32, #tpu.memory_space<vmem>>, vector<24x256xf32>
    tpu.vector_store %arg6[%c0_39, %c0_40], %32 {strides = array<i32>} : memref<24x256xf32, #tpu.memory_space<vmem>>, vector<24x256xf32>,
    %c0_41 = arith.constant 0 : index
    %c7 = arith.constant 7 : index
    %c0_42 = arith.constant 0 : index
    %34 = vector.load %arg1[%c0_41, %c7, %c0_42] : memref<1x44x128xbf16, #tpu.memory_space<vmem>>, vector<1x24x128xbf16>
    %35 = vector.shape_cast %34 : vector<1x24x128xbf16> to vector<24x128xbf16>
    %c4 = arith.constant 4 : index
    %c0_43 = arith.constant 0 : index
    %c0_44 = arith.constant 0 : index
    %36 = vector.load %arg2[%c4, %c0_43, %c0_44] : memref<9x128x256xbf16, #tpu.memory_space<vmem>>, vector<1x128x256xbf16>
    %37 = vector.shape_cast %36 : vector<1x128x256xbf16> to vector<128x256xbf16>
    %c0_45 = arith.constant 0 : index
    %c0_46 = arith.constant 0 : index
    %38 = vector.load %arg6[%c0_45, %c0_46] : memref<24x256xf32, #tpu.memory_space<vmem>>, vector<24x256xf32>
    %cst_47 = arith.constant dense<0.000000e+00> : vector<24x256xf32>
    %39 = tpu.matmul %35, %37, %cst_47 {dimension_numbers = #tpu.dot_dimension_numbers<[1], [0], [0], [1], [0, 0, 1, 1], [], []>} : vector<24x128xbf16>, vector<128x256xbf16>, vector<24x256xf32> -> vector<24x256xf32>
    %40 = arith.addf %38, %39 : vector<24x256xf32>
    %c0_48 = arith.constant 0 : index
    %c0_49 = arith.constant 0 : index
    %41 = vector.load %arg6[%c0_48, %c0_49] : memref<24x256xf32, #tpu.memory_space<vmem>>, vector<24x256xf32>
    tpu.vector_store %arg6[%c0_48, %c0_49], %40 {strides = array<i32>} : memref<24x256xf32, #tpu.memory_space<vmem>>, vector<24x256xf32>,
    %c0_50 = arith.constant 0 : index
    %c8 = arith.constant 8 : index
    %c0_51 = arith.constant 0 : index
    %42 = vector.load %arg1[%c0_50, %c8, %c0_51] : memref<1x44x128xbf16, #tpu.memory_space<vmem>>, vector<1x24x128xbf16>
    %43 = vector.shape_cast %42 : vector<1x24x128xbf16> to vector<24x128xbf16>
    %c5 = arith.constant 5 : index
    %c0_52 = arith.constant 0 : index
    %c0_53 = arith.constant 0 : index
    %44 = vector.load %arg2[%c5, %c0_52, %c0_53] : memref<9x128x256xbf16, #tpu.memory_space<vmem>>, vector<1x128x256xbf16>
    %45 = vector.shape_cast %44 : vector<1x128x256xbf16> to vector<128x256xbf16>
    %c0_54 = arith.constant 0 : index
    %c0_55 = arith.constant 0 : index
    %46 = vector.load %arg6[%c0_54, %c0_55] : memref<24x256xf32, #tpu.memory_space<vmem>>, vector<24x256xf32>
    %cst_56 = arith.constant dense<0.000000e+00> : vector<24x256xf32>
    %47 = tpu.matmul %43, %45, %cst_56 {dimension_numbers = #tpu.dot_dimension_numbers<[1], [0], [0], [1], [0, 0, 1, 1], [], []>} : vector<24x128xbf16>, vector<128x256xbf16>, vector<24x256xf32> -> vector<24x256xf32>
    %48 = arith.addf %46, %47 : vector<24x256xf32>
    %c0_57 = arith.constant 0 : index
    %c0_58 = arith.constant 0 : index
    %49 = vector.load %arg6[%c0_57, %c0_58] : memref<24x256xf32, #tpu.memory_space<vmem>>, vector<24x256xf32>
    tpu.vector_store %arg6[%c0_57, %c0_58], %48 {strides = array<i32>} : memref<24x256xf32, #tpu.memory_space<vmem>>, vector<24x256xf32>,
    %c0_59 = arith.constant 0 : index
    %c12 = arith.constant 12 : index
    %c0_60 = arith.constant 0 : index
    %50 = vector.load %arg1[%c0_59, %c12, %c0_60] : memref<1x44x128xbf16, #tpu.memory_space<vmem>>, vector<1x24x128xbf16>
    %51 = vector.shape_cast %50 : vector<1x24x128xbf16> to vector<24x128xbf16>
    %c6_61 = arith.constant 6 : index
    %c0_62 = arith.constant 0 : index
    %c0_63 = arith.constant 0 : index
    %52 = vector.load %arg2[%c6_61, %c0_62, %c0_63] : memref<9x128x256xbf16, #tpu.memory_space<vmem>>, vector<1x128x256xbf16>
    %53 = vector.shape_cast %52 : vector<1x128x256xbf16> to vector<128x256xbf16>
    %c0_64 = arith.constant 0 : index
    %c0_65 = arith.constant 0 : index
    %54 = vector.load %arg6[%c0_64, %c0_65] : memref<24x256xf32, #tpu.memory_space<vmem>>, vector<24x256xf32>
    %cst_66 = arith.constant dense<0.000000e+00> : vector<24x256xf32>
    %55 = tpu.matmul %51, %53, %cst_66 {dimension_numbers = #tpu.dot_dimension_numbers<[1], [0], [0], [1], [0, 0, 1, 1], [], []>} : vector<24x128xbf16>, vector<128x256xbf16>, vector<24x256xf32> -> vector<24x256xf32>
    %56 = arith.addf %54, %55 : vector<24x256xf32>
    %c0_67 = arith.constant 0 : index
    %c0_68 = arith.constant 0 : index
    %57 = vector.load %arg6[%c0_67, %c0_68] : memref<24x256xf32, #tpu.memory_space<vmem>>, vector<24x256xf32>
    tpu.vector_store %arg6[%c0_67, %c0_68], %56 {strides = array<i32>} : memref<24x256xf32, #tpu.memory_space<vmem>>, vector<24x256xf32>,
    %c0_69 = arith.constant 0 : index
    %c13 = arith.constant 13 : index
    %c0_70 = arith.constant 0 : index
    %58 = vector.load %arg1[%c0_69, %c13, %c0_70] : memref<1x44x128xbf16, #tpu.memory_space<vmem>>, vector<1x24x128xbf16>
    %59 = vector.shape_cast %58 : vector<1x24x128xbf16> to vector<24x128xbf16>
    %c7_71 = arith.constant 7 : index
    %c0_72 = arith.constant 0 : index
    %c0_73 = arith.constant 0 : index
    %60 = vector.load %arg2[%c7_71, %c0_72, %c0_73] : memref<9x128x256xbf16, #tpu.memory_space<vmem>>, vector<1x128x256xbf16>
    %61 = vector.shape_cast %60 : vector<1x128x256xbf16> to vector<128x256xbf16>
    %c0_74 = arith.constant 0 : index
    %c0_75 = arith.constant 0 : index
    %62 = vector.load %arg6[%c0_74, %c0_75] : memref<24x256xf32, #tpu.memory_space<vmem>>, vector<24x256xf32>
    %cst_76 = arith.constant dense<0.000000e+00> : vector<24x256xf32>
    %63 = tpu.matmul %59, %61, %cst_76 {dimension_numbers = #tpu.dot_dimension_numbers<[1], [0], [0], [1], [0, 0, 1, 1], [], []>} : vector<24x128xbf16>, vector<128x256xbf16>, vector<24x256xf32> -> vector<24x256xf32>
    %64 = arith.addf %62, %63 : vector<24x256xf32>
    %c0_77 = arith.constant 0 : index
    %c0_78 = arith.constant 0 : index
    %65 = vector.load %arg6[%c0_77, %c0_78] : memref<24x256xf32, #tpu.memory_space<vmem>>, vector<24x256xf32>
    tpu.vector_store %arg6[%c0_77, %c0_78], %64 {strides = array<i32>} : memref<24x256xf32, #tpu.memory_space<vmem>>, vector<24x256xf32>,
    %c0_79 = arith.constant 0 : index
    %c14 = arith.constant 14 : index
    %c0_80 = arith.constant 0 : index
    %66 = vector.load %arg1[%c0_79, %c14, %c0_80] : memref<1x44x128xbf16, #tpu.memory_space<vmem>>, vector<1x24x128xbf16>
    %67 = vector.shape_cast %66 : vector<1x24x128xbf16> to vector<24x128xbf16>
    %c8_81 = arith.constant 8 : index
    %c0_82 = arith.constant 0 : index
    %c0_83 = arith.constant 0 : index
    %68 = vector.load %arg2[%c8_81, %c0_82, %c0_83] : memref<9x128x256xbf16, #tpu.memory_space<vmem>>, vector<1x128x256xbf16>
    %69 = vector.shape_cast %68 : vector<1x128x256xbf16> to vector<128x256xbf16>
    %c0_84 = arith.constant 0 : index
    %c0_85 = arith.constant 0 : index
    %70 = vector.load %arg6[%c0_84, %c0_85] : memref<24x256xf32, #tpu.memory_space<vmem>>, vector<24x256xf32>
    %cst_86 = arith.constant dense<0.000000e+00> : vector<24x256xf32>
    %71 = tpu.matmul %67, %69, %cst_86 {dimension_numbers = #tpu.dot_dimension_numbers<[1], [0], [0], [1], [0, 0, 1, 1], [], []>} : vector<24x128xbf16>, vector<128x256xbf16>, vector<24x256xf32> -> vector<24x256xf32>
    %72 = arith.addf %70, %71 : vector<24x256xf32>
    %c0_87 = arith.constant 0 : index
    %c0_88 = arith.constant 0 : index
    %73 = vector.load %arg6[%c0_87, %c0_88] : memref<24x256xf32, #tpu.memory_space<vmem>>, vector<24x256xf32>
    tpu.vector_store %arg6[%c0_87, %c0_88], %72 {strides = array<i32>} : memref<24x256xf32, #tpu.memory_space<vmem>>, vector<24x256xf32>,
    %c0_89 = arith.constant 0 : index
    %c0_90 = arith.constant 0 : index
    %74 = vector.load %arg6[%c0_89, %c0_90] : memref<24x256xf32, #tpu.memory_space<vmem>>, vector<24x256xf32>
    %c0_91 = arith.constant 0 : index
    %c0_92 = arith.constant 0 : index
    %75 = vector.load %arg3[%c0_91, %c0_92] : memref<1x256xf32, #tpu.memory_space<vmem>>, vector<1x256xf32>
    %76 = vector.broadcast %75 : vector<1x256xf32> to vector<24x256xf32>
    %77 = arith.addf %74, %76 : vector<24x256xf32>
    %cst_93 = arith.constant 0.000000e+00 : f32
    %78 = vector.broadcast %cst_93 : f32 to vector<24x256xf32>
    %79 = arith.maximumf %77, %78 : vector<24x256xf32>
    %c0_94 = arith.constant 0 : index
    %c0_95 = arith.constant 0 : index
    %80 = vector.load %arg4[%c0_94, %c0_95] : memref<24x1xf32, #tpu.memory_space<vmem>>, vector<24x1xf32>
    %81 = vector.broadcast %80 : vector<24x1xf32> to vector<24x256xf32>
    %82 = arith.mulf %79, %81 : vector<24x256xf32>
    %83 = arith.truncf %82 : vector<24x256xf32> to vector<24x256xbf16>
    %c0_96 = arith.constant 0 : index
    %c0_97 = arith.constant 0 : index
    %c0_98 = arith.constant 0 : index
    %84 = vector.load %arg5[%c0_96, %c0_97, %c0_98] : memref<1x24x256xbf16, #tpu.memory_space<vmem>>, vector<1x24x256xbf16>
    %85 = vector.shape_cast %84 : vector<1x24x256xbf16> to vector<24x256xbf16>
    %86 = vector.shape_cast %83 : vector<24x256xbf16> to vector<1x24x256xbf16>
    tpu.vector_store %arg5[%c0_96, %c0_97, %c0_98], %86 {strides = array<i32>} : memref<1x24x256xbf16, #tpu.memory_space<vmem>>, vector<1x24x256xbf16>,
    return
  }
  func.func @transform_0(%arg0: i32) -> (i32, i32, i32) {
    %c0_i32 = arith.constant 0 : i32
    %c0_i32_0 = arith.constant 0 : i32
    %c0_i32_1 = arith.constant 0 : i32
    return %arg0, %c0_i32, %c0_i32_0 : i32, i32, i32
  }
  func.func @transform_1(%arg0: i32) -> (i32, i32, i32) {
    %c0_i32 = arith.constant 0 : i32
    %c0_i32_0 = arith.constant 0 : i32
    %c0_i32_1 = arith.constant 0 : i32
    %c0_i32_2 = arith.constant 0 : i32
    return %c0_i32, %c0_i32_0, %c0_i32_1 : i32, i32, i32
  }
  func.func @transform_2(%arg0: i32) -> (i32, i32) {
    %c0_i32 = arith.constant 0 : i32
    %c0_i32_0 = arith.constant 0 : i32
    %c0_i32_1 = arith.constant 0 : i32
    return %c0_i32, %c0_i32_0 : i32, i32
  }
  func.func @transform_3(%arg0: i32) -> (i32, i32) {
    %c0_i32 = arith.constant 0 : i32
    %c0_i32_0 = arith.constant 0 : i32
    %c0_i32_1 = arith.constant 0 : i32
    return %c0_i32, %c0_i32_0 : i32, i32
  }
  func.func @transform_4(%arg0: i32) -> (i32, i32, i32) {
    %c0_i32 = arith.constant 0 : i32
    %c0_i32_0 = arith.constant 0 : i32
    %c0_i32_1 = arith.constant 0 : i32
    return %arg0, %c0_i32, %c0_i32_0 : i32, i32, i32
  }
}

module attributes {stable_mosaic.version = 11 : i64} {
  func.func @_flat_conv_kernel(%arg0: i32, %arg1: memref<1x44x256xbf16, #tpu.memory_space<vmem>>, %arg2: memref<9x256x256xbf16, #tpu.memory_space<vmem>>, %arg3: memref<1x256xf32, #tpu.memory_space<vmem>>, %arg4: memref<24x1xf32, #tpu.memory_space<vmem>>, %arg5: memref<1x24x256xbf16, #tpu.memory_space<vmem>>, %arg6: memref<24x256xf32, #tpu.memory_space<vmem>>) attributes {dimension_semantics = [#tpu.dimension_semantics<parallel>], iteration_bounds = array<i64: 2>, scalar_prefetch = 0 : i64, scratch_operands = 1 : i64, tpu.core_type = #tpu.core_type<tc>, window_params = [{transform_indices = @transform_0, window_bounds = array<i64: 1, 44, 256>}, {pipeline_mode = #tpu.pipeline_mode<synchronous>, transform_indices = @transform_1, window_bounds = array<i64: 9, 256, 256>}, {pipeline_mode = #tpu.pipeline_mode<synchronous>, transform_indices = @transform_2, window_bounds = array<i64: 1, 256>}, {pipeline_mode = #tpu.pipeline_mode<synchronous>, transform_indices = @transform_3, window_bounds = array<i64: 24, 1>}, {transform_indices = @transform_4, window_bounds = array<i64: 1, 24, 256>}]} {
    %cst = arith.constant 0.000000e+00 : f32
    %0 = vector.broadcast %cst : f32 to vector<24x256xf32>
    %c0 = arith.constant 0 : index
    %c0_0 = arith.constant 0 : index
    %1 = vector.load %arg6[%c0, %c0_0] : memref<24x256xf32, #tpu.memory_space<vmem>>, vector<24x256xf32>
    tpu.vector_store %arg6[%c0, %c0_0], %0 {strides = array<i32>} : memref<24x256xf32, #tpu.memory_space<vmem>>, vector<24x256xf32>,
    %c0_1 = arith.constant 0 : index
    %c0_2 = arith.constant 0 : index
    %c0_3 = arith.constant 0 : index
    %2 = vector.load %arg1[%c0_1, %c0_2, %c0_3] : memref<1x44x256xbf16, #tpu.memory_space<vmem>>, vector<1x24x256xbf16>
    %3 = vector.shape_cast %2 : vector<1x24x256xbf16> to vector<24x256xbf16>
    %c0_4 = arith.constant 0 : index
    %c0_5 = arith.constant 0 : index
    %c0_6 = arith.constant 0 : index
    %4 = vector.load %arg2[%c0_4, %c0_5, %c0_6] : memref<9x256x256xbf16, #tpu.memory_space<vmem>>, vector<1x256x256xbf16>
    %5 = vector.shape_cast %4 : vector<1x256x256xbf16> to vector<256x256xbf16>
    %c0_7 = arith.constant 0 : index
    %c0_8 = arith.constant 0 : index
    %6 = vector.load %arg6[%c0_7, %c0_8] : memref<24x256xf32, #tpu.memory_space<vmem>>, vector<24x256xf32>
    %cst_9 = arith.constant dense<0.000000e+00> : vector<24x256xf32>
    %7 = tpu.matmul %3, %5, %cst_9 {dimension_numbers = #tpu.dot_dimension_numbers<[1], [0], [0], [1], [0, 0, 1, 1], [], []>} : vector<24x256xbf16>, vector<256x256xbf16>, vector<24x256xf32> -> vector<24x256xf32>
    %8 = arith.addf %6, %7 : vector<24x256xf32>
    %c0_10 = arith.constant 0 : index
    %c0_11 = arith.constant 0 : index
    %9 = vector.load %arg6[%c0_10, %c0_11] : memref<24x256xf32, #tpu.memory_space<vmem>>, vector<24x256xf32>
    tpu.vector_store %arg6[%c0_10, %c0_11], %8 {strides = array<i32>} : memref<24x256xf32, #tpu.memory_space<vmem>>, vector<24x256xf32>,
    %c0_12 = arith.constant 0 : index
    %c1 = arith.constant 1 : index
    %c0_13 = arith.constant 0 : index
    %10 = vector.load %arg1[%c0_12, %c1, %c0_13] : memref<1x44x256xbf16, #tpu.memory_space<vmem>>, vector<1x24x256xbf16>
    %11 = vector.shape_cast %10 : vector<1x24x256xbf16> to vector<24x256xbf16>
    %c1_14 = arith.constant 1 : index
    %c0_15 = arith.constant 0 : index
    %c0_16 = arith.constant 0 : index
    %12 = vector.load %arg2[%c1_14, %c0_15, %c0_16] : memref<9x256x256xbf16, #tpu.memory_space<vmem>>, vector<1x256x256xbf16>
    %13 = vector.shape_cast %12 : vector<1x256x256xbf16> to vector<256x256xbf16>
    %c0_17 = arith.constant 0 : index
    %c0_18 = arith.constant 0 : index
    %14 = vector.load %arg6[%c0_17, %c0_18] : memref<24x256xf32, #tpu.memory_space<vmem>>, vector<24x256xf32>
    %cst_19 = arith.constant dense<0.000000e+00> : vector<24x256xf32>
    %15 = tpu.matmul %11, %13, %cst_19 {dimension_numbers = #tpu.dot_dimension_numbers<[1], [0], [0], [1], [0, 0, 1, 1], [], []>} : vector<24x256xbf16>, vector<256x256xbf16>, vector<24x256xf32> -> vector<24x256xf32>
    %16 = arith.addf %14, %15 : vector<24x256xf32>
    %c0_20 = arith.constant 0 : index
    %c0_21 = arith.constant 0 : index
    %17 = vector.load %arg6[%c0_20, %c0_21] : memref<24x256xf32, #tpu.memory_space<vmem>>, vector<24x256xf32>
    tpu.vector_store %arg6[%c0_20, %c0_21], %16 {strides = array<i32>} : memref<24x256xf32, #tpu.memory_space<vmem>>, vector<24x256xf32>,
    %c0_22 = arith.constant 0 : index
    %c2 = arith.constant 2 : index
    %c0_23 = arith.constant 0 : index
    %18 = vector.load %arg1[%c0_22, %c2, %c0_23] : memref<1x44x256xbf16, #tpu.memory_space<vmem>>, vector<1x24x256xbf16>
    %19 = vector.shape_cast %18 : vector<1x24x256xbf16> to vector<24x256xbf16>
    %c2_24 = arith.constant 2 : index
    %c0_25 = arith.constant 0 : index
    %c0_26 = arith.constant 0 : index
    %20 = vector.load %arg2[%c2_24, %c0_25, %c0_26] : memref<9x256x256xbf16, #tpu.memory_space<vmem>>, vector<1x256x256xbf16>
    %21 = vector.shape_cast %20 : vector<1x256x256xbf16> to vector<256x256xbf16>
    %c0_27 = arith.constant 0 : index
    %c0_28 = arith.constant 0 : index
    %22 = vector.load %arg6[%c0_27, %c0_28] : memref<24x256xf32, #tpu.memory_space<vmem>>, vector<24x256xf32>
    %cst_29 = arith.constant dense<0.000000e+00> : vector<24x256xf32>
    %23 = tpu.matmul %19, %21, %cst_29 {dimension_numbers = #tpu.dot_dimension_numbers<[1], [0], [0], [1], [0, 0, 1, 1], [], []>} : vector<24x256xbf16>, vector<256x256xbf16>, vector<24x256xf32> -> vector<24x256xf32>
    %24 = arith.addf %22, %23 : vector<24x256xf32>
    %c0_30 = arith.constant 0 : index
    %c0_31 = arith.constant 0 : index
    %25 = vector.load %arg6[%c0_30, %c0_31] : memref<24x256xf32, #tpu.memory_space<vmem>>, vector<24x256xf32>
    tpu.vector_store %arg6[%c0_30, %c0_31], %24 {strides = array<i32>} : memref<24x256xf32, #tpu.memory_space<vmem>>, vector<24x256xf32>,
    %c0_32 = arith.constant 0 : index
    %c6 = arith.constant 6 : index
    %c0_33 = arith.constant 0 : index
    %26 = vector.load %arg1[%c0_32, %c6, %c0_33] : memref<1x44x256xbf16, #tpu.memory_space<vmem>>, vector<1x24x256xbf16>
    %27 = vector.shape_cast %26 : vector<1x24x256xbf16> to vector<24x256xbf16>
    %c3 = arith.constant 3 : index
    %c0_34 = arith.constant 0 : index
    %c0_35 = arith.constant 0 : index
    %28 = vector.load %arg2[%c3, %c0_34, %c0_35] : memref<9x256x256xbf16, #tpu.memory_space<vmem>>, vector<1x256x256xbf16>
    %29 = vector.shape_cast %28 : vector<1x256x256xbf16> to vector<256x256xbf16>
    %c0_36 = arith.constant 0 : index
    %c0_37 = arith.constant 0 : index
    %30 = vector.load %arg6[%c0_36, %c0_37] : memref<24x256xf32, #tpu.memory_space<vmem>>, vector<24x256xf32>
    %cst_38 = arith.constant dense<0.000000e+00> : vector<24x256xf32>
    %31 = tpu.matmul %27, %29, %cst_38 {dimension_numbers = #tpu.dot_dimension_numbers<[1], [0], [0], [1], [0, 0, 1, 1], [], []>} : vector<24x256xbf16>, vector<256x256xbf16>, vector<24x256xf32> -> vector<24x256xf32>
    %32 = arith.addf %30, %31 : vector<24x256xf32>
    %c0_39 = arith.constant 0 : index
    %c0_40 = arith.constant 0 : index
    %33 = vector.load %arg6[%c0_39, %c0_40] : memref<24x256xf32, #tpu.memory_space<vmem>>, vector<24x256xf32>
    tpu.vector_store %arg6[%c0_39, %c0_40], %32 {strides = array<i32>} : memref<24x256xf32, #tpu.memory_space<vmem>>, vector<24x256xf32>,
    %c0_41 = arith.constant 0 : index
    %c7 = arith.constant 7 : index
    %c0_42 = arith.constant 0 : index
    %34 = vector.load %arg1[%c0_41, %c7, %c0_42] : memref<1x44x256xbf16, #tpu.memory_space<vmem>>, vector<1x24x256xbf16>
    %35 = vector.shape_cast %34 : vector<1x24x256xbf16> to vector<24x256xbf16>
    %c4 = arith.constant 4 : index
    %c0_43 = arith.constant 0 : index
    %c0_44 = arith.constant 0 : index
    %36 = vector.load %arg2[%c4, %c0_43, %c0_44] : memref<9x256x256xbf16, #tpu.memory_space<vmem>>, vector<1x256x256xbf16>
    %37 = vector.shape_cast %36 : vector<1x256x256xbf16> to vector<256x256xbf16>
    %c0_45 = arith.constant 0 : index
    %c0_46 = arith.constant 0 : index
    %38 = vector.load %arg6[%c0_45, %c0_46] : memref<24x256xf32, #tpu.memory_space<vmem>>, vector<24x256xf32>
    %cst_47 = arith.constant dense<0.000000e+00> : vector<24x256xf32>
    %39 = tpu.matmul %35, %37, %cst_47 {dimension_numbers = #tpu.dot_dimension_numbers<[1], [0], [0], [1], [0, 0, 1, 1], [], []>} : vector<24x256xbf16>, vector<256x256xbf16>, vector<24x256xf32> -> vector<24x256xf32>
    %40 = arith.addf %38, %39 : vector<24x256xf32>
    %c0_48 = arith.constant 0 : index
    %c0_49 = arith.constant 0 : index
    %41 = vector.load %arg6[%c0_48, %c0_49] : memref<24x256xf32, #tpu.memory_space<vmem>>, vector<24x256xf32>
    tpu.vector_store %arg6[%c0_48, %c0_49], %40 {strides = array<i32>} : memref<24x256xf32, #tpu.memory_space<vmem>>, vector<24x256xf32>,
    %c0_50 = arith.constant 0 : index
    %c8 = arith.constant 8 : index
    %c0_51 = arith.constant 0 : index
    %42 = vector.load %arg1[%c0_50, %c8, %c0_51] : memref<1x44x256xbf16, #tpu.memory_space<vmem>>, vector<1x24x256xbf16>
    %43 = vector.shape_cast %42 : vector<1x24x256xbf16> to vector<24x256xbf16>
    %c5 = arith.constant 5 : index
    %c0_52 = arith.constant 0 : index
    %c0_53 = arith.constant 0 : index
    %44 = vector.load %arg2[%c5, %c0_52, %c0_53] : memref<9x256x256xbf16, #tpu.memory_space<vmem>>, vector<1x256x256xbf16>
    %45 = vector.shape_cast %44 : vector<1x256x256xbf16> to vector<256x256xbf16>
    %c0_54 = arith.constant 0 : index
    %c0_55 = arith.constant 0 : index
    %46 = vector.load %arg6[%c0_54, %c0_55] : memref<24x256xf32, #tpu.memory_space<vmem>>, vector<24x256xf32>
    %cst_56 = arith.constant dense<0.000000e+00> : vector<24x256xf32>
    %47 = tpu.matmul %43, %45, %cst_56 {dimension_numbers = #tpu.dot_dimension_numbers<[1], [0], [0], [1], [0, 0, 1, 1], [], []>} : vector<24x256xbf16>, vector<256x256xbf16>, vector<24x256xf32> -> vector<24x256xf32>
    %48 = arith.addf %46, %47 : vector<24x256xf32>
    %c0_57 = arith.constant 0 : index
    %c0_58 = arith.constant 0 : index
    %49 = vector.load %arg6[%c0_57, %c0_58] : memref<24x256xf32, #tpu.memory_space<vmem>>, vector<24x256xf32>
    tpu.vector_store %arg6[%c0_57, %c0_58], %48 {strides = array<i32>} : memref<24x256xf32, #tpu.memory_space<vmem>>, vector<24x256xf32>,
    %c0_59 = arith.constant 0 : index
    %c12 = arith.constant 12 : index
    %c0_60 = arith.constant 0 : index
    %50 = vector.load %arg1[%c0_59, %c12, %c0_60] : memref<1x44x256xbf16, #tpu.memory_space<vmem>>, vector<1x24x256xbf16>
    %51 = vector.shape_cast %50 : vector<1x24x256xbf16> to vector<24x256xbf16>
    %c6_61 = arith.constant 6 : index
    %c0_62 = arith.constant 0 : index
    %c0_63 = arith.constant 0 : index
    %52 = vector.load %arg2[%c6_61, %c0_62, %c0_63] : memref<9x256x256xbf16, #tpu.memory_space<vmem>>, vector<1x256x256xbf16>
    %53 = vector.shape_cast %52 : vector<1x256x256xbf16> to vector<256x256xbf16>
    %c0_64 = arith.constant 0 : index
    %c0_65 = arith.constant 0 : index
    %54 = vector.load %arg6[%c0_64, %c0_65] : memref<24x256xf32, #tpu.memory_space<vmem>>, vector<24x256xf32>
    %cst_66 = arith.constant dense<0.000000e+00> : vector<24x256xf32>
    %55 = tpu.matmul %51, %53, %cst_66 {dimension_numbers = #tpu.dot_dimension_numbers<[1], [0], [0], [1], [0, 0, 1, 1], [], []>} : vector<24x256xbf16>, vector<256x256xbf16>, vector<24x256xf32> -> vector<24x256xf32>
    %56 = arith.addf %54, %55 : vector<24x256xf32>
    %c0_67 = arith.constant 0 : index
    %c0_68 = arith.constant 0 : index
    %57 = vector.load %arg6[%c0_67, %c0_68] : memref<24x256xf32, #tpu.memory_space<vmem>>, vector<24x256xf32>
    tpu.vector_store %arg6[%c0_67, %c0_68], %56 {strides = array<i32>} : memref<24x256xf32, #tpu.memory_space<vmem>>, vector<24x256xf32>,
    %c0_69 = arith.constant 0 : index
    %c13 = arith.constant 13 : index
    %c0_70 = arith.constant 0 : index
    %58 = vector.load %arg1[%c0_69, %c13, %c0_70] : memref<1x44x256xbf16, #tpu.memory_space<vmem>>, vector<1x24x256xbf16>
    %59 = vector.shape_cast %58 : vector<1x24x256xbf16> to vector<24x256xbf16>
    %c7_71 = arith.constant 7 : index
    %c0_72 = arith.constant 0 : index
    %c0_73 = arith.constant 0 : index
    %60 = vector.load %arg2[%c7_71, %c0_72, %c0_73] : memref<9x256x256xbf16, #tpu.memory_space<vmem>>, vector<1x256x256xbf16>
    %61 = vector.shape_cast %60 : vector<1x256x256xbf16> to vector<256x256xbf16>
    %c0_74 = arith.constant 0 : index
    %c0_75 = arith.constant 0 : index
    %62 = vector.load %arg6[%c0_74, %c0_75] : memref<24x256xf32, #tpu.memory_space<vmem>>, vector<24x256xf32>
    %cst_76 = arith.constant dense<0.000000e+00> : vector<24x256xf32>
    %63 = tpu.matmul %59, %61, %cst_76 {dimension_numbers = #tpu.dot_dimension_numbers<[1], [0], [0], [1], [0, 0, 1, 1], [], []>} : vector<24x256xbf16>, vector<256x256xbf16>, vector<24x256xf32> -> vector<24x256xf32>
    %64 = arith.addf %62, %63 : vector<24x256xf32>
    %c0_77 = arith.constant 0 : index
    %c0_78 = arith.constant 0 : index
    %65 = vector.load %arg6[%c0_77, %c0_78] : memref<24x256xf32, #tpu.memory_space<vmem>>, vector<24x256xf32>
    tpu.vector_store %arg6[%c0_77, %c0_78], %64 {strides = array<i32>} : memref<24x256xf32, #tpu.memory_space<vmem>>, vector<24x256xf32>,
    %c0_79 = arith.constant 0 : index
    %c14 = arith.constant 14 : index
    %c0_80 = arith.constant 0 : index
    %66 = vector.load %arg1[%c0_79, %c14, %c0_80] : memref<1x44x256xbf16, #tpu.memory_space<vmem>>, vector<1x24x256xbf16>
    %67 = vector.shape_cast %66 : vector<1x24x256xbf16> to vector<24x256xbf16>
    %c8_81 = arith.constant 8 : index
    %c0_82 = arith.constant 0 : index
    %c0_83 = arith.constant 0 : index
    %68 = vector.load %arg2[%c8_81, %c0_82, %c0_83] : memref<9x256x256xbf16, #tpu.memory_space<vmem>>, vector<1x256x256xbf16>
    %69 = vector.shape_cast %68 : vector<1x256x256xbf16> to vector<256x256xbf16>
    %c0_84 = arith.constant 0 : index
    %c0_85 = arith.constant 0 : index
    %70 = vector.load %arg6[%c0_84, %c0_85] : memref<24x256xf32, #tpu.memory_space<vmem>>, vector<24x256xf32>
    %cst_86 = arith.constant dense<0.000000e+00> : vector<24x256xf32>
    %71 = tpu.matmul %67, %69, %cst_86 {dimension_numbers = #tpu.dot_dimension_numbers<[1], [0], [0], [1], [0, 0, 1, 1], [], []>} : vector<24x256xbf16>, vector<256x256xbf16>, vector<24x256xf32> -> vector<24x256xf32>
    %72 = arith.addf %70, %71 : vector<24x256xf32>
    %c0_87 = arith.constant 0 : index
    %c0_88 = arith.constant 0 : index
    %73 = vector.load %arg6[%c0_87, %c0_88] : memref<24x256xf32, #tpu.memory_space<vmem>>, vector<24x256xf32>
    tpu.vector_store %arg6[%c0_87, %c0_88], %72 {strides = array<i32>} : memref<24x256xf32, #tpu.memory_space<vmem>>, vector<24x256xf32>,
    %c0_89 = arith.constant 0 : index
    %c0_90 = arith.constant 0 : index
    %74 = vector.load %arg6[%c0_89, %c0_90] : memref<24x256xf32, #tpu.memory_space<vmem>>, vector<24x256xf32>
    %c0_91 = arith.constant 0 : index
    %c0_92 = arith.constant 0 : index
    %75 = vector.load %arg3[%c0_91, %c0_92] : memref<1x256xf32, #tpu.memory_space<vmem>>, vector<1x256xf32>
    %76 = vector.broadcast %75 : vector<1x256xf32> to vector<24x256xf32>
    %77 = arith.addf %74, %76 : vector<24x256xf32>
    %cst_93 = arith.constant 0.000000e+00 : f32
    %78 = vector.broadcast %cst_93 : f32 to vector<24x256xf32>
    %79 = arith.maximumf %77, %78 : vector<24x256xf32>
    %c0_94 = arith.constant 0 : index
    %c0_95 = arith.constant 0 : index
    %80 = vector.load %arg4[%c0_94, %c0_95] : memref<24x1xf32, #tpu.memory_space<vmem>>, vector<24x1xf32>
    %81 = vector.broadcast %80 : vector<24x1xf32> to vector<24x256xf32>
    %82 = arith.mulf %79, %81 : vector<24x256xf32>
    %83 = arith.truncf %82 : vector<24x256xf32> to vector<24x256xbf16>
    %c0_96 = arith.constant 0 : index
    %c0_97 = arith.constant 0 : index
    %c0_98 = arith.constant 0 : index
    %84 = vector.load %arg5[%c0_96, %c0_97, %c0_98] : memref<1x24x256xbf16, #tpu.memory_space<vmem>>, vector<1x24x256xbf16>
    %85 = vector.shape_cast %84 : vector<1x24x256xbf16> to vector<24x256xbf16>
    %86 = vector.shape_cast %83 : vector<24x256xbf16> to vector<1x24x256xbf16>
    tpu.vector_store %arg5[%c0_96, %c0_97, %c0_98], %86 {strides = array<i32>} : memref<1x24x256xbf16, #tpu.memory_space<vmem>>, vector<1x24x256xbf16>,
    return
  }
  func.func @transform_0(%arg0: i32) -> (i32, i32, i32) {
    %c0_i32 = arith.constant 0 : i32
    %c0_i32_0 = arith.constant 0 : i32
    %c0_i32_1 = arith.constant 0 : i32
    return %arg0, %c0_i32, %c0_i32_0 : i32, i32, i32
  }
  func.func @transform_1(%arg0: i32) -> (i32, i32, i32) {
    %c0_i32 = arith.constant 0 : i32
    %c0_i32_0 = arith.constant 0 : i32
    %c0_i32_1 = arith.constant 0 : i32
    %c0_i32_2 = arith.constant 0 : i32
    return %c0_i32, %c0_i32_0, %c0_i32_1 : i32, i32, i32
  }
  func.func @transform_2(%arg0: i32) -> (i32, i32) {
    %c0_i32 = arith.constant 0 : i32
    %c0_i32_0 = arith.constant 0 : i32
    %c0_i32_1 = arith.constant 0 : i32
    return %c0_i32, %c0_i32_0 : i32, i32
  }
  func.func @transform_3(%arg0: i32) -> (i32, i32) {
    %c0_i32 = arith.constant 0 : i32
    %c0_i32_0 = arith.constant 0 : i32
    %c0_i32_1 = arith.constant 0 : i32
    return %c0_i32, %c0_i32_0 : i32, i32
  }
  func.func @transform_4(%arg0: i32) -> (i32, i32, i32) {
    %c0_i32 = arith.constant 0 : i32
    %c0_i32_0 = arith.constant 0 : i32
    %c0_i32_1 = arith.constant 0 : i32
    return %arg0, %c0_i32, %c0_i32_0 : i32, i32, i32
  }
}

module attributes {stable_mosaic.version = 11 : i64} {
  func.func @_flat_conv_kernel(%arg0: i32, %arg1: memref<1x24x256xbf16, #tpu.memory_space<vmem>>, %arg2: memref<9x256x512xbf16, #tpu.memory_space<vmem>>, %arg3: memref<1x512xf32, #tpu.memory_space<vmem>>, %arg4: memref<8x1xf32, #tpu.memory_space<vmem>>, %arg5: memref<1x8x512xbf16, #tpu.memory_space<vmem>>, %arg6: memref<8x512xf32, #tpu.memory_space<vmem>>) attributes {dimension_semantics = [#tpu.dimension_semantics<parallel>], iteration_bounds = array<i64: 2>, scalar_prefetch = 0 : i64, scratch_operands = 1 : i64, tpu.core_type = #tpu.core_type<tc>, window_params = [{transform_indices = @transform_0, window_bounds = array<i64: 1, 24, 256>}, {pipeline_mode = #tpu.pipeline_mode<synchronous>, transform_indices = @transform_1, window_bounds = array<i64: 9, 256, 512>}, {pipeline_mode = #tpu.pipeline_mode<synchronous>, transform_indices = @transform_2, window_bounds = array<i64: 1, 512>}, {pipeline_mode = #tpu.pipeline_mode<synchronous>, transform_indices = @transform_3, window_bounds = array<i64: 8, 1>}, {transform_indices = @transform_4, window_bounds = array<i64: 1, 8, 512>}]} {
    %cst = arith.constant 0.000000e+00 : f32
    %0 = vector.broadcast %cst : f32 to vector<8x512xf32>
    %c0 = arith.constant 0 : index
    %c0_0 = arith.constant 0 : index
    %1 = vector.load %arg6[%c0, %c0_0] : memref<8x512xf32, #tpu.memory_space<vmem>>, vector<8x512xf32>
    tpu.vector_store %arg6[%c0, %c0_0], %0 {strides = array<i32>} : memref<8x512xf32, #tpu.memory_space<vmem>>, vector<8x512xf32>,
    %c0_1 = arith.constant 0 : index
    %c0_2 = arith.constant 0 : index
    %c0_3 = arith.constant 0 : index
    %2 = vector.load %arg1[%c0_1, %c0_2, %c0_3] : memref<1x24x256xbf16, #tpu.memory_space<vmem>>, vector<1x8x256xbf16>
    %3 = vector.shape_cast %2 : vector<1x8x256xbf16> to vector<8x256xbf16>
    %c0_4 = arith.constant 0 : index
    %c0_5 = arith.constant 0 : index
    %c0_6 = arith.constant 0 : index
    %4 = vector.load %arg2[%c0_4, %c0_5, %c0_6] : memref<9x256x512xbf16, #tpu.memory_space<vmem>>, vector<1x256x512xbf16>
    %5 = vector.shape_cast %4 : vector<1x256x512xbf16> to vector<256x512xbf16>
    %c0_7 = arith.constant 0 : index
    %c0_8 = arith.constant 0 : index
    %6 = vector.load %arg6[%c0_7, %c0_8] : memref<8x512xf32, #tpu.memory_space<vmem>>, vector<8x512xf32>
    %cst_9 = arith.constant dense<0.000000e+00> : vector<8x512xf32>
    %7 = tpu.matmul %3, %5, %cst_9 {dimension_numbers = #tpu.dot_dimension_numbers<[1], [0], [0], [1], [0, 0, 1, 1], [], []>} : vector<8x256xbf16>, vector<256x512xbf16>, vector<8x512xf32> -> vector<8x512xf32>
    %8 = arith.addf %6, %7 : vector<8x512xf32>
    %c0_10 = arith.constant 0 : index
    %c0_11 = arith.constant 0 : index
    %9 = vector.load %arg6[%c0_10, %c0_11] : memref<8x512xf32, #tpu.memory_space<vmem>>, vector<8x512xf32>
    tpu.vector_store %arg6[%c0_10, %c0_11], %8 {strides = array<i32>} : memref<8x512xf32, #tpu.memory_space<vmem>>, vector<8x512xf32>,
    %c0_12 = arith.constant 0 : index
    %c1 = arith.constant 1 : index
    %c0_13 = arith.constant 0 : index
    %10 = vector.load %arg1[%c0_12, %c1, %c0_13] : memref<1x24x256xbf16, #tpu.memory_space<vmem>>, vector<1x8x256xbf16>
    %11 = vector.shape_cast %10 : vector<1x8x256xbf16> to vector<8x256xbf16>
    %c1_14 = arith.constant 1 : index
    %c0_15 = arith.constant 0 : index
    %c0_16 = arith.constant 0 : index
    %12 = vector.load %arg2[%c1_14, %c0_15, %c0_16] : memref<9x256x512xbf16, #tpu.memory_space<vmem>>, vector<1x256x512xbf16>
    %13 = vector.shape_cast %12 : vector<1x256x512xbf16> to vector<256x512xbf16>
    %c0_17 = arith.constant 0 : index
    %c0_18 = arith.constant 0 : index
    %14 = vector.load %arg6[%c0_17, %c0_18] : memref<8x512xf32, #tpu.memory_space<vmem>>, vector<8x512xf32>
    %cst_19 = arith.constant dense<0.000000e+00> : vector<8x512xf32>
    %15 = tpu.matmul %11, %13, %cst_19 {dimension_numbers = #tpu.dot_dimension_numbers<[1], [0], [0], [1], [0, 0, 1, 1], [], []>} : vector<8x256xbf16>, vector<256x512xbf16>, vector<8x512xf32> -> vector<8x512xf32>
    %16 = arith.addf %14, %15 : vector<8x512xf32>
    %c0_20 = arith.constant 0 : index
    %c0_21 = arith.constant 0 : index
    %17 = vector.load %arg6[%c0_20, %c0_21] : memref<8x512xf32, #tpu.memory_space<vmem>>, vector<8x512xf32>
    tpu.vector_store %arg6[%c0_20, %c0_21], %16 {strides = array<i32>} : memref<8x512xf32, #tpu.memory_space<vmem>>, vector<8x512xf32>,
    %c0_22 = arith.constant 0 : index
    %c2 = arith.constant 2 : index
    %c0_23 = arith.constant 0 : index
    %18 = vector.load %arg1[%c0_22, %c2, %c0_23] : memref<1x24x256xbf16, #tpu.memory_space<vmem>>, vector<1x8x256xbf16>
    %19 = vector.shape_cast %18 : vector<1x8x256xbf16> to vector<8x256xbf16>
    %c2_24 = arith.constant 2 : index
    %c0_25 = arith.constant 0 : index
    %c0_26 = arith.constant 0 : index
    %20 = vector.load %arg2[%c2_24, %c0_25, %c0_26] : memref<9x256x512xbf16, #tpu.memory_space<vmem>>, vector<1x256x512xbf16>
    %21 = vector.shape_cast %20 : vector<1x256x512xbf16> to vector<256x512xbf16>
    %c0_27 = arith.constant 0 : index
    %c0_28 = arith.constant 0 : index
    %22 = vector.load %arg6[%c0_27, %c0_28] : memref<8x512xf32, #tpu.memory_space<vmem>>, vector<8x512xf32>
    %cst_29 = arith.constant dense<0.000000e+00> : vector<8x512xf32>
    %23 = tpu.matmul %19, %21, %cst_29 {dimension_numbers = #tpu.dot_dimension_numbers<[1], [0], [0], [1], [0, 0, 1, 1], [], []>} : vector<8x256xbf16>, vector<256x512xbf16>, vector<8x512xf32> -> vector<8x512xf32>
    %24 = arith.addf %22, %23 : vector<8x512xf32>
    %c0_30 = arith.constant 0 : index
    %c0_31 = arith.constant 0 : index
    %25 = vector.load %arg6[%c0_30, %c0_31] : memref<8x512xf32, #tpu.memory_space<vmem>>, vector<8x512xf32>
    tpu.vector_store %arg6[%c0_30, %c0_31], %24 {strides = array<i32>} : memref<8x512xf32, #tpu.memory_space<vmem>>, vector<8x512xf32>,
    %c0_32 = arith.constant 0 : index
    %c4 = arith.constant 4 : index
    %c0_33 = arith.constant 0 : index
    %26 = vector.load %arg1[%c0_32, %c4, %c0_33] : memref<1x24x256xbf16, #tpu.memory_space<vmem>>, vector<1x8x256xbf16>
    %27 = vector.shape_cast %26 : vector<1x8x256xbf16> to vector<8x256xbf16>
    %c3 = arith.constant 3 : index
    %c0_34 = arith.constant 0 : index
    %c0_35 = arith.constant 0 : index
    %28 = vector.load %arg2[%c3, %c0_34, %c0_35] : memref<9x256x512xbf16, #tpu.memory_space<vmem>>, vector<1x256x512xbf16>
    %29 = vector.shape_cast %28 : vector<1x256x512xbf16> to vector<256x512xbf16>
    %c0_36 = arith.constant 0 : index
    %c0_37 = arith.constant 0 : index
    %30 = vector.load %arg6[%c0_36, %c0_37] : memref<8x512xf32, #tpu.memory_space<vmem>>, vector<8x512xf32>
    %cst_38 = arith.constant dense<0.000000e+00> : vector<8x512xf32>
    %31 = tpu.matmul %27, %29, %cst_38 {dimension_numbers = #tpu.dot_dimension_numbers<[1], [0], [0], [1], [0, 0, 1, 1], [], []>} : vector<8x256xbf16>, vector<256x512xbf16>, vector<8x512xf32> -> vector<8x512xf32>
    %32 = arith.addf %30, %31 : vector<8x512xf32>
    %c0_39 = arith.constant 0 : index
    %c0_40 = arith.constant 0 : index
    %33 = vector.load %arg6[%c0_39, %c0_40] : memref<8x512xf32, #tpu.memory_space<vmem>>, vector<8x512xf32>
    tpu.vector_store %arg6[%c0_39, %c0_40], %32 {strides = array<i32>} : memref<8x512xf32, #tpu.memory_space<vmem>>, vector<8x512xf32>,
    %c0_41 = arith.constant 0 : index
    %c5 = arith.constant 5 : index
    %c0_42 = arith.constant 0 : index
    %34 = vector.load %arg1[%c0_41, %c5, %c0_42] : memref<1x24x256xbf16, #tpu.memory_space<vmem>>, vector<1x8x256xbf16>
    %35 = vector.shape_cast %34 : vector<1x8x256xbf16> to vector<8x256xbf16>
    %c4_43 = arith.constant 4 : index
    %c0_44 = arith.constant 0 : index
    %c0_45 = arith.constant 0 : index
    %36 = vector.load %arg2[%c4_43, %c0_44, %c0_45] : memref<9x256x512xbf16, #tpu.memory_space<vmem>>, vector<1x256x512xbf16>
    %37 = vector.shape_cast %36 : vector<1x256x512xbf16> to vector<256x512xbf16>
    %c0_46 = arith.constant 0 : index
    %c0_47 = arith.constant 0 : index
    %38 = vector.load %arg6[%c0_46, %c0_47] : memref<8x512xf32, #tpu.memory_space<vmem>>, vector<8x512xf32>
    %cst_48 = arith.constant dense<0.000000e+00> : vector<8x512xf32>
    %39 = tpu.matmul %35, %37, %cst_48 {dimension_numbers = #tpu.dot_dimension_numbers<[1], [0], [0], [1], [0, 0, 1, 1], [], []>} : vector<8x256xbf16>, vector<256x512xbf16>, vector<8x512xf32> -> vector<8x512xf32>
    %40 = arith.addf %38, %39 : vector<8x512xf32>
    %c0_49 = arith.constant 0 : index
    %c0_50 = arith.constant 0 : index
    %41 = vector.load %arg6[%c0_49, %c0_50] : memref<8x512xf32, #tpu.memory_space<vmem>>, vector<8x512xf32>
    tpu.vector_store %arg6[%c0_49, %c0_50], %40 {strides = array<i32>} : memref<8x512xf32, #tpu.memory_space<vmem>>, vector<8x512xf32>,
    %c0_51 = arith.constant 0 : index
    %c6 = arith.constant 6 : index
    %c0_52 = arith.constant 0 : index
    %42 = vector.load %arg1[%c0_51, %c6, %c0_52] : memref<1x24x256xbf16, #tpu.memory_space<vmem>>, vector<1x8x256xbf16>
    %43 = vector.shape_cast %42 : vector<1x8x256xbf16> to vector<8x256xbf16>
    %c5_53 = arith.constant 5 : index
    %c0_54 = arith.constant 0 : index
    %c0_55 = arith.constant 0 : index
    %44 = vector.load %arg2[%c5_53, %c0_54, %c0_55] : memref<9x256x512xbf16, #tpu.memory_space<vmem>>, vector<1x256x512xbf16>
    %45 = vector.shape_cast %44 : vector<1x256x512xbf16> to vector<256x512xbf16>
    %c0_56 = arith.constant 0 : index
    %c0_57 = arith.constant 0 : index
    %46 = vector.load %arg6[%c0_56, %c0_57] : memref<8x512xf32, #tpu.memory_space<vmem>>, vector<8x512xf32>
    %cst_58 = arith.constant dense<0.000000e+00> : vector<8x512xf32>
    %47 = tpu.matmul %43, %45, %cst_58 {dimension_numbers = #tpu.dot_dimension_numbers<[1], [0], [0], [1], [0, 0, 1, 1], [], []>} : vector<8x256xbf16>, vector<256x512xbf16>, vector<8x512xf32> -> vector<8x512xf32>
    %48 = arith.addf %46, %47 : vector<8x512xf32>
    %c0_59 = arith.constant 0 : index
    %c0_60 = arith.constant 0 : index
    %49 = vector.load %arg6[%c0_59, %c0_60] : memref<8x512xf32, #tpu.memory_space<vmem>>, vector<8x512xf32>
    tpu.vector_store %arg6[%c0_59, %c0_60], %48 {strides = array<i32>} : memref<8x512xf32, #tpu.memory_space<vmem>>, vector<8x512xf32>,
    %c0_61 = arith.constant 0 : index
    %c8 = arith.constant 8 : index
    %c0_62 = arith.constant 0 : index
    %50 = vector.load %arg1[%c0_61, %c8, %c0_62] : memref<1x24x256xbf16, #tpu.memory_space<vmem>>, vector<1x8x256xbf16>
    %51 = vector.shape_cast %50 : vector<1x8x256xbf16> to vector<8x256xbf16>
    %c6_63 = arith.constant 6 : index
    %c0_64 = arith.constant 0 : index
    %c0_65 = arith.constant 0 : index
    %52 = vector.load %arg2[%c6_63, %c0_64, %c0_65] : memref<9x256x512xbf16, #tpu.memory_space<vmem>>, vector<1x256x512xbf16>
    %53 = vector.shape_cast %52 : vector<1x256x512xbf16> to vector<256x512xbf16>
    %c0_66 = arith.constant 0 : index
    %c0_67 = arith.constant 0 : index
    %54 = vector.load %arg6[%c0_66, %c0_67] : memref<8x512xf32, #tpu.memory_space<vmem>>, vector<8x512xf32>
    %cst_68 = arith.constant dense<0.000000e+00> : vector<8x512xf32>
    %55 = tpu.matmul %51, %53, %cst_68 {dimension_numbers = #tpu.dot_dimension_numbers<[1], [0], [0], [1], [0, 0, 1, 1], [], []>} : vector<8x256xbf16>, vector<256x512xbf16>, vector<8x512xf32> -> vector<8x512xf32>
    %56 = arith.addf %54, %55 : vector<8x512xf32>
    %c0_69 = arith.constant 0 : index
    %c0_70 = arith.constant 0 : index
    %57 = vector.load %arg6[%c0_69, %c0_70] : memref<8x512xf32, #tpu.memory_space<vmem>>, vector<8x512xf32>
    tpu.vector_store %arg6[%c0_69, %c0_70], %56 {strides = array<i32>} : memref<8x512xf32, #tpu.memory_space<vmem>>, vector<8x512xf32>,
    %c0_71 = arith.constant 0 : index
    %c9 = arith.constant 9 : index
    %c0_72 = arith.constant 0 : index
    %58 = vector.load %arg1[%c0_71, %c9, %c0_72] : memref<1x24x256xbf16, #tpu.memory_space<vmem>>, vector<1x8x256xbf16>
    %59 = vector.shape_cast %58 : vector<1x8x256xbf16> to vector<8x256xbf16>
    %c7 = arith.constant 7 : index
    %c0_73 = arith.constant 0 : index
    %c0_74 = arith.constant 0 : index
    %60 = vector.load %arg2[%c7, %c0_73, %c0_74] : memref<9x256x512xbf16, #tpu.memory_space<vmem>>, vector<1x256x512xbf16>
    %61 = vector.shape_cast %60 : vector<1x256x512xbf16> to vector<256x512xbf16>
    %c0_75 = arith.constant 0 : index
    %c0_76 = arith.constant 0 : index
    %62 = vector.load %arg6[%c0_75, %c0_76] : memref<8x512xf32, #tpu.memory_space<vmem>>, vector<8x512xf32>
    %cst_77 = arith.constant dense<0.000000e+00> : vector<8x512xf32>
    %63 = tpu.matmul %59, %61, %cst_77 {dimension_numbers = #tpu.dot_dimension_numbers<[1], [0], [0], [1], [0, 0, 1, 1], [], []>} : vector<8x256xbf16>, vector<256x512xbf16>, vector<8x512xf32> -> vector<8x512xf32>
    %64 = arith.addf %62, %63 : vector<8x512xf32>
    %c0_78 = arith.constant 0 : index
    %c0_79 = arith.constant 0 : index
    %65 = vector.load %arg6[%c0_78, %c0_79] : memref<8x512xf32, #tpu.memory_space<vmem>>, vector<8x512xf32>
    tpu.vector_store %arg6[%c0_78, %c0_79], %64 {strides = array<i32>} : memref<8x512xf32, #tpu.memory_space<vmem>>, vector<8x512xf32>,
    %c0_80 = arith.constant 0 : index
    %c10 = arith.constant 10 : index
    %c0_81 = arith.constant 0 : index
    %66 = vector.load %arg1[%c0_80, %c10, %c0_81] : memref<1x24x256xbf16, #tpu.memory_space<vmem>>, vector<1x8x256xbf16>
    %67 = vector.shape_cast %66 : vector<1x8x256xbf16> to vector<8x256xbf16>
    %c8_82 = arith.constant 8 : index
    %c0_83 = arith.constant 0 : index
    %c0_84 = arith.constant 0 : index
    %68 = vector.load %arg2[%c8_82, %c0_83, %c0_84] : memref<9x256x512xbf16, #tpu.memory_space<vmem>>, vector<1x256x512xbf16>
    %69 = vector.shape_cast %68 : vector<1x256x512xbf16> to vector<256x512xbf16>
    %c0_85 = arith.constant 0 : index
    %c0_86 = arith.constant 0 : index
    %70 = vector.load %arg6[%c0_85, %c0_86] : memref<8x512xf32, #tpu.memory_space<vmem>>, vector<8x512xf32>
    %cst_87 = arith.constant dense<0.000000e+00> : vector<8x512xf32>
    %71 = tpu.matmul %67, %69, %cst_87 {dimension_numbers = #tpu.dot_dimension_numbers<[1], [0], [0], [1], [0, 0, 1, 1], [], []>} : vector<8x256xbf16>, vector<256x512xbf16>, vector<8x512xf32> -> vector<8x512xf32>
    %72 = arith.addf %70, %71 : vector<8x512xf32>
    %c0_88 = arith.constant 0 : index
    %c0_89 = arith.constant 0 : index
    %73 = vector.load %arg6[%c0_88, %c0_89] : memref<8x512xf32, #tpu.memory_space<vmem>>, vector<8x512xf32>
    tpu.vector_store %arg6[%c0_88, %c0_89], %72 {strides = array<i32>} : memref<8x512xf32, #tpu.memory_space<vmem>>, vector<8x512xf32>,
    %c0_90 = arith.constant 0 : index
    %c0_91 = arith.constant 0 : index
    %74 = vector.load %arg6[%c0_90, %c0_91] : memref<8x512xf32, #tpu.memory_space<vmem>>, vector<8x512xf32>
    %c0_92 = arith.constant 0 : index
    %c0_93 = arith.constant 0 : index
    %75 = vector.load %arg3[%c0_92, %c0_93] : memref<1x512xf32, #tpu.memory_space<vmem>>, vector<1x512xf32>
    %76 = vector.broadcast %75 : vector<1x512xf32> to vector<8x512xf32>
    %77 = arith.addf %74, %76 : vector<8x512xf32>
    %cst_94 = arith.constant 0.000000e+00 : f32
    %78 = vector.broadcast %cst_94 : f32 to vector<8x512xf32>
    %79 = arith.maximumf %77, %78 : vector<8x512xf32>
    %c0_95 = arith.constant 0 : index
    %c0_96 = arith.constant 0 : index
    %80 = vector.load %arg4[%c0_95, %c0_96] : memref<8x1xf32, #tpu.memory_space<vmem>>, vector<8x1xf32>
    %81 = vector.broadcast %80 : vector<8x1xf32> to vector<8x512xf32>
    %82 = arith.mulf %79, %81 : vector<8x512xf32>
    %83 = arith.truncf %82 : vector<8x512xf32> to vector<8x512xbf16>
    %c0_97 = arith.constant 0 : index
    %c0_98 = arith.constant 0 : index
    %c0_99 = arith.constant 0 : index
    %84 = vector.load %arg5[%c0_97, %c0_98, %c0_99] : memref<1x8x512xbf16, #tpu.memory_space<vmem>>, vector<1x8x512xbf16>
    %85 = vector.shape_cast %84 : vector<1x8x512xbf16> to vector<8x512xbf16>
    %86 = vector.shape_cast %83 : vector<8x512xbf16> to vector<1x8x512xbf16>
    tpu.vector_store %arg5[%c0_97, %c0_98, %c0_99], %86 {strides = array<i32>} : memref<1x8x512xbf16, #tpu.memory_space<vmem>>, vector<1x8x512xbf16>,
    return
  }
  func.func @transform_0(%arg0: i32) -> (i32, i32, i32) {
    %c0_i32 = arith.constant 0 : i32
    %c0_i32_0 = arith.constant 0 : i32
    %c0_i32_1 = arith.constant 0 : i32
    return %arg0, %c0_i32, %c0_i32_0 : i32, i32, i32
  }
  func.func @transform_1(%arg0: i32) -> (i32, i32, i32) {
    %c0_i32 = arith.constant 0 : i32
    %c0_i32_0 = arith.constant 0 : i32
    %c0_i32_1 = arith.constant 0 : i32
    %c0_i32_2 = arith.constant 0 : i32
    return %c0_i32, %c0_i32_0, %c0_i32_1 : i32, i32, i32
  }
  func.func @transform_2(%arg0: i32) -> (i32, i32) {
    %c0_i32 = arith.constant 0 : i32
    %c0_i32_0 = arith.constant 0 : i32
    %c0_i32_1 = arith.constant 0 : i32
    return %c0_i32, %c0_i32_0 : i32, i32
  }
  func.func @transform_3(%arg0: i32) -> (i32, i32) {
    %c0_i32 = arith.constant 0 : i32
    %c0_i32_0 = arith.constant 0 : i32
    %c0_i32_1 = arith.constant 0 : i32
    return %c0_i32, %c0_i32_0 : i32, i32
  }
  func.func @transform_4(%arg0: i32) -> (i32, i32, i32) {
    %c0_i32 = arith.constant 0 : i32
    %c0_i32_0 = arith.constant 0 : i32
    %c0_i32_1 = arith.constant 0 : i32
    return %arg0, %c0_i32, %c0_i32_0 : i32, i32, i32
  }
}

module attributes {stable_mosaic.version = 11 : i64} {
  func.func @_flat_conv_kernel(%arg0: i32, %arg1: memref<1x24x512xbf16, #tpu.memory_space<vmem>>, %arg2: memref<9x512x512xbf16, #tpu.memory_space<vmem>>, %arg3: memref<1x512xf32, #tpu.memory_space<vmem>>, %arg4: memref<8x1xf32, #tpu.memory_space<vmem>>, %arg5: memref<1x1x512xf32, #tpu.memory_space<vmem>>, %arg6: memref<8x512xf32, #tpu.memory_space<vmem>>) attributes {dimension_semantics = [#tpu.dimension_semantics<parallel>], iteration_bounds = array<i64: 2>, scalar_prefetch = 0 : i64, scratch_operands = 1 : i64, tpu.core_type = #tpu.core_type<tc>, window_params = [{transform_indices = @transform_0, window_bounds = array<i64: 1, 24, 512>}, {pipeline_mode = #tpu.pipeline_mode<synchronous>, transform_indices = @transform_1, window_bounds = array<i64: 9, 512, 512>}, {pipeline_mode = #tpu.pipeline_mode<synchronous>, transform_indices = @transform_2, window_bounds = array<i64: 1, 512>}, {pipeline_mode = #tpu.pipeline_mode<synchronous>, transform_indices = @transform_3, window_bounds = array<i64: 8, 1>}, {transform_indices = @transform_4, window_bounds = array<i64: 1, 1, 512>}]} {
    %cst = arith.constant 0.000000e+00 : f32
    %0 = vector.broadcast %cst : f32 to vector<8x512xf32>
    %c0 = arith.constant 0 : index
    %c0_0 = arith.constant 0 : index
    %1 = vector.load %arg6[%c0, %c0_0] : memref<8x512xf32, #tpu.memory_space<vmem>>, vector<8x512xf32>
    tpu.vector_store %arg6[%c0, %c0_0], %0 {strides = array<i32>} : memref<8x512xf32, #tpu.memory_space<vmem>>, vector<8x512xf32>,
    %c0_1 = arith.constant 0 : index
    %c0_2 = arith.constant 0 : index
    %c0_3 = arith.constant 0 : index
    %2 = vector.load %arg1[%c0_1, %c0_2, %c0_3] : memref<1x24x512xbf16, #tpu.memory_space<vmem>>, vector<1x8x512xbf16>
    %3 = vector.shape_cast %2 : vector<1x8x512xbf16> to vector<8x512xbf16>
    %c0_4 = arith.constant 0 : index
    %c0_5 = arith.constant 0 : index
    %c0_6 = arith.constant 0 : index
    %4 = vector.load %arg2[%c0_4, %c0_5, %c0_6] : memref<9x512x512xbf16, #tpu.memory_space<vmem>>, vector<1x512x512xbf16>
    %5 = vector.shape_cast %4 : vector<1x512x512xbf16> to vector<512x512xbf16>
    %c0_7 = arith.constant 0 : index
    %c0_8 = arith.constant 0 : index
    %6 = vector.load %arg6[%c0_7, %c0_8] : memref<8x512xf32, #tpu.memory_space<vmem>>, vector<8x512xf32>
    %cst_9 = arith.constant dense<0.000000e+00> : vector<8x512xf32>
    %7 = tpu.matmul %3, %5, %cst_9 {dimension_numbers = #tpu.dot_dimension_numbers<[1], [0], [0], [1], [0, 0, 1, 1], [], []>} : vector<8x512xbf16>, vector<512x512xbf16>, vector<8x512xf32> -> vector<8x512xf32>
    %8 = arith.addf %6, %7 : vector<8x512xf32>
    %c0_10 = arith.constant 0 : index
    %c0_11 = arith.constant 0 : index
    %9 = vector.load %arg6[%c0_10, %c0_11] : memref<8x512xf32, #tpu.memory_space<vmem>>, vector<8x512xf32>
    tpu.vector_store %arg6[%c0_10, %c0_11], %8 {strides = array<i32>} : memref<8x512xf32, #tpu.memory_space<vmem>>, vector<8x512xf32>,
    %c0_12 = arith.constant 0 : index
    %c1 = arith.constant 1 : index
    %c0_13 = arith.constant 0 : index
    %10 = vector.load %arg1[%c0_12, %c1, %c0_13] : memref<1x24x512xbf16, #tpu.memory_space<vmem>>, vector<1x8x512xbf16>
    %11 = vector.shape_cast %10 : vector<1x8x512xbf16> to vector<8x512xbf16>
    %c1_14 = arith.constant 1 : index
    %c0_15 = arith.constant 0 : index
    %c0_16 = arith.constant 0 : index
    %12 = vector.load %arg2[%c1_14, %c0_15, %c0_16] : memref<9x512x512xbf16, #tpu.memory_space<vmem>>, vector<1x512x512xbf16>
    %13 = vector.shape_cast %12 : vector<1x512x512xbf16> to vector<512x512xbf16>
    %c0_17 = arith.constant 0 : index
    %c0_18 = arith.constant 0 : index
    %14 = vector.load %arg6[%c0_17, %c0_18] : memref<8x512xf32, #tpu.memory_space<vmem>>, vector<8x512xf32>
    %cst_19 = arith.constant dense<0.000000e+00> : vector<8x512xf32>
    %15 = tpu.matmul %11, %13, %cst_19 {dimension_numbers = #tpu.dot_dimension_numbers<[1], [0], [0], [1], [0, 0, 1, 1], [], []>} : vector<8x512xbf16>, vector<512x512xbf16>, vector<8x512xf32> -> vector<8x512xf32>
    %16 = arith.addf %14, %15 : vector<8x512xf32>
    %c0_20 = arith.constant 0 : index
    %c0_21 = arith.constant 0 : index
    %17 = vector.load %arg6[%c0_20, %c0_21] : memref<8x512xf32, #tpu.memory_space<vmem>>, vector<8x512xf32>
    tpu.vector_store %arg6[%c0_20, %c0_21], %16 {strides = array<i32>} : memref<8x512xf32, #tpu.memory_space<vmem>>, vector<8x512xf32>,
    %c0_22 = arith.constant 0 : index
    %c2 = arith.constant 2 : index
    %c0_23 = arith.constant 0 : index
    %18 = vector.load %arg1[%c0_22, %c2, %c0_23] : memref<1x24x512xbf16, #tpu.memory_space<vmem>>, vector<1x8x512xbf16>
    %19 = vector.shape_cast %18 : vector<1x8x512xbf16> to vector<8x512xbf16>
    %c2_24 = arith.constant 2 : index
    %c0_25 = arith.constant 0 : index
    %c0_26 = arith.constant 0 : index
    %20 = vector.load %arg2[%c2_24, %c0_25, %c0_26] : memref<9x512x512xbf16, #tpu.memory_space<vmem>>, vector<1x512x512xbf16>
    %21 = vector.shape_cast %20 : vector<1x512x512xbf16> to vector<512x512xbf16>
    %c0_27 = arith.constant 0 : index
    %c0_28 = arith.constant 0 : index
    %22 = vector.load %arg6[%c0_27, %c0_28] : memref<8x512xf32, #tpu.memory_space<vmem>>, vector<8x512xf32>
    %cst_29 = arith.constant dense<0.000000e+00> : vector<8x512xf32>
    %23 = tpu.matmul %19, %21, %cst_29 {dimension_numbers = #tpu.dot_dimension_numbers<[1], [0], [0], [1], [0, 0, 1, 1], [], []>} : vector<8x512xbf16>, vector<512x512xbf16>, vector<8x512xf32> -> vector<8x512xf32>
    %24 = arith.addf %22, %23 : vector<8x512xf32>
    %c0_30 = arith.constant 0 : index
    %c0_31 = arith.constant 0 : index
    %25 = vector.load %arg6[%c0_30, %c0_31] : memref<8x512xf32, #tpu.memory_space<vmem>>, vector<8x512xf32>
    tpu.vector_store %arg6[%c0_30, %c0_31], %24 {strides = array<i32>} : memref<8x512xf32, #tpu.memory_space<vmem>>, vector<8x512xf32>,
    %c0_32 = arith.constant 0 : index
    %c4 = arith.constant 4 : index
    %c0_33 = arith.constant 0 : index
    %26 = vector.load %arg1[%c0_32, %c4, %c0_33] : memref<1x24x512xbf16, #tpu.memory_space<vmem>>, vector<1x8x512xbf16>
    %27 = vector.shape_cast %26 : vector<1x8x512xbf16> to vector<8x512xbf16>
    %c3 = arith.constant 3 : index
    %c0_34 = arith.constant 0 : index
    %c0_35 = arith.constant 0 : index
    %28 = vector.load %arg2[%c3, %c0_34, %c0_35] : memref<9x512x512xbf16, #tpu.memory_space<vmem>>, vector<1x512x512xbf16>
    %29 = vector.shape_cast %28 : vector<1x512x512xbf16> to vector<512x512xbf16>
    %c0_36 = arith.constant 0 : index
    %c0_37 = arith.constant 0 : index
    %30 = vector.load %arg6[%c0_36, %c0_37] : memref<8x512xf32, #tpu.memory_space<vmem>>, vector<8x512xf32>
    %cst_38 = arith.constant dense<0.000000e+00> : vector<8x512xf32>
    %31 = tpu.matmul %27, %29, %cst_38 {dimension_numbers = #tpu.dot_dimension_numbers<[1], [0], [0], [1], [0, 0, 1, 1], [], []>} : vector<8x512xbf16>, vector<512x512xbf16>, vector<8x512xf32> -> vector<8x512xf32>
    %32 = arith.addf %30, %31 : vector<8x512xf32>
    %c0_39 = arith.constant 0 : index
    %c0_40 = arith.constant 0 : index
    %33 = vector.load %arg6[%c0_39, %c0_40] : memref<8x512xf32, #tpu.memory_space<vmem>>, vector<8x512xf32>
    tpu.vector_store %arg6[%c0_39, %c0_40], %32 {strides = array<i32>} : memref<8x512xf32, #tpu.memory_space<vmem>>, vector<8x512xf32>,
    %c0_41 = arith.constant 0 : index
    %c5 = arith.constant 5 : index
    %c0_42 = arith.constant 0 : index
    %34 = vector.load %arg1[%c0_41, %c5, %c0_42] : memref<1x24x512xbf16, #tpu.memory_space<vmem>>, vector<1x8x512xbf16>
    %35 = vector.shape_cast %34 : vector<1x8x512xbf16> to vector<8x512xbf16>
    %c4_43 = arith.constant 4 : index
    %c0_44 = arith.constant 0 : index
    %c0_45 = arith.constant 0 : index
    %36 = vector.load %arg2[%c4_43, %c0_44, %c0_45] : memref<9x512x512xbf16, #tpu.memory_space<vmem>>, vector<1x512x512xbf16>
    %37 = vector.shape_cast %36 : vector<1x512x512xbf16> to vector<512x512xbf16>
    %c0_46 = arith.constant 0 : index
    %c0_47 = arith.constant 0 : index
    %38 = vector.load %arg6[%c0_46, %c0_47] : memref<8x512xf32, #tpu.memory_space<vmem>>, vector<8x512xf32>
    %cst_48 = arith.constant dense<0.000000e+00> : vector<8x512xf32>
    %39 = tpu.matmul %35, %37, %cst_48 {dimension_numbers = #tpu.dot_dimension_numbers<[1], [0], [0], [1], [0, 0, 1, 1], [], []>} : vector<8x512xbf16>, vector<512x512xbf16>, vector<8x512xf32> -> vector<8x512xf32>
    %40 = arith.addf %38, %39 : vector<8x512xf32>
    %c0_49 = arith.constant 0 : index
    %c0_50 = arith.constant 0 : index
    %41 = vector.load %arg6[%c0_49, %c0_50] : memref<8x512xf32, #tpu.memory_space<vmem>>, vector<8x512xf32>
    tpu.vector_store %arg6[%c0_49, %c0_50], %40 {strides = array<i32>} : memref<8x512xf32, #tpu.memory_space<vmem>>, vector<8x512xf32>,
    %c0_51 = arith.constant 0 : index
    %c6 = arith.constant 6 : index
    %c0_52 = arith.constant 0 : index
    %42 = vector.load %arg1[%c0_51, %c6, %c0_52] : memref<1x24x512xbf16, #tpu.memory_space<vmem>>, vector<1x8x512xbf16>
    %43 = vector.shape_cast %42 : vector<1x8x512xbf16> to vector<8x512xbf16>
    %c5_53 = arith.constant 5 : index
    %c0_54 = arith.constant 0 : index
    %c0_55 = arith.constant 0 : index
    %44 = vector.load %arg2[%c5_53, %c0_54, %c0_55] : memref<9x512x512xbf16, #tpu.memory_space<vmem>>, vector<1x512x512xbf16>
    %45 = vector.shape_cast %44 : vector<1x512x512xbf16> to vector<512x512xbf16>
    %c0_56 = arith.constant 0 : index
    %c0_57 = arith.constant 0 : index
    %46 = vector.load %arg6[%c0_56, %c0_57] : memref<8x512xf32, #tpu.memory_space<vmem>>, vector<8x512xf32>
    %cst_58 = arith.constant dense<0.000000e+00> : vector<8x512xf32>
    %47 = tpu.matmul %43, %45, %cst_58 {dimension_numbers = #tpu.dot_dimension_numbers<[1], [0], [0], [1], [0, 0, 1, 1], [], []>} : vector<8x512xbf16>, vector<512x512xbf16>, vector<8x512xf32> -> vector<8x512xf32>
    %48 = arith.addf %46, %47 : vector<8x512xf32>
    %c0_59 = arith.constant 0 : index
    %c0_60 = arith.constant 0 : index
    %49 = vector.load %arg6[%c0_59, %c0_60] : memref<8x512xf32, #tpu.memory_space<vmem>>, vector<8x512xf32>
    tpu.vector_store %arg6[%c0_59, %c0_60], %48 {strides = array<i32>} : memref<8x512xf32, #tpu.memory_space<vmem>>, vector<8x512xf32>,
    %c0_61 = arith.constant 0 : index
    %c8 = arith.constant 8 : index
    %c0_62 = arith.constant 0 : index
    %50 = vector.load %arg1[%c0_61, %c8, %c0_62] : memref<1x24x512xbf16, #tpu.memory_space<vmem>>, vector<1x8x512xbf16>
    %51 = vector.shape_cast %50 : vector<1x8x512xbf16> to vector<8x512xbf16>
    %c6_63 = arith.constant 6 : index
    %c0_64 = arith.constant 0 : index
    %c0_65 = arith.constant 0 : index
    %52 = vector.load %arg2[%c6_63, %c0_64, %c0_65] : memref<9x512x512xbf16, #tpu.memory_space<vmem>>, vector<1x512x512xbf16>
    %53 = vector.shape_cast %52 : vector<1x512x512xbf16> to vector<512x512xbf16>
    %c0_66 = arith.constant 0 : index
    %c0_67 = arith.constant 0 : index
    %54 = vector.load %arg6[%c0_66, %c0_67] : memref<8x512xf32, #tpu.memory_space<vmem>>, vector<8x512xf32>
    %cst_68 = arith.constant dense<0.000000e+00> : vector<8x512xf32>
    %55 = tpu.matmul %51, %53, %cst_68 {dimension_numbers = #tpu.dot_dimension_numbers<[1], [0], [0], [1], [0, 0, 1, 1], [], []>} : vector<8x512xbf16>, vector<512x512xbf16>, vector<8x512xf32> -> vector<8x512xf32>
    %56 = arith.addf %54, %55 : vector<8x512xf32>
    %c0_69 = arith.constant 0 : index
    %c0_70 = arith.constant 0 : index
    %57 = vector.load %arg6[%c0_69, %c0_70] : memref<8x512xf32, #tpu.memory_space<vmem>>, vector<8x512xf32>
    tpu.vector_store %arg6[%c0_69, %c0_70], %56 {strides = array<i32>} : memref<8x512xf32, #tpu.memory_space<vmem>>, vector<8x512xf32>,
    %c0_71 = arith.constant 0 : index
    %c9 = arith.constant 9 : index
    %c0_72 = arith.constant 0 : index
    %58 = vector.load %arg1[%c0_71, %c9, %c0_72] : memref<1x24x512xbf16, #tpu.memory_space<vmem>>, vector<1x8x512xbf16>
    %59 = vector.shape_cast %58 : vector<1x8x512xbf16> to vector<8x512xbf16>
    %c7 = arith.constant 7 : index
    %c0_73 = arith.constant 0 : index
    %c0_74 = arith.constant 0 : index
    %60 = vector.load %arg2[%c7, %c0_73, %c0_74] : memref<9x512x512xbf16, #tpu.memory_space<vmem>>, vector<1x512x512xbf16>
    %61 = vector.shape_cast %60 : vector<1x512x512xbf16> to vector<512x512xbf16>
    %c0_75 = arith.constant 0 : index
    %c0_76 = arith.constant 0 : index
    %62 = vector.load %arg6[%c0_75, %c0_76] : memref<8x512xf32, #tpu.memory_space<vmem>>, vector<8x512xf32>
    %cst_77 = arith.constant dense<0.000000e+00> : vector<8x512xf32>
    %63 = tpu.matmul %59, %61, %cst_77 {dimension_numbers = #tpu.dot_dimension_numbers<[1], [0], [0], [1], [0, 0, 1, 1], [], []>} : vector<8x512xbf16>, vector<512x512xbf16>, vector<8x512xf32> -> vector<8x512xf32>
    %64 = arith.addf %62, %63 : vector<8x512xf32>
    %c0_78 = arith.constant 0 : index
    %c0_79 = arith.constant 0 : index
    %65 = vector.load %arg6[%c0_78, %c0_79] : memref<8x512xf32, #tpu.memory_space<vmem>>, vector<8x512xf32>
    tpu.vector_store %arg6[%c0_78, %c0_79], %64 {strides = array<i32>} : memref<8x512xf32, #tpu.memory_space<vmem>>, vector<8x512xf32>,
    %c0_80 = arith.constant 0 : index
    %c10 = arith.constant 10 : index
    %c0_81 = arith.constant 0 : index
    %66 = vector.load %arg1[%c0_80, %c10, %c0_81] : memref<1x24x512xbf16, #tpu.memory_space<vmem>>, vector<1x8x512xbf16>
    %67 = vector.shape_cast %66 : vector<1x8x512xbf16> to vector<8x512xbf16>
    %c8_82 = arith.constant 8 : index
    %c0_83 = arith.constant 0 : index
    %c0_84 = arith.constant 0 : index
    %68 = vector.load %arg2[%c8_82, %c0_83, %c0_84] : memref<9x512x512xbf16, #tpu.memory_space<vmem>>, vector<1x512x512xbf16>
    %69 = vector.shape_cast %68 : vector<1x512x512xbf16> to vector<512x512xbf16>
    %c0_85 = arith.constant 0 : index
    %c0_86 = arith.constant 0 : index
    %70 = vector.load %arg6[%c0_85, %c0_86] : memref<8x512xf32, #tpu.memory_space<vmem>>, vector<8x512xf32>
    %cst_87 = arith.constant dense<0.000000e+00> : vector<8x512xf32>
    %71 = tpu.matmul %67, %69, %cst_87 {dimension_numbers = #tpu.dot_dimension_numbers<[1], [0], [0], [1], [0, 0, 1, 1], [], []>} : vector<8x512xbf16>, vector<512x512xbf16>, vector<8x512xf32> -> vector<8x512xf32>
    %72 = arith.addf %70, %71 : vector<8x512xf32>
    %c0_88 = arith.constant 0 : index
    %c0_89 = arith.constant 0 : index
    %73 = vector.load %arg6[%c0_88, %c0_89] : memref<8x512xf32, #tpu.memory_space<vmem>>, vector<8x512xf32>
    tpu.vector_store %arg6[%c0_88, %c0_89], %72 {strides = array<i32>} : memref<8x512xf32, #tpu.memory_space<vmem>>, vector<8x512xf32>,
    %c0_90 = arith.constant 0 : index
    %c0_91 = arith.constant 0 : index
    %74 = vector.load %arg6[%c0_90, %c0_91] : memref<8x512xf32, #tpu.memory_space<vmem>>, vector<8x512xf32>
    %c0_92 = arith.constant 0 : index
    %c0_93 = arith.constant 0 : index
    %75 = vector.load %arg3[%c0_92, %c0_93] : memref<1x512xf32, #tpu.memory_space<vmem>>, vector<1x512xf32>
    %76 = vector.broadcast %75 : vector<1x512xf32> to vector<8x512xf32>
    %77 = arith.addf %74, %76 : vector<8x512xf32>
    %cst_94 = arith.constant 0.000000e+00 : f32
    %78 = vector.broadcast %cst_94 : f32 to vector<8x512xf32>
    %79 = arith.maximumf %77, %78 : vector<8x512xf32>
    %c0_95 = arith.constant 0 : index
    %c0_96 = arith.constant 0 : index
    %80 = vector.load %arg4[%c0_95, %c0_96] : memref<8x1xf32, #tpu.memory_space<vmem>>, vector<8x1xf32>
    %81 = vector.broadcast %80 : vector<8x1xf32> to vector<8x512xf32>
    %82 = arith.mulf %79, %81 : vector<8x512xf32>
    %cst_97 = arith.constant dense<0.000000e+00> : vector<512xf32>
    %83 = vector.multi_reduction <add>, %82, %cst_97 [0] : vector<8x512xf32> to vector<512xf32>
    %84 = vector.shape_cast %83 : vector<512xf32> to vector<1x512xf32>
    %cst_98 = arith.constant 2.500000e-01 : f32
    %85 = vector.broadcast %cst_98 : f32 to vector<1x512xf32>
    %86 = arith.mulf %84, %85 : vector<1x512xf32>
    %c0_99 = arith.constant 0 : index
    %c0_100 = arith.constant 0 : index
    %c0_101 = arith.constant 0 : index
    %87 = vector.load %arg5[%c0_99, %c0_100, %c0_101] : memref<1x1x512xf32, #tpu.memory_space<vmem>>, vector<1x1x512xf32>
    %88 = vector.shape_cast %87 : vector<1x1x512xf32> to vector<1x512xf32>
    %89 = vector.shape_cast %86 : vector<1x512xf32> to vector<1x1x512xf32>
    tpu.vector_store %arg5[%c0_99, %c0_100, %c0_101], %89 {strides = array<i32>} : memref<1x1x512xf32, #tpu.memory_space<vmem>>, vector<1x1x512xf32>,
    return
  }
  func.func @transform_0(%arg0: i32) -> (i32, i32, i32) {
    %c0_i32 = arith.constant 0 : i32
    %c0_i32_0 = arith.constant 0 : i32
    %c0_i32_1 = arith.constant 0 : i32
    return %arg0, %c0_i32, %c0_i32_0 : i32, i32, i32
  }
  func.func @transform_1(%arg0: i32) -> (i32, i32, i32) {
    %c0_i32 = arith.constant 0 : i32
    %c0_i32_0 = arith.constant 0 : i32
    %c0_i32_1 = arith.constant 0 : i32
    %c0_i32_2 = arith.constant 0 : i32
    return %c0_i32, %c0_i32_0, %c0_i32_1 : i32, i32, i32
  }
  func.func @transform_2(%arg0: i32) -> (i32, i32) {
    %c0_i32 = arith.constant 0 : i32
    %c0_i32_0 = arith.constant 0 : i32
    %c0_i32_1 = arith.constant 0 : i32
    return %c0_i32, %c0_i32_0 : i32, i32
  }
  func.func @transform_3(%arg0: i32) -> (i32, i32) {
    %c0_i32 = arith.constant 0 : i32
    %c0_i32_0 = arith.constant 0 : i32
    %c0_i32_1 = arith.constant 0 : i32
    return %c0_i32, %c0_i32_0 : i32, i32
  }
  func.func @transform_4(%arg0: i32) -> (i32, i32, i32) {
    %c0_i32 = arith.constant 0 : i32
    %c0_i32_0 = arith.constant 0 : i32
    %c0_i32_1 = arith.constant 0 : i32
    return %arg0, %c0_i32, %c0_i32_0 : i32, i32, i32
  }
}

module attributes {stable_mosaic.version = 11 : i64} {
  func.func @_flat_conv_kernel(%arg0: i32, %arg1: memref<1x22x3xbf16, #tpu.memory_space<vmem>>, %arg2: memref<7x3x128xbf16, #tpu.memory_space<vmem>>, %arg3: memref<1x128xf32, #tpu.memory_space<vmem>>, %arg4: memref<16x1xf32, #tpu.memory_space<vmem>>, %arg5: memref<1x16x128xbf16, #tpu.memory_space<vmem>>, %arg6: memref<16x128xf32, #tpu.memory_space<vmem>>) attributes {dimension_semantics = [#tpu.dimension_semantics<parallel>], iteration_bounds = array<i64: 2>, scalar_prefetch = 0 : i64, scratch_operands = 1 : i64, tpu.core_type = #tpu.core_type<tc>, window_params = [{transform_indices = @transform_0, window_bounds = array<i64: 1, 22, 3>}, {pipeline_mode = #tpu.pipeline_mode<synchronous>, transform_indices = @transform_1, window_bounds = array<i64: 7, 3, 128>}, {pipeline_mode = #tpu.pipeline_mode<synchronous>, transform_indices = @transform_2, window_bounds = array<i64: 1, 128>}, {pipeline_mode = #tpu.pipeline_mode<synchronous>, transform_indices = @transform_3, window_bounds = array<i64: 16, 1>}, {transform_indices = @transform_4, window_bounds = array<i64: 1, 16, 128>}]} {
    %cst = arith.constant 0.000000e+00 : f32
    %0 = vector.broadcast %cst : f32 to vector<16x128xf32>
    %c0 = arith.constant 0 : index
    %c0_0 = arith.constant 0 : index
    %1 = vector.load %arg6[%c0, %c0_0] : memref<16x128xf32, #tpu.memory_space<vmem>>, vector<16x128xf32>
    tpu.vector_store %arg6[%c0, %c0_0], %0 {strides = array<i32>} : memref<16x128xf32, #tpu.memory_space<vmem>>, vector<16x128xf32>,
    %c0_1 = arith.constant 0 : index
    %c0_2 = arith.constant 0 : index
    %c0_3 = arith.constant 0 : index
    %2 = vector.load %arg1[%c0_1, %c0_2, %c0_3] : memref<1x22x3xbf16, #tpu.memory_space<vmem>>, vector<1x16x3xbf16>
    %3 = vector.shape_cast %2 : vector<1x16x3xbf16> to vector<16x3xbf16>
    %c0_4 = arith.constant 0 : index
    %c0_5 = arith.constant 0 : index
    %c0_6 = arith.constant 0 : index
    %4 = vector.load %arg2[%c0_4, %c0_5, %c0_6] : memref<7x3x128xbf16, #tpu.memory_space<vmem>>, vector<1x3x128xbf16>
    %5 = vector.shape_cast %4 : vector<1x3x128xbf16> to vector<3x128xbf16>
    %c0_7 = arith.constant 0 : index
    %c0_8 = arith.constant 0 : index
    %6 = vector.load %arg6[%c0_7, %c0_8] : memref<16x128xf32, #tpu.memory_space<vmem>>, vector<16x128xf32>
    %cst_9 = arith.constant dense<0.000000e+00> : vector<16x128xf32>
    %7 = tpu.matmul %3, %5, %cst_9 {dimension_numbers = #tpu.dot_dimension_numbers<[1], [0], [0], [1], [0, 0, 1, 1], [], []>} : vector<16x3xbf16>, vector<3x128xbf16>, vector<16x128xf32> -> vector<16x128xf32>
    %8 = arith.addf %6, %7 : vector<16x128xf32>
    %c0_10 = arith.constant 0 : index
    %c0_11 = arith.constant 0 : index
    %9 = vector.load %arg6[%c0_10, %c0_11] : memref<16x128xf32, #tpu.memory_space<vmem>>, vector<16x128xf32>
    tpu.vector_store %arg6[%c0_10, %c0_11], %8 {strides = array<i32>} : memref<16x128xf32, #tpu.memory_space<vmem>>, vector<16x128xf32>,
    %c0_12 = arith.constant 0 : index
    %c1 = arith.constant 1 : index
    %c0_13 = arith.constant 0 : index
    %10 = vector.load %arg1[%c0_12, %c1, %c0_13] : memref<1x22x3xbf16, #tpu.memory_space<vmem>>, vector<1x16x3xbf16>
    %11 = vector.shape_cast %10 : vector<1x16x3xbf16> to vector<16x3xbf16>
    %c1_14 = arith.constant 1 : index
    %c0_15 = arith.constant 0 : index
    %c0_16 = arith.constant 0 : index
    %12 = vector.load %arg2[%c1_14, %c0_15, %c0_16] : memref<7x3x128xbf16, #tpu.memory_space<vmem>>, vector<1x3x128xbf16>
    %13 = vector.shape_cast %12 : vector<1x3x128xbf16> to vector<3x128xbf16>
    %c0_17 = arith.constant 0 : index
    %c0_18 = arith.constant 0 : index
    %14 = vector.load %arg6[%c0_17, %c0_18] : memref<16x128xf32, #tpu.memory_space<vmem>>, vector<16x128xf32>
    %cst_19 = arith.constant dense<0.000000e+00> : vector<16x128xf32>
    %15 = tpu.matmul %11, %13, %cst_19 {dimension_numbers = #tpu.dot_dimension_numbers<[1], [0], [0], [1], [0, 0, 1, 1], [], []>} : vector<16x3xbf16>, vector<3x128xbf16>, vector<16x128xf32> -> vector<16x128xf32>
    %16 = arith.addf %14, %15 : vector<16x128xf32>
    %c0_20 = arith.constant 0 : index
    %c0_21 = arith.constant 0 : index
    %17 = vector.load %arg6[%c0_20, %c0_21] : memref<16x128xf32, #tpu.memory_space<vmem>>, vector<16x128xf32>
    tpu.vector_store %arg6[%c0_20, %c0_21], %16 {strides = array<i32>} : memref<16x128xf32, #tpu.memory_space<vmem>>, vector<16x128xf32>,
    %c0_22 = arith.constant 0 : index
    %c2 = arith.constant 2 : index
    %c0_23 = arith.constant 0 : index
    %18 = vector.load %arg1[%c0_22, %c2, %c0_23] : memref<1x22x3xbf16, #tpu.memory_space<vmem>>, vector<1x16x3xbf16>
    %19 = vector.shape_cast %18 : vector<1x16x3xbf16> to vector<16x3xbf16>
    %c2_24 = arith.constant 2 : index
    %c0_25 = arith.constant 0 : index
    %c0_26 = arith.constant 0 : index
    %20 = vector.load %arg2[%c2_24, %c0_25, %c0_26] : memref<7x3x128xbf16, #tpu.memory_space<vmem>>, vector<1x3x128xbf16>
    %21 = vector.shape_cast %20 : vector<1x3x128xbf16> to vector<3x128xbf16>
    %c0_27 = arith.constant 0 : index
    %c0_28 = arith.constant 0 : index
    %22 = vector.load %arg6[%c0_27, %c0_28] : memref<16x128xf32, #tpu.memory_space<vmem>>, vector<16x128xf32>
    %cst_29 = arith.constant dense<0.000000e+00> : vector<16x128xf32>
    %23 = tpu.matmul %19, %21, %cst_29 {dimension_numbers = #tpu.dot_dimension_numbers<[1], [0], [0], [1], [0, 0, 1, 1], [], []>} : vector<16x3xbf16>, vector<3x128xbf16>, vector<16x128xf32> -> vector<16x128xf32>
    %24 = arith.addf %22, %23 : vector<16x128xf32>
    %c0_30 = arith.constant 0 : index
    %c0_31 = arith.constant 0 : index
    %25 = vector.load %arg6[%c0_30, %c0_31] : memref<16x128xf32, #tpu.memory_space<vmem>>, vector<16x128xf32>
    tpu.vector_store %arg6[%c0_30, %c0_31], %24 {strides = array<i32>} : memref<16x128xf32, #tpu.memory_space<vmem>>, vector<16x128xf32>,
    %c0_32 = arith.constant 0 : index
    %c3 = arith.constant 3 : index
    %c0_33 = arith.constant 0 : index
    %26 = vector.load %arg1[%c0_32, %c3, %c0_33] : memref<1x22x3xbf16, #tpu.memory_space<vmem>>, vector<1x16x3xbf16>
    %27 = vector.shape_cast %26 : vector<1x16x3xbf16> to vector<16x3xbf16>
    %c3_34 = arith.constant 3 : index
    %c0_35 = arith.constant 0 : index
    %c0_36 = arith.constant 0 : index
    %28 = vector.load %arg2[%c3_34, %c0_35, %c0_36] : memref<7x3x128xbf16, #tpu.memory_space<vmem>>, vector<1x3x128xbf16>
    %29 = vector.shape_cast %28 : vector<1x3x128xbf16> to vector<3x128xbf16>
    %c0_37 = arith.constant 0 : index
    %c0_38 = arith.constant 0 : index
    %30 = vector.load %arg6[%c0_37, %c0_38] : memref<16x128xf32, #tpu.memory_space<vmem>>, vector<16x128xf32>
    %cst_39 = arith.constant dense<0.000000e+00> : vector<16x128xf32>
    %31 = tpu.matmul %27, %29, %cst_39 {dimension_numbers = #tpu.dot_dimension_numbers<[1], [0], [0], [1], [0, 0, 1, 1], [], []>} : vector<16x3xbf16>, vector<3x128xbf16>, vector<16x128xf32> -> vector<16x128xf32>
    %32 = arith.addf %30, %31 : vector<16x128xf32>
    %c0_40 = arith.constant 0 : index
    %c0_41 = arith.constant 0 : index
    %33 = vector.load %arg6[%c0_40, %c0_41] : memref<16x128xf32, #tpu.memory_space<vmem>>, vector<16x128xf32>
    tpu.vector_store %arg6[%c0_40, %c0_41], %32 {strides = array<i32>} : memref<16x128xf32, #tpu.memory_space<vmem>>, vector<16x128xf32>,
    %c0_42 = arith.constant 0 : index
    %c4 = arith.constant 4 : index
    %c0_43 = arith.constant 0 : index
    %34 = vector.load %arg1[%c0_42, %c4, %c0_43] : memref<1x22x3xbf16, #tpu.memory_space<vmem>>, vector<1x16x3xbf16>
    %35 = vector.shape_cast %34 : vector<1x16x3xbf16> to vector<16x3xbf16>
    %c4_44 = arith.constant 4 : index
    %c0_45 = arith.constant 0 : index
    %c0_46 = arith.constant 0 : index
    %36 = vector.load %arg2[%c4_44, %c0_45, %c0_46] : memref<7x3x128xbf16, #tpu.memory_space<vmem>>, vector<1x3x128xbf16>
    %37 = vector.shape_cast %36 : vector<1x3x128xbf16> to vector<3x128xbf16>
    %c0_47 = arith.constant 0 : index
    %c0_48 = arith.constant 0 : index
    %38 = vector.load %arg6[%c0_47, %c0_48] : memref<16x128xf32, #tpu.memory_space<vmem>>, vector<16x128xf32>
    %cst_49 = arith.constant dense<0.000000e+00> : vector<16x128xf32>
    %39 = tpu.matmul %35, %37, %cst_49 {dimension_numbers = #tpu.dot_dimension_numbers<[1], [0], [0], [1], [0, 0, 1, 1], [], []>} : vector<16x3xbf16>, vector<3x128xbf16>, vector<16x128xf32> -> vector<16x128xf32>
    %40 = arith.addf %38, %39 : vector<16x128xf32>
    %c0_50 = arith.constant 0 : index
    %c0_51 = arith.constant 0 : index
    %41 = vector.load %arg6[%c0_50, %c0_51] : memref<16x128xf32, #tpu.memory_space<vmem>>, vector<16x128xf32>
    tpu.vector_store %arg6[%c0_50, %c0_51], %40 {strides = array<i32>} : memref<16x128xf32, #tpu.memory_space<vmem>>, vector<16x128xf32>,
    %c0_52 = arith.constant 0 : index
    %c5 = arith.constant 5 : index
    %c0_53 = arith.constant 0 : index
    %42 = vector.load %arg1[%c0_52, %c5, %c0_53] : memref<1x22x3xbf16, #tpu.memory_space<vmem>>, vector<1x16x3xbf16>
    %43 = vector.shape_cast %42 : vector<1x16x3xbf16> to vector<16x3xbf16>
    %c5_54 = arith.constant 5 : index
    %c0_55 = arith.constant 0 : index
    %c0_56 = arith.constant 0 : index
    %44 = vector.load %arg2[%c5_54, %c0_55, %c0_56] : memref<7x3x128xbf16, #tpu.memory_space<vmem>>, vector<1x3x128xbf16>
    %45 = vector.shape_cast %44 : vector<1x3x128xbf16> to vector<3x128xbf16>
    %c0_57 = arith.constant 0 : index
    %c0_58 = arith.constant 0 : index
    %46 = vector.load %arg6[%c0_57, %c0_58] : memref<16x128xf32, #tpu.memory_space<vmem>>, vector<16x128xf32>
    %cst_59 = arith.constant dense<0.000000e+00> : vector<16x128xf32>
    %47 = tpu.matmul %43, %45, %cst_59 {dimension_numbers = #tpu.dot_dimension_numbers<[1], [0], [0], [1], [0, 0, 1, 1], [], []>} : vector<16x3xbf16>, vector<3x128xbf16>, vector<16x128xf32> -> vector<16x128xf32>
    %48 = arith.addf %46, %47 : vector<16x128xf32>
    %c0_60 = arith.constant 0 : index
    %c0_61 = arith.constant 0 : index
    %49 = vector.load %arg6[%c0_60, %c0_61] : memref<16x128xf32, #tpu.memory_space<vmem>>, vector<16x128xf32>
    tpu.vector_store %arg6[%c0_60, %c0_61], %48 {strides = array<i32>} : memref<16x128xf32, #tpu.memory_space<vmem>>, vector<16x128xf32>,
    %c0_62 = arith.constant 0 : index
    %c6 = arith.constant 6 : index
    %c0_63 = arith.constant 0 : index
    %50 = vector.load %arg1[%c0_62, %c6, %c0_63] : memref<1x22x3xbf16, #tpu.memory_space<vmem>>, vector<1x16x3xbf16>
    %51 = vector.shape_cast %50 : vector<1x16x3xbf16> to vector<16x3xbf16>
    %c6_64 = arith.constant 6 : index
    %c0_65 = arith.constant 0 : index
    %c0_66 = arith.constant 0 : index
    %52 = vector.load %arg2[%c6_64, %c0_65, %c0_66] : memref<7x3x128xbf16, #tpu.memory_space<vmem>>, vector<1x3x128xbf16>
    %53 = vector.shape_cast %52 : vector<1x3x128xbf16> to vector<3x128xbf16>
    %c0_67 = arith.constant 0 : index
    %c0_68 = arith.constant 0 : index
    %54 = vector.load %arg6[%c0_67, %c0_68] : memref<16x128xf32, #tpu.memory_space<vmem>>, vector<16x128xf32>
    %cst_69 = arith.constant dense<0.000000e+00> : vector<16x128xf32>
    %55 = tpu.matmul %51, %53, %cst_69 {dimension_numbers = #tpu.dot_dimension_numbers<[1], [0], [0], [1], [0, 0, 1, 1], [], []>} : vector<16x3xbf16>, vector<3x128xbf16>, vector<16x128xf32> -> vector<16x128xf32>
    %56 = arith.addf %54, %55 : vector<16x128xf32>
    %c0_70 = arith.constant 0 : index
    %c0_71 = arith.constant 0 : index
    %57 = vector.load %arg6[%c0_70, %c0_71] : memref<16x128xf32, #tpu.memory_space<vmem>>, vector<16x128xf32>
    tpu.vector_store %arg6[%c0_70, %c0_71], %56 {strides = array<i32>} : memref<16x128xf32, #tpu.memory_space<vmem>>, vector<16x128xf32>,
    %c0_72 = arith.constant 0 : index
    %c0_73 = arith.constant 0 : index
    %58 = vector.load %arg6[%c0_72, %c0_73] : memref<16x128xf32, #tpu.memory_space<vmem>>, vector<16x128xf32>
    %c0_74 = arith.constant 0 : index
    %c0_75 = arith.constant 0 : index
    %59 = vector.load %arg3[%c0_74, %c0_75] : memref<1x128xf32, #tpu.memory_space<vmem>>, vector<1x128xf32>
    %60 = vector.broadcast %59 : vector<1x128xf32> to vector<16x128xf32>
    %61 = arith.addf %58, %60 : vector<16x128xf32>
    %cst_76 = arith.constant 0.000000e+00 : f32
    %62 = vector.broadcast %cst_76 : f32 to vector<16x128xf32>
    %63 = arith.maximumf %61, %62 : vector<16x128xf32>
    %c0_77 = arith.constant 0 : index
    %c0_78 = arith.constant 0 : index
    %64 = vector.load %arg4[%c0_77, %c0_78] : memref<16x1xf32, #tpu.memory_space<vmem>>, vector<16x1xf32>
    %65 = vector.broadcast %64 : vector<16x1xf32> to vector<16x128xf32>
    %66 = arith.mulf %63, %65 : vector<16x128xf32>
    %67 = arith.truncf %66 : vector<16x128xf32> to vector<16x128xbf16>
    %c0_79 = arith.constant 0 : index
    %c0_80 = arith.constant 0 : index
    %c0_81 = arith.constant 0 : index
    %68 = vector.load %arg5[%c0_79, %c0_80, %c0_81] : memref<1x16x128xbf16, #tpu.memory_space<vmem>>, vector<1x16x128xbf16>
    %69 = vector.shape_cast %68 : vector<1x16x128xbf16> to vector<16x128xbf16>
    %70 = vector.shape_cast %67 : vector<16x128xbf16> to vector<1x16x128xbf16>
    tpu.vector_store %arg5[%c0_79, %c0_80, %c0_81], %70 {strides = array<i32>} : memref<1x16x128xbf16, #tpu.memory_space<vmem>>, vector<1x16x128xbf16>,
    return
  }
  func.func @transform_0(%arg0: i32) -> (i32, i32, i32) {
    %c0_i32 = arith.constant 0 : i32
    %c0_i32_0 = arith.constant 0 : i32
    %c0_i32_1 = arith.constant 0 : i32
    return %arg0, %c0_i32, %c0_i32_0 : i32, i32, i32
  }
  func.func @transform_1(%arg0: i32) -> (i32, i32, i32) {
    %c0_i32 = arith.constant 0 : i32
    %c0_i32_0 = arith.constant 0 : i32
    %c0_i32_1 = arith.constant 0 : i32
    %c0_i32_2 = arith.constant 0 : i32
    return %c0_i32, %c0_i32_0, %c0_i32_1 : i32, i32, i32
  }
  func.func @transform_2(%arg0: i32) -> (i32, i32) {
    %c0_i32 = arith.constant 0 : i32
    %c0_i32_0 = arith.constant 0 : i32
    %c0_i32_1 = arith.constant 0 : i32
    return %c0_i32, %c0_i32_0 : i32, i32
  }
  func.func @transform_3(%arg0: i32) -> (i32, i32) {
    %c0_i32 = arith.constant 0 : i32
    %c0_i32_0 = arith.constant 0 : i32
    %c0_i32_1 = arith.constant 0 : i32
    return %c0_i32, %c0_i32_0 : i32, i32
  }
  func.func @transform_4(%arg0: i32) -> (i32, i32, i32) {
    %c0_i32 = arith.constant 0 : i32
    %c0_i32_0 = arith.constant 0 : i32
    %c0_i32_1 = arith.constant 0 : i32
    return %arg0, %c0_i32, %c0_i32_0 : i32, i32, i32
  }
}

module attributes {stable_mosaic.version = 11 : i64} {
  func.func @_flat_conv_kernel(%arg0: i32, %arg1: memref<1x12x128xbf16, #tpu.memory_space<vmem>>, %arg2: memref<5x128x256xbf16, #tpu.memory_space<vmem>>, %arg3: memref<1x256xf32, #tpu.memory_space<vmem>>, %arg4: memref<8x1xf32, #tpu.memory_space<vmem>>, %arg5: memref<1x8x256xbf16, #tpu.memory_space<vmem>>, %arg6: memref<8x256xf32, #tpu.memory_space<vmem>>) attributes {dimension_semantics = [#tpu.dimension_semantics<parallel>], iteration_bounds = array<i64: 2>, scalar_prefetch = 0 : i64, scratch_operands = 1 : i64, tpu.core_type = #tpu.core_type<tc>, window_params = [{transform_indices = @transform_0, window_bounds = array<i64: 1, 12, 128>}, {pipeline_mode = #tpu.pipeline_mode<synchronous>, transform_indices = @transform_1, window_bounds = array<i64: 5, 128, 256>}, {pipeline_mode = #tpu.pipeline_mode<synchronous>, transform_indices = @transform_2, window_bounds = array<i64: 1, 256>}, {pipeline_mode = #tpu.pipeline_mode<synchronous>, transform_indices = @transform_3, window_bounds = array<i64: 8, 1>}, {transform_indices = @transform_4, window_bounds = array<i64: 1, 8, 256>}]} {
    %cst = arith.constant 0.000000e+00 : f32
    %0 = vector.broadcast %cst : f32 to vector<8x256xf32>
    %c0 = arith.constant 0 : index
    %c0_0 = arith.constant 0 : index
    %1 = vector.load %arg6[%c0, %c0_0] : memref<8x256xf32, #tpu.memory_space<vmem>>, vector<8x256xf32>
    tpu.vector_store %arg6[%c0, %c0_0], %0 {strides = array<i32>} : memref<8x256xf32, #tpu.memory_space<vmem>>, vector<8x256xf32>,
    %c0_1 = arith.constant 0 : index
    %c0_2 = arith.constant 0 : index
    %c0_3 = arith.constant 0 : index
    %2 = vector.load %arg1[%c0_1, %c0_2, %c0_3] : memref<1x12x128xbf16, #tpu.memory_space<vmem>>, vector<1x8x128xbf16>
    %3 = vector.shape_cast %2 : vector<1x8x128xbf16> to vector<8x128xbf16>
    %c0_4 = arith.constant 0 : index
    %c0_5 = arith.constant 0 : index
    %c0_6 = arith.constant 0 : index
    %4 = vector.load %arg2[%c0_4, %c0_5, %c0_6] : memref<5x128x256xbf16, #tpu.memory_space<vmem>>, vector<1x128x256xbf16>
    %5 = vector.shape_cast %4 : vector<1x128x256xbf16> to vector<128x256xbf16>
    %c0_7 = arith.constant 0 : index
    %c0_8 = arith.constant 0 : index
    %6 = vector.load %arg6[%c0_7, %c0_8] : memref<8x256xf32, #tpu.memory_space<vmem>>, vector<8x256xf32>
    %cst_9 = arith.constant dense<0.000000e+00> : vector<8x256xf32>
    %7 = tpu.matmul %3, %5, %cst_9 {dimension_numbers = #tpu.dot_dimension_numbers<[1], [0], [0], [1], [0, 0, 1, 1], [], []>} : vector<8x128xbf16>, vector<128x256xbf16>, vector<8x256xf32> -> vector<8x256xf32>
    %8 = arith.addf %6, %7 : vector<8x256xf32>
    %c0_10 = arith.constant 0 : index
    %c0_11 = arith.constant 0 : index
    %9 = vector.load %arg6[%c0_10, %c0_11] : memref<8x256xf32, #tpu.memory_space<vmem>>, vector<8x256xf32>
    tpu.vector_store %arg6[%c0_10, %c0_11], %8 {strides = array<i32>} : memref<8x256xf32, #tpu.memory_space<vmem>>, vector<8x256xf32>,
    %c0_12 = arith.constant 0 : index
    %c1 = arith.constant 1 : index
    %c0_13 = arith.constant 0 : index
    %10 = vector.load %arg1[%c0_12, %c1, %c0_13] : memref<1x12x128xbf16, #tpu.memory_space<vmem>>, vector<1x8x128xbf16>
    %11 = vector.shape_cast %10 : vector<1x8x128xbf16> to vector<8x128xbf16>
    %c1_14 = arith.constant 1 : index
    %c0_15 = arith.constant 0 : index
    %c0_16 = arith.constant 0 : index
    %12 = vector.load %arg2[%c1_14, %c0_15, %c0_16] : memref<5x128x256xbf16, #tpu.memory_space<vmem>>, vector<1x128x256xbf16>
    %13 = vector.shape_cast %12 : vector<1x128x256xbf16> to vector<128x256xbf16>
    %c0_17 = arith.constant 0 : index
    %c0_18 = arith.constant 0 : index
    %14 = vector.load %arg6[%c0_17, %c0_18] : memref<8x256xf32, #tpu.memory_space<vmem>>, vector<8x256xf32>
    %cst_19 = arith.constant dense<0.000000e+00> : vector<8x256xf32>
    %15 = tpu.matmul %11, %13, %cst_19 {dimension_numbers = #tpu.dot_dimension_numbers<[1], [0], [0], [1], [0, 0, 1, 1], [], []>} : vector<8x128xbf16>, vector<128x256xbf16>, vector<8x256xf32> -> vector<8x256xf32>
    %16 = arith.addf %14, %15 : vector<8x256xf32>
    %c0_20 = arith.constant 0 : index
    %c0_21 = arith.constant 0 : index
    %17 = vector.load %arg6[%c0_20, %c0_21] : memref<8x256xf32, #tpu.memory_space<vmem>>, vector<8x256xf32>
    tpu.vector_store %arg6[%c0_20, %c0_21], %16 {strides = array<i32>} : memref<8x256xf32, #tpu.memory_space<vmem>>, vector<8x256xf32>,
    %c0_22 = arith.constant 0 : index
    %c2 = arith.constant 2 : index
    %c0_23 = arith.constant 0 : index
    %18 = vector.load %arg1[%c0_22, %c2, %c0_23] : memref<1x12x128xbf16, #tpu.memory_space<vmem>>, vector<1x8x128xbf16>
    %19 = vector.shape_cast %18 : vector<1x8x128xbf16> to vector<8x128xbf16>
    %c2_24 = arith.constant 2 : index
    %c0_25 = arith.constant 0 : index
    %c0_26 = arith.constant 0 : index
    %20 = vector.load %arg2[%c2_24, %c0_25, %c0_26] : memref<5x128x256xbf16, #tpu.memory_space<vmem>>, vector<1x128x256xbf16>
    %21 = vector.shape_cast %20 : vector<1x128x256xbf16> to vector<128x256xbf16>
    %c0_27 = arith.constant 0 : index
    %c0_28 = arith.constant 0 : index
    %22 = vector.load %arg6[%c0_27, %c0_28] : memref<8x256xf32, #tpu.memory_space<vmem>>, vector<8x256xf32>
    %cst_29 = arith.constant dense<0.000000e+00> : vector<8x256xf32>
    %23 = tpu.matmul %19, %21, %cst_29 {dimension_numbers = #tpu.dot_dimension_numbers<[1], [0], [0], [1], [0, 0, 1, 1], [], []>} : vector<8x128xbf16>, vector<128x256xbf16>, vector<8x256xf32> -> vector<8x256xf32>
    %24 = arith.addf %22, %23 : vector<8x256xf32>
    %c0_30 = arith.constant 0 : index
    %c0_31 = arith.constant 0 : index
    %25 = vector.load %arg6[%c0_30, %c0_31] : memref<8x256xf32, #tpu.memory_space<vmem>>, vector<8x256xf32>
    tpu.vector_store %arg6[%c0_30, %c0_31], %24 {strides = array<i32>} : memref<8x256xf32, #tpu.memory_space<vmem>>, vector<8x256xf32>,
    %c0_32 = arith.constant 0 : index
    %c3 = arith.constant 3 : index
    %c0_33 = arith.constant 0 : index
    %26 = vector.load %arg1[%c0_32, %c3, %c0_33] : memref<1x12x128xbf16, #tpu.memory_space<vmem>>, vector<1x8x128xbf16>
    %27 = vector.shape_cast %26 : vector<1x8x128xbf16> to vector<8x128xbf16>
    %c3_34 = arith.constant 3 : index
    %c0_35 = arith.constant 0 : index
    %c0_36 = arith.constant 0 : index
    %28 = vector.load %arg2[%c3_34, %c0_35, %c0_36] : memref<5x128x256xbf16, #tpu.memory_space<vmem>>, vector<1x128x256xbf16>
    %29 = vector.shape_cast %28 : vector<1x128x256xbf16> to vector<128x256xbf16>
    %c0_37 = arith.constant 0 : index
    %c0_38 = arith.constant 0 : index
    %30 = vector.load %arg6[%c0_37, %c0_38] : memref<8x256xf32, #tpu.memory_space<vmem>>, vector<8x256xf32>
    %cst_39 = arith.constant dense<0.000000e+00> : vector<8x256xf32>
    %31 = tpu.matmul %27, %29, %cst_39 {dimension_numbers = #tpu.dot_dimension_numbers<[1], [0], [0], [1], [0, 0, 1, 1], [], []>} : vector<8x128xbf16>, vector<128x256xbf16>, vector<8x256xf32> -> vector<8x256xf32>
    %32 = arith.addf %30, %31 : vector<8x256xf32>
    %c0_40 = arith.constant 0 : index
    %c0_41 = arith.constant 0 : index
    %33 = vector.load %arg6[%c0_40, %c0_41] : memref<8x256xf32, #tpu.memory_space<vmem>>, vector<8x256xf32>
    tpu.vector_store %arg6[%c0_40, %c0_41], %32 {strides = array<i32>} : memref<8x256xf32, #tpu.memory_space<vmem>>, vector<8x256xf32>,
    %c0_42 = arith.constant 0 : index
    %c4 = arith.constant 4 : index
    %c0_43 = arith.constant 0 : index
    %34 = vector.load %arg1[%c0_42, %c4, %c0_43] : memref<1x12x128xbf16, #tpu.memory_space<vmem>>, vector<1x8x128xbf16>
    %35 = vector.shape_cast %34 : vector<1x8x128xbf16> to vector<8x128xbf16>
    %c4_44 = arith.constant 4 : index
    %c0_45 = arith.constant 0 : index
    %c0_46 = arith.constant 0 : index
    %36 = vector.load %arg2[%c4_44, %c0_45, %c0_46] : memref<5x128x256xbf16, #tpu.memory_space<vmem>>, vector<1x128x256xbf16>
    %37 = vector.shape_cast %36 : vector<1x128x256xbf16> to vector<128x256xbf16>
    %c0_47 = arith.constant 0 : index
    %c0_48 = arith.constant 0 : index
    %38 = vector.load %arg6[%c0_47, %c0_48] : memref<8x256xf32, #tpu.memory_space<vmem>>, vector<8x256xf32>
    %cst_49 = arith.constant dense<0.000000e+00> : vector<8x256xf32>
    %39 = tpu.matmul %35, %37, %cst_49 {dimension_numbers = #tpu.dot_dimension_numbers<[1], [0], [0], [1], [0, 0, 1, 1], [], []>} : vector<8x128xbf16>, vector<128x256xbf16>, vector<8x256xf32> -> vector<8x256xf32>
    %40 = arith.addf %38, %39 : vector<8x256xf32>
    %c0_50 = arith.constant 0 : index
    %c0_51 = arith.constant 0 : index
    %41 = vector.load %arg6[%c0_50, %c0_51] : memref<8x256xf32, #tpu.memory_space<vmem>>, vector<8x256xf32>
    tpu.vector_store %arg6[%c0_50, %c0_51], %40 {strides = array<i32>} : memref<8x256xf32, #tpu.memory_space<vmem>>, vector<8x256xf32>,
    %c0_52 = arith.constant 0 : index
    %c0_53 = arith.constant 0 : index
    %42 = vector.load %arg6[%c0_52, %c0_53] : memref<8x256xf32, #tpu.memory_space<vmem>>, vector<8x256xf32>
    %c0_54 = arith.constant 0 : index
    %c0_55 = arith.constant 0 : index
    %43 = vector.load %arg3[%c0_54, %c0_55] : memref<1x256xf32, #tpu.memory_space<vmem>>, vector<1x256xf32>
    %44 = vector.broadcast %43 : vector<1x256xf32> to vector<8x256xf32>
    %45 = arith.addf %42, %44 : vector<8x256xf32>
    %cst_56 = arith.constant 0.000000e+00 : f32
    %46 = vector.broadcast %cst_56 : f32 to vector<8x256xf32>
    %47 = arith.maximumf %45, %46 : vector<8x256xf32>
    %c0_57 = arith.constant 0 : index
    %c0_58 = arith.constant 0 : index
    %48 = vector.load %arg4[%c0_57, %c0_58] : memref<8x1xf32, #tpu.memory_space<vmem>>, vector<8x1xf32>
    %49 = vector.broadcast %48 : vector<8x1xf32> to vector<8x256xf32>
    %50 = arith.mulf %47, %49 : vector<8x256xf32>
    %51 = arith.truncf %50 : vector<8x256xf32> to vector<8x256xbf16>
    %c0_59 = arith.constant 0 : index
    %c0_60 = arith.constant 0 : index
    %c0_61 = arith.constant 0 : index
    %52 = vector.load %arg5[%c0_59, %c0_60, %c0_61] : memref<1x8x256xbf16, #tpu.memory_space<vmem>>, vector<1x8x256xbf16>
    %53 = vector.shape_cast %52 : vector<1x8x256xbf16> to vector<8x256xbf16>
    %54 = vector.shape_cast %51 : vector<8x256xbf16> to vector<1x8x256xbf16>
    tpu.vector_store %arg5[%c0_59, %c0_60, %c0_61], %54 {strides = array<i32>} : memref<1x8x256xbf16, #tpu.memory_space<vmem>>, vector<1x8x256xbf16>,
    return
  }
  func.func @transform_0(%arg0: i32) -> (i32, i32, i32) {
    %c0_i32 = arith.constant 0 : i32
    %c0_i32_0 = arith.constant 0 : i32
    %c0_i32_1 = arith.constant 0 : i32
    return %arg0, %c0_i32, %c0_i32_0 : i32, i32, i32
  }
  func.func @transform_1(%arg0: i32) -> (i32, i32, i32) {
    %c0_i32 = arith.constant 0 : i32
    %c0_i32_0 = arith.constant 0 : i32
    %c0_i32_1 = arith.constant 0 : i32
    %c0_i32_2 = arith.constant 0 : i32
    return %c0_i32, %c0_i32_0, %c0_i32_1 : i32, i32, i32
  }
  func.func @transform_2(%arg0: i32) -> (i32, i32) {
    %c0_i32 = arith.constant 0 : i32
    %c0_i32_0 = arith.constant 0 : i32
    %c0_i32_1 = arith.constant 0 : i32
    return %c0_i32, %c0_i32_0 : i32, i32
  }
  func.func @transform_3(%arg0: i32) -> (i32, i32) {
    %c0_i32 = arith.constant 0 : i32
    %c0_i32_0 = arith.constant 0 : i32
    %c0_i32_1 = arith.constant 0 : i32
    return %c0_i32, %c0_i32_0 : i32, i32
  }
  func.func @transform_4(%arg0: i32) -> (i32, i32, i32) {
    %c0_i32 = arith.constant 0 : i32
    %c0_i32_0 = arith.constant 0 : i32
    %c0_i32_1 = arith.constant 0 : i32
    return %arg0, %c0_i32, %c0_i32_0 : i32, i32, i32
  }
}

module attributes {stable_mosaic.version = 11 : i64} {
  func.func @_flat_conv_kernel(%arg0: i32, %arg1: memref<1x6x256xbf16, #tpu.memory_space<vmem>>, %arg2: memref<3x256x512xbf16, #tpu.memory_space<vmem>>, %arg3: memref<1x512xf32, #tpu.memory_space<vmem>>, %arg4: memref<4x1xf32, #tpu.memory_space<vmem>>, %arg5: memref<1x4x512xbf16, #tpu.memory_space<vmem>>, %arg6: memref<4x512xf32, #tpu.memory_space<vmem>>) attributes {dimension_semantics = [#tpu.dimension_semantics<parallel>], iteration_bounds = array<i64: 2>, scalar_prefetch = 0 : i64, scratch_operands = 1 : i64, tpu.core_type = #tpu.core_type<tc>, window_params = [{transform_indices = @transform_0, window_bounds = array<i64: 1, 6, 256>}, {pipeline_mode = #tpu.pipeline_mode<synchronous>, transform_indices = @transform_1, window_bounds = array<i64: 3, 256, 512>}, {pipeline_mode = #tpu.pipeline_mode<synchronous>, transform_indices = @transform_2, window_bounds = array<i64: 1, 512>}, {pipeline_mode = #tpu.pipeline_mode<synchronous>, transform_indices = @transform_3, window_bounds = array<i64: 4, 1>}, {transform_indices = @transform_4, window_bounds = array<i64: 1, 4, 512>}]} {
    %cst = arith.constant 0.000000e+00 : f32
    %0 = vector.broadcast %cst : f32 to vector<4x512xf32>
    %c0 = arith.constant 0 : index
    %c0_0 = arith.constant 0 : index
    %1 = vector.load %arg6[%c0, %c0_0] : memref<4x512xf32, #tpu.memory_space<vmem>>, vector<4x512xf32>
    tpu.vector_store %arg6[%c0, %c0_0], %0 {strides = array<i32>} : memref<4x512xf32, #tpu.memory_space<vmem>>, vector<4x512xf32>,
    %c0_1 = arith.constant 0 : index
    %c0_2 = arith.constant 0 : index
    %c0_3 = arith.constant 0 : index
    %2 = vector.load %arg1[%c0_1, %c0_2, %c0_3] : memref<1x6x256xbf16, #tpu.memory_space<vmem>>, vector<1x4x256xbf16>
    %3 = vector.shape_cast %2 : vector<1x4x256xbf16> to vector<4x256xbf16>
    %c0_4 = arith.constant 0 : index
    %c0_5 = arith.constant 0 : index
    %c0_6 = arith.constant 0 : index
    %4 = vector.load %arg2[%c0_4, %c0_5, %c0_6] : memref<3x256x512xbf16, #tpu.memory_space<vmem>>, vector<1x256x512xbf16>
    %5 = vector.shape_cast %4 : vector<1x256x512xbf16> to vector<256x512xbf16>
    %c0_7 = arith.constant 0 : index
    %c0_8 = arith.constant 0 : index
    %6 = vector.load %arg6[%c0_7, %c0_8] : memref<4x512xf32, #tpu.memory_space<vmem>>, vector<4x512xf32>
    %cst_9 = arith.constant dense<0.000000e+00> : vector<4x512xf32>
    %7 = tpu.matmul %3, %5, %cst_9 {dimension_numbers = #tpu.dot_dimension_numbers<[1], [0], [0], [1], [0, 0, 1, 1], [], []>} : vector<4x256xbf16>, vector<256x512xbf16>, vector<4x512xf32> -> vector<4x512xf32>
    %8 = arith.addf %6, %7 : vector<4x512xf32>
    %c0_10 = arith.constant 0 : index
    %c0_11 = arith.constant 0 : index
    %9 = vector.load %arg6[%c0_10, %c0_11] : memref<4x512xf32, #tpu.memory_space<vmem>>, vector<4x512xf32>
    tpu.vector_store %arg6[%c0_10, %c0_11], %8 {strides = array<i32>} : memref<4x512xf32, #tpu.memory_space<vmem>>, vector<4x512xf32>,
    %c0_12 = arith.constant 0 : index
    %c1 = arith.constant 1 : index
    %c0_13 = arith.constant 0 : index
    %10 = vector.load %arg1[%c0_12, %c1, %c0_13] : memref<1x6x256xbf16, #tpu.memory_space<vmem>>, vector<1x4x256xbf16>
    %11 = vector.shape_cast %10 : vector<1x4x256xbf16> to vector<4x256xbf16>
    %c1_14 = arith.constant 1 : index
    %c0_15 = arith.constant 0 : index
    %c0_16 = arith.constant 0 : index
    %12 = vector.load %arg2[%c1_14, %c0_15, %c0_16] : memref<3x256x512xbf16, #tpu.memory_space<vmem>>, vector<1x256x512xbf16>
    %13 = vector.shape_cast %12 : vector<1x256x512xbf16> to vector<256x512xbf16>
    %c0_17 = arith.constant 0 : index
    %c0_18 = arith.constant 0 : index
    %14 = vector.load %arg6[%c0_17, %c0_18] : memref<4x512xf32, #tpu.memory_space<vmem>>, vector<4x512xf32>
    %cst_19 = arith.constant dense<0.000000e+00> : vector<4x512xf32>
    %15 = tpu.matmul %11, %13, %cst_19 {dimension_numbers = #tpu.dot_dimension_numbers<[1], [0], [0], [1], [0, 0, 1, 1], [], []>} : vector<4x256xbf16>, vector<256x512xbf16>, vector<4x512xf32> -> vector<4x512xf32>
    %16 = arith.addf %14, %15 : vector<4x512xf32>
    %c0_20 = arith.constant 0 : index
    %c0_21 = arith.constant 0 : index
    %17 = vector.load %arg6[%c0_20, %c0_21] : memref<4x512xf32, #tpu.memory_space<vmem>>, vector<4x512xf32>
    tpu.vector_store %arg6[%c0_20, %c0_21], %16 {strides = array<i32>} : memref<4x512xf32, #tpu.memory_space<vmem>>, vector<4x512xf32>,
    %c0_22 = arith.constant 0 : index
    %c2 = arith.constant 2 : index
    %c0_23 = arith.constant 0 : index
    %18 = vector.load %arg1[%c0_22, %c2, %c0_23] : memref<1x6x256xbf16, #tpu.memory_space<vmem>>, vector<1x4x256xbf16>
    %19 = vector.shape_cast %18 : vector<1x4x256xbf16> to vector<4x256xbf16>
    %c2_24 = arith.constant 2 : index
    %c0_25 = arith.constant 0 : index
    %c0_26 = arith.constant 0 : index
    %20 = vector.load %arg2[%c2_24, %c0_25, %c0_26] : memref<3x256x512xbf16, #tpu.memory_space<vmem>>, vector<1x256x512xbf16>
    %21 = vector.shape_cast %20 : vector<1x256x512xbf16> to vector<256x512xbf16>
    %c0_27 = arith.constant 0 : index
    %c0_28 = arith.constant 0 : index
    %22 = vector.load %arg6[%c0_27, %c0_28] : memref<4x512xf32, #tpu.memory_space<vmem>>, vector<4x512xf32>
    %cst_29 = arith.constant dense<0.000000e+00> : vector<4x512xf32>
    %23 = tpu.matmul %19, %21, %cst_29 {dimension_numbers = #tpu.dot_dimension_numbers<[1], [0], [0], [1], [0, 0, 1, 1], [], []>} : vector<4x256xbf16>, vector<256x512xbf16>, vector<4x512xf32> -> vector<4x512xf32>
    %24 = arith.addf %22, %23 : vector<4x512xf32>
    %c0_30 = arith.constant 0 : index
    %c0_31 = arith.constant 0 : index
    %25 = vector.load %arg6[%c0_30, %c0_31] : memref<4x512xf32, #tpu.memory_space<vmem>>, vector<4x512xf32>
    tpu.vector_store %arg6[%c0_30, %c0_31], %24 {strides = array<i32>} : memref<4x512xf32, #tpu.memory_space<vmem>>, vector<4x512xf32>,
    %c0_32 = arith.constant 0 : index
    %c0_33 = arith.constant 0 : index
    %26 = vector.load %arg6[%c0_32, %c0_33] : memref<4x512xf32, #tpu.memory_space<vmem>>, vector<4x512xf32>
    %c0_34 = arith.constant 0 : index
    %c0_35 = arith.constant 0 : index
    %27 = vector.load %arg3[%c0_34, %c0_35] : memref<1x512xf32, #tpu.memory_space<vmem>>, vector<1x512xf32>
    %28 = vector.broadcast %27 : vector<1x512xf32> to vector<4x512xf32>
    %29 = arith.addf %26, %28 : vector<4x512xf32>
    %cst_36 = arith.constant 0.000000e+00 : f32
    %30 = vector.broadcast %cst_36 : f32 to vector<4x512xf32>
    %31 = arith.maximumf %29, %30 : vector<4x512xf32>
    %c0_37 = arith.constant 0 : index
    %c0_38 = arith.constant 0 : index
    %32 = vector.load %arg4[%c0_37, %c0_38] : memref<4x1xf32, #tpu.memory_space<vmem>>, vector<4x1xf32>
    %33 = vector.broadcast %32 : vector<4x1xf32> to vector<4x512xf32>
    %34 = arith.mulf %31, %33 : vector<4x512xf32>
    %35 = arith.truncf %34 : vector<4x512xf32> to vector<4x512xbf16>
    %c0_39 = arith.constant 0 : index
    %c0_40 = arith.constant 0 : index
    %c0_41 = arith.constant 0 : index
    %36 = vector.load %arg5[%c0_39, %c0_40, %c0_41] : memref<1x4x512xbf16, #tpu.memory_space<vmem>>, vector<1x4x512xbf16>
    %37 = vector.shape_cast %36 : vector<1x4x512xbf16> to vector<4x512xbf16>
    %38 = vector.shape_cast %35 : vector<4x512xbf16> to vector<1x4x512xbf16>
    tpu.vector_store %arg5[%c0_39, %c0_40, %c0_41], %38 {strides = array<i32>} : memref<1x4x512xbf16, #tpu.memory_space<vmem>>, vector<1x4x512xbf16>,
    return
  }
  func.func @transform_0(%arg0: i32) -> (i32, i32, i32) {
    %c0_i32 = arith.constant 0 : i32
    %c0_i32_0 = arith.constant 0 : i32
    %c0_i32_1 = arith.constant 0 : i32
    return %arg0, %c0_i32, %c0_i32_0 : i32, i32, i32
  }
  func.func @transform_1(%arg0: i32) -> (i32, i32, i32) {
    %c0_i32 = arith.constant 0 : i32
    %c0_i32_0 = arith.constant 0 : i32
    %c0_i32_1 = arith.constant 0 : i32
    %c0_i32_2 = arith.constant 0 : i32
    return %c0_i32, %c0_i32_0, %c0_i32_1 : i32, i32, i32
  }
  func.func @transform_2(%arg0: i32) -> (i32, i32) {
    %c0_i32 = arith.constant 0 : i32
    %c0_i32_0 = arith.constant 0 : i32
    %c0_i32_1 = arith.constant 0 : i32
    return %c0_i32, %c0_i32_0 : i32, i32
  }
  func.func @transform_3(%arg0: i32) -> (i32, i32) {
    %c0_i32 = arith.constant 0 : i32
    %c0_i32_0 = arith.constant 0 : i32
    %c0_i32_1 = arith.constant 0 : i32
    return %c0_i32, %c0_i32_0 : i32, i32
  }
  func.func @transform_4(%arg0: i32) -> (i32, i32, i32) {
    %c0_i32 = arith.constant 0 : i32
    %c0_i32_0 = arith.constant 0 : i32
    %c0_i32_1 = arith.constant 0 : i32
    return %arg0, %c0_i32, %c0_i32_0 : i32, i32, i32
  }
}

module attributes {stable_mosaic.version = 11 : i64} {
  func.func @_flat_conv_kernel(%arg0: i32, %arg1: memref<1x4x512xbf16, #tpu.memory_space<vmem>>, %arg2: memref<3x512x512xbf16, #tpu.memory_space<vmem>>, %arg3: memref<1x512xf32, #tpu.memory_space<vmem>>, %arg4: memref<2x1xf32, #tpu.memory_space<vmem>>, %arg5: memref<1x1x512xf32, #tpu.memory_space<vmem>>, %arg6: memref<2x512xf32, #tpu.memory_space<vmem>>) attributes {dimension_semantics = [#tpu.dimension_semantics<parallel>], iteration_bounds = array<i64: 2>, scalar_prefetch = 0 : i64, scratch_operands = 1 : i64, tpu.core_type = #tpu.core_type<tc>, window_params = [{transform_indices = @transform_0, window_bounds = array<i64: 1, 4, 512>}, {pipeline_mode = #tpu.pipeline_mode<synchronous>, transform_indices = @transform_1, window_bounds = array<i64: 3, 512, 512>}, {pipeline_mode = #tpu.pipeline_mode<synchronous>, transform_indices = @transform_2, window_bounds = array<i64: 1, 512>}, {pipeline_mode = #tpu.pipeline_mode<synchronous>, transform_indices = @transform_3, window_bounds = array<i64: 2, 1>}, {transform_indices = @transform_4, window_bounds = array<i64: 1, 1, 512>}]} {
    %cst = arith.constant 0.000000e+00 : f32
    %0 = vector.broadcast %cst : f32 to vector<2x512xf32>
    %c0 = arith.constant 0 : index
    %c0_0 = arith.constant 0 : index
    %1 = vector.load %arg6[%c0, %c0_0] : memref<2x512xf32, #tpu.memory_space<vmem>>, vector<2x512xf32>
    tpu.vector_store %arg6[%c0, %c0_0], %0 {strides = array<i32>} : memref<2x512xf32, #tpu.memory_space<vmem>>, vector<2x512xf32>,
    %c0_1 = arith.constant 0 : index
    %c0_2 = arith.constant 0 : index
    %c0_3 = arith.constant 0 : index
    %2 = vector.load %arg1[%c0_1, %c0_2, %c0_3] : memref<1x4x512xbf16, #tpu.memory_space<vmem>>, vector<1x2x512xbf16>
    %3 = vector.shape_cast %2 : vector<1x2x512xbf16> to vector<2x512xbf16>
    %c0_4 = arith.constant 0 : index
    %c0_5 = arith.constant 0 : index
    %c0_6 = arith.constant 0 : index
    %4 = vector.load %arg2[%c0_4, %c0_5, %c0_6] : memref<3x512x512xbf16, #tpu.memory_space<vmem>>, vector<1x512x512xbf16>
    %5 = vector.shape_cast %4 : vector<1x512x512xbf16> to vector<512x512xbf16>
    %c0_7 = arith.constant 0 : index
    %c0_8 = arith.constant 0 : index
    %6 = vector.load %arg6[%c0_7, %c0_8] : memref<2x512xf32, #tpu.memory_space<vmem>>, vector<2x512xf32>
    %cst_9 = arith.constant dense<0.000000e+00> : vector<2x512xf32>
    %7 = tpu.matmul %3, %5, %cst_9 {dimension_numbers = #tpu.dot_dimension_numbers<[1], [0], [0], [1], [0, 0, 1, 1], [], []>} : vector<2x512xbf16>, vector<512x512xbf16>, vector<2x512xf32> -> vector<2x512xf32>
    %8 = arith.addf %6, %7 : vector<2x512xf32>
    %c0_10 = arith.constant 0 : index
    %c0_11 = arith.constant 0 : index
    %9 = vector.load %arg6[%c0_10, %c0_11] : memref<2x512xf32, #tpu.memory_space<vmem>>, vector<2x512xf32>
    tpu.vector_store %arg6[%c0_10, %c0_11], %8 {strides = array<i32>} : memref<2x512xf32, #tpu.memory_space<vmem>>, vector<2x512xf32>,
    %c0_12 = arith.constant 0 : index
    %c1 = arith.constant 1 : index
    %c0_13 = arith.constant 0 : index
    %10 = vector.load %arg1[%c0_12, %c1, %c0_13] : memref<1x4x512xbf16, #tpu.memory_space<vmem>>, vector<1x2x512xbf16>
    %11 = vector.shape_cast %10 : vector<1x2x512xbf16> to vector<2x512xbf16>
    %c1_14 = arith.constant 1 : index
    %c0_15 = arith.constant 0 : index
    %c0_16 = arith.constant 0 : index
    %12 = vector.load %arg2[%c1_14, %c0_15, %c0_16] : memref<3x512x512xbf16, #tpu.memory_space<vmem>>, vector<1x512x512xbf16>
    %13 = vector.shape_cast %12 : vector<1x512x512xbf16> to vector<512x512xbf16>
    %c0_17 = arith.constant 0 : index
    %c0_18 = arith.constant 0 : index
    %14 = vector.load %arg6[%c0_17, %c0_18] : memref<2x512xf32, #tpu.memory_space<vmem>>, vector<2x512xf32>
    %cst_19 = arith.constant dense<0.000000e+00> : vector<2x512xf32>
    %15 = tpu.matmul %11, %13, %cst_19 {dimension_numbers = #tpu.dot_dimension_numbers<[1], [0], [0], [1], [0, 0, 1, 1], [], []>} : vector<2x512xbf16>, vector<512x512xbf16>, vector<2x512xf32> -> vector<2x512xf32>
    %16 = arith.addf %14, %15 : vector<2x512xf32>
    %c0_20 = arith.constant 0 : index
    %c0_21 = arith.constant 0 : index
    %17 = vector.load %arg6[%c0_20, %c0_21] : memref<2x512xf32, #tpu.memory_space<vmem>>, vector<2x512xf32>
    tpu.vector_store %arg6[%c0_20, %c0_21], %16 {strides = array<i32>} : memref<2x512xf32, #tpu.memory_space<vmem>>, vector<2x512xf32>,
    %c0_22 = arith.constant 0 : index
    %c2 = arith.constant 2 : index
    %c0_23 = arith.constant 0 : index
    %18 = vector.load %arg1[%c0_22, %c2, %c0_23] : memref<1x4x512xbf16, #tpu.memory_space<vmem>>, vector<1x2x512xbf16>
    %19 = vector.shape_cast %18 : vector<1x2x512xbf16> to vector<2x512xbf16>
    %c2_24 = arith.constant 2 : index
    %c0_25 = arith.constant 0 : index
    %c0_26 = arith.constant 0 : index
    %20 = vector.load %arg2[%c2_24, %c0_25, %c0_26] : memref<3x512x512xbf16, #tpu.memory_space<vmem>>, vector<1x512x512xbf16>
    %21 = vector.shape_cast %20 : vector<1x512x512xbf16> to vector<512x512xbf16>
    %c0_27 = arith.constant 0 : index
    %c0_28 = arith.constant 0 : index
    %22 = vector.load %arg6[%c0_27, %c0_28] : memref<2x512xf32, #tpu.memory_space<vmem>>, vector<2x512xf32>
    %cst_29 = arith.constant dense<0.000000e+00> : vector<2x512xf32>
    %23 = tpu.matmul %19, %21, %cst_29 {dimension_numbers = #tpu.dot_dimension_numbers<[1], [0], [0], [1], [0, 0, 1, 1], [], []>} : vector<2x512xbf16>, vector<512x512xbf16>, vector<2x512xf32> -> vector<2x512xf32>
    %24 = arith.addf %22, %23 : vector<2x512xf32>
    %c0_30 = arith.constant 0 : index
    %c0_31 = arith.constant 0 : index
    %25 = vector.load %arg6[%c0_30, %c0_31] : memref<2x512xf32, #tpu.memory_space<vmem>>, vector<2x512xf32>
    tpu.vector_store %arg6[%c0_30, %c0_31], %24 {strides = array<i32>} : memref<2x512xf32, #tpu.memory_space<vmem>>, vector<2x512xf32>,
    %c0_32 = arith.constant 0 : index
    %c0_33 = arith.constant 0 : index
    %26 = vector.load %arg6[%c0_32, %c0_33] : memref<2x512xf32, #tpu.memory_space<vmem>>, vector<2x512xf32>
    %c0_34 = arith.constant 0 : index
    %c0_35 = arith.constant 0 : index
    %27 = vector.load %arg3[%c0_34, %c0_35] : memref<1x512xf32, #tpu.memory_space<vmem>>, vector<1x512xf32>
    %28 = vector.broadcast %27 : vector<1x512xf32> to vector<2x512xf32>
    %29 = arith.addf %26, %28 : vector<2x512xf32>
    %cst_36 = arith.constant 0.000000e+00 : f32
    %30 = vector.broadcast %cst_36 : f32 to vector<2x512xf32>
    %31 = arith.maximumf %29, %30 : vector<2x512xf32>
    %c0_37 = arith.constant 0 : index
    %c0_38 = arith.constant 0 : index
    %32 = vector.load %arg4[%c0_37, %c0_38] : memref<2x1xf32, #tpu.memory_space<vmem>>, vector<2x1xf32>
    %33 = vector.broadcast %32 : vector<2x1xf32> to vector<2x512xf32>
    %34 = arith.mulf %31, %33 : vector<2x512xf32>
    %cst_39 = arith.constant dense<0.000000e+00> : vector<512xf32>
    %35 = vector.multi_reduction <add>, %34, %cst_39 [0] : vector<2x512xf32> to vector<512xf32>
    %36 = vector.shape_cast %35 : vector<512xf32> to vector<1x512xf32>
    %cst_40 = arith.constant 5.000000e-01 : f32
    %37 = vector.broadcast %cst_40 : f32 to vector<1x512xf32>
    %38 = arith.mulf %36, %37 : vector<1x512xf32>
    %c0_41 = arith.constant 0 : index
    %c0_42 = arith.constant 0 : index
    %c0_43 = arith.constant 0 : index
    %39 = vector.load %arg5[%c0_41, %c0_42, %c0_43] : memref<1x1x512xf32, #tpu.memory_space<vmem>>, vector<1x1x512xf32>
    %40 = vector.shape_cast %39 : vector<1x1x512xf32> to vector<1x512xf32>
    %41 = vector.shape_cast %38 : vector<1x512xf32> to vector<1x1x512xf32>
    tpu.vector_store %arg5[%c0_41, %c0_42, %c0_43], %41 {strides = array<i32>} : memref<1x1x512xf32, #tpu.memory_space<vmem>>, vector<1x1x512xf32>,
    return
  }
  func.func @transform_0(%arg0: i32) -> (i32, i32, i32) {
    %c0_i32 = arith.constant 0 : i32
    %c0_i32_0 = arith.constant 0 : i32
    %c0_i32_1 = arith.constant 0 : i32
    return %arg0, %c0_i32, %c0_i32_0 : i32, i32, i32
  }
  func.func @transform_1(%arg0: i32) -> (i32, i32, i32) {
    %c0_i32 = arith.constant 0 : i32
    %c0_i32_0 = arith.constant 0 : i32
    %c0_i32_1 = arith.constant 0 : i32
    %c0_i32_2 = arith.constant 0 : i32
    return %c0_i32, %c0_i32_0, %c0_i32_1 : i32, i32, i32
  }
  func.func @transform_2(%arg0: i32) -> (i32, i32) {
    %c0_i32 = arith.constant 0 : i32
    %c0_i32_0 = arith.constant 0 : i32
    %c0_i32_1 = arith.constant 0 : i32
    return %c0_i32, %c0_i32_0 : i32, i32
  }
  func.func @transform_3(%arg0: i32) -> (i32, i32) {
    %c0_i32 = arith.constant 0 : i32
    %c0_i32_0 = arith.constant 0 : i32
    %c0_i32_1 = arith.constant 0 : i32
    return %c0_i32, %c0_i32_0 : i32, i32
  }
  func.func @transform_4(%arg0: i32) -> (i32, i32, i32) {
    %c0_i32 = arith.constant 0 : i32
    %c0_i32_0 = arith.constant 0 : i32
    %c0_i32_1 = arith.constant 0 : i32
    return %arg0, %c0_i32, %c0_i32_0 : i32, i32, i32
  }
}

module attributes {stable_mosaic.version = 11 : i64} {
  func.func @_classifier_kernel(%arg0: memref<2x1024xf32, #tpu.memory_space<vmem>>, %arg1: memref<1024x512xbf16, #tpu.memory_space<vmem>>, %arg2: memref<1x512xf32, #tpu.memory_space<vmem>>, %arg3: memref<512x256xbf16, #tpu.memory_space<vmem>>, %arg4: memref<1x256xf32, #tpu.memory_space<vmem>>, %arg5: memref<256x12xbf16, #tpu.memory_space<vmem>>, %arg6: memref<1x12xf32, #tpu.memory_space<vmem>>, %arg7: memref<2x12xf32, #tpu.memory_space<vmem>>) attributes {dimension_semantics = [], scalar_prefetch = 0 : i64, scratch_operands = 0 : i64, tpu.core_type = #tpu.core_type<tc>} {
    %c0 = arith.constant 0 : index
    %c0_0 = arith.constant 0 : index
    %0 = vector.load %arg0[%c0, %c0_0] : memref<2x1024xf32, #tpu.memory_space<vmem>>, vector<2x1024xf32>
    %1 = arith.truncf %0 : vector<2x1024xf32> to vector<2x1024xbf16>
    %c0_1 = arith.constant 0 : index
    %c0_2 = arith.constant 0 : index
    %2 = vector.load %arg1[%c0_1, %c0_2] : memref<1024x512xbf16, #tpu.memory_space<vmem>>, vector<1024x512xbf16>
    %cst = arith.constant dense<0.000000e+00> : vector<2x512xf32>
    %3 = tpu.matmul %1, %2, %cst {dimension_numbers = #tpu.dot_dimension_numbers<[1], [0], [0], [1], [0, 0, 1, 1], [], []>} : vector<2x1024xbf16>, vector<1024x512xbf16>, vector<2x512xf32> -> vector<2x512xf32>
    %c0_3 = arith.constant 0 : index
    %c0_4 = arith.constant 0 : index
    %4 = vector.load %arg2[%c0_3, %c0_4] : memref<1x512xf32, #tpu.memory_space<vmem>>, vector<1x512xf32>
    %5 = vector.broadcast %4 : vector<1x512xf32> to vector<2x512xf32>
    %6 = arith.addf %3, %5 : vector<2x512xf32>
    %cst_5 = arith.constant 0.000000e+00 : f32
    %7 = vector.broadcast %cst_5 : f32 to vector<2x512xf32>
    %8 = arith.maximumf %6, %7 : vector<2x512xf32>
    %9 = arith.truncf %8 : vector<2x512xf32> to vector<2x512xbf16>
    %c0_6 = arith.constant 0 : index
    %c0_7 = arith.constant 0 : index
    %10 = vector.load %arg3[%c0_6, %c0_7] : memref<512x256xbf16, #tpu.memory_space<vmem>>, vector<512x256xbf16>
    %cst_8 = arith.constant dense<0.000000e+00> : vector<2x256xf32>
    %11 = tpu.matmul %9, %10, %cst_8 {dimension_numbers = #tpu.dot_dimension_numbers<[1], [0], [0], [1], [0, 0, 1, 1], [], []>} : vector<2x512xbf16>, vector<512x256xbf16>, vector<2x256xf32> -> vector<2x256xf32>
    %c0_9 = arith.constant 0 : index
    %c0_10 = arith.constant 0 : index
    %12 = vector.load %arg4[%c0_9, %c0_10] : memref<1x256xf32, #tpu.memory_space<vmem>>, vector<1x256xf32>
    %13 = vector.broadcast %12 : vector<1x256xf32> to vector<2x256xf32>
    %14 = arith.addf %11, %13 : vector<2x256xf32>
    %cst_11 = arith.constant 0.000000e+00 : f32
    %15 = vector.broadcast %cst_11 : f32 to vector<2x256xf32>
    %16 = arith.maximumf %14, %15 : vector<2x256xf32>
    %17 = arith.truncf %16 : vector<2x256xf32> to vector<2x256xbf16>
    %c0_12 = arith.constant 0 : index
    %c0_13 = arith.constant 0 : index
    %18 = vector.load %arg5[%c0_12, %c0_13] : memref<256x12xbf16, #tpu.memory_space<vmem>>, vector<256x12xbf16>
    %cst_14 = arith.constant dense<0.000000e+00> : vector<2x12xf32>
    %19 = tpu.matmul %17, %18, %cst_14 {dimension_numbers = #tpu.dot_dimension_numbers<[1], [0], [0], [1], [0, 0, 1, 1], [], []>} : vector<2x256xbf16>, vector<256x12xbf16>, vector<2x12xf32> -> vector<2x12xf32>
    %c0_15 = arith.constant 0 : index
    %c0_16 = arith.constant 0 : index
    %20 = vector.load %arg6[%c0_15, %c0_16] : memref<1x12xf32, #tpu.memory_space<vmem>>, vector<1x12xf32>
    %21 = vector.broadcast %20 : vector<1x12xf32> to vector<2x12xf32>
    %22 = arith.addf %19, %21 : vector<2x12xf32>
    %c0_17 = arith.constant 0 : index
    %c0_18 = arith.constant 0 : index
    %23 = vector.load %arg7[%c0_17, %c0_18] : memref<2x12xf32, #tpu.memory_space<vmem>>, vector<2x12xf32>
    tpu.vector_store %arg7[%c0_17, %c0_18], %22 {strides = array<i32>} : memref<2x12xf32, #tpu.memory_space<vmem>>, vector<2x12xf32>,
    return
  }
}

</mosaic_0001>

<llo_original>
// kernel: tpu_custom_call.1
$region0: #{tpu_custom_call.1}
  #allocation0 [shape = 'u32[]', space=smem, size = 0x4, offset = 0x4, fixed_abs, tag = 'smem constant byte address 0x4 - core index']
  #allocation1 [shape = 'u32[144,128]{1,0:T(1,128)}', space=vmem, size = 0x12000, scoped, tag = 'internal scratch']
  %s0 = inlined_call_operand.hbm [shape: f32[8,128], index: 0, kind: input, shape index: {}]
  %s1 = inlined_call_operand.hbm [shape: f32[8,128], index: 1, kind: output, shape index: {}]
  %s2 = sld [smem:[#allocation0]]
  $region41: #{tpu_custom_call.1} parent=0
    _
  %s4 = ssub.s32 1, %s2
  %s5 = scalar_select 0, %s4, %s2
  $region1: #{tpu_custom_call.1} parent=0
    #allocation2 [shape = 'u8[4096]{0}', space=vmem, size = 0x1000, scoped, tag = 'input window, operand 0, single buffered']
    #allocation3 [shape = 's32[2]{0}', space=sflag, size = 0x8, scoped, tag = 'scoped memory for tpu_custom_call.1']
    #allocation4 [shape = 's32[2]{0}', space=sflag, size = 0x8, scoped, tag = 'scoped memory for tpu_custom_call.1']
    #allocation5 [shape = 'u8[4096]{0}', space=vmem, size = 0x1000, scoped, tag = 'output window, operand 0, single buffered']
    %6 = vsyncpa [#allocation3], 0
    %7 = vsyncpa [#allocation4], 0
    loop: start=0, step=1, limit=4
    $region2: #{tpu_custom_call.1} parent=1 // loop_pre_header
      _
    $region3: #{tpu_custom_call.1} parent=1 // loop_header
      %s9 = sphi 0, %s13
      %p10 = scmp.ge.s32.totalorder %s9, 4
      %s17 = sphi 0, %s17
      %s19 = sphi 0, %s17
      %s20 = sphi 0, %s19
      %s34 = sphi 0, %s20
      %s38 = sphi 0, %s38
      %s40 = sphi 0, %s38
      %s41 = sphi 0, %s40
      %s55 = sphi 0, %s41
    $region4: #{tpu_custom_call.1} parent=1 // loop_header_branch
      %12 = sbr.rel (%p10) target = $region8
    $region5: #{tpu_custom_call.1} parent=1 // loop_body
      %s14 = ssub.s32 %s9, 1
      %s15 = ssub.s32 %s9, 2
      %s16 = sadd.s32 %s9, 1
      %s18 = sadd.s32 %s17, 1
      %p21 = scmp.eq.s32.totalorder %s9, 1
      %p22 = scmp.ne.s32.totalorder %s17, %s19
      %p23 = scmp.eq.s32.totalorder %s9, 0
      %p24 = por %p22, %p23
      %p25 = scmp.ne.s32.totalorder %s17, %s19
      %p26 = scmp.eq.s32.totalorder %s14, 1
      %p27 = por %p25, %p26
      %p28 = scmp.ne.s32.totalorder %s19, %s20
      %p29 = scmp.eq.s32.totalorder %s14, 0
      %p30 = por %p28, %p29
      %p31 = scmp.ne.s32.totalorder %s19, %s20
      %p32 = scmp.eq.s32.totalorder %s15, 1
      %p33 = por %p31, %p32
      %p35 = scmp.ne.s32.totalorder %s20, %s34
      %p36 = scmp.eq.s32.totalorder %s15, 0
      %p37 = por %p35, %p36
      %s39 = sadd.s32 %s38, 1
      %p42 = scmp.eq.s32.totalorder %s9, 1
      %p43 = scmp.ne.s32.totalorder %s38, %s40
      %p44 = scmp.eq.s32.totalorder %s9, 0
      %p45 = por %p43, %p44
      %p46 = scmp.ne.s32.totalorder %s38, %s40
      %p47 = scmp.eq.s32.totalorder %s14, 1
      %p48 = por %p46, %p47
      %p49 = scmp.ne.s32.totalorder %s40, %s41
      %p50 = scmp.eq.s32.totalorder %s14, 0
      %p51 = por %p49, %p50
      %p52 = scmp.ne.s32.totalorder %s40, %s41
      %p53 = scmp.eq.s32.totalorder %s15, 1
      %p54 = por %p52, %p53
      %p56 = scmp.ne.s32.totalorder %s41, %s55
      %p57 = scmp.eq.s32.totalorder %s15, 0
      %p58 = por %p56, %p57
      %p59 = scmp.le.s32.totalorder 1, %s9
      %p60 = scmp.lt.s32.totalorder %s9, 3
      %p61 = pnand %p59, %p60
      %p62 = pneg %p61
      // Predicated region
      $region9: #{tpu_custom_call.1} parent=5 // pred_check
        _
      $region10: #{tpu_custom_call.1} parent=5 // pred_check_branch
        %64 = sbr.rel (%p61) target = $region12
      $region11: #{tpu_custom_call.1} parent=5 // pred_region
        %s65 = ssub.s32 %s9, 1
        // Predicated region
        $region13: #{tpu_custom_call.1} parent=11 // pred_check
          %p66 = pneg %p30
        $region14: #{tpu_custom_call.1} parent=11 // pred_check_branch
          %68 = sbr.rel (%p66) target = $region16
        $region15: #{tpu_custom_call.1} parent=11 // pred_region
          %s70 = ssub.s32 128, 128
          %71 = vsyncadd [#allocation3], %s70
          %s73 = sshll.u32 [#allocation2], 4
          %s74 = int_to_ptr.vmem [resolvable:$true] %s73
          %76 = dma.hbm_to_vmem [thread:$0]  %s0, 128, %s74, [#allocation3]
        $region16: #{tpu_custom_call.1} parent=11 // pred_fallthru
          _
      $region12: #{tpu_custom_call.1} parent=5 // pred_fallthru
        _
      %p77 = scmp.lt.s32.totalorder %s9, 2
      // Predicated region
      $region17: #{tpu_custom_call.1} parent=5 // pred_check
        %p78 = pneg %p77
      $region18: #{tpu_custom_call.1} parent=5 // pred_check_branch
        %80 = sbr.rel (%p78) target = $region20
      $region19: #{tpu_custom_call.1} parent=5 // pred_region
        _
      $region20: #{tpu_custom_call.1} parent=5 // pred_fallthru
        _
      %p81 = scmp.le.s32.totalorder 1, %s9
      %p82 = scmp.lt.s32.totalorder %s9, 3
      %p83 = pnand %p81, %p82
      %p84 = pneg %p83
      // Predicated region
      $region21: #{tpu_custom_call.1} parent=5 // pred_check
        _
      $region22: #{tpu_custom_call.1} parent=5 // pred_check_branch
        %86 = sbr.rel (%p83) target = $region24
      $region23: #{tpu_custom_call.1} parent=5 // pred_region
        %s87 = ssub.s32 %s9, 1
        // Predicated region
        $region25: #{tpu_custom_call.1} parent=23 // pred_check
          %p88 = pneg %p30
        $region26: #{tpu_custom_call.1} parent=23 // pred_check_branch
          %90 = sbr.rel (%p88) target = $region28
        $region27: #{tpu_custom_call.1} parent=23 // pred_region
          %91 = dma.done [#allocation3], 128
        $region28: #{tpu_custom_call.1} parent=23 // pred_fallthru
          _
        %p92 = pneg %p30
        %p93 = pneg %p27
        %p94 = pneg %p51
        %p95 = pneg %p48
        %v96 = vld [vmem:[#allocation2] sm:$0xff]
        %97 = vst [vmem:[#allocation5] sm:$0xff] %v96
        // Predicated region
        $region29: #{tpu_custom_call.1} parent=23 // pred_check
          %p98 = pneg %p48
        $region30: #{tpu_custom_call.1} parent=23 // pred_check_branch
          %100 = sbr.rel (%p98) target = $region32
        $region31: #{tpu_custom_call.1} parent=23 // pred_region
          %s102 = ssub.s32 128, 128
          %103 = vsyncadd [#allocation4], %s102
          %s105 = sshll.u32 [#allocation5], 4
          %s106 = int_to_ptr.vmem [resolvable:$true] %s105
          %108 = dma.vmem_to_hbm [thread:$0]  %s106, 128, %s1, [#allocation4]
        $region32: #{tpu_custom_call.1} parent=23 // pred_fallthru
          _
        // Predicated region
        $region33: #{tpu_custom_call.1} parent=23 // pred_check
          %p109 = pneg %p48
        $region34: #{tpu_custom_call.1} parent=23 // pred_check_branch
          %111 = sbr.rel (%p109) target = $region36
        $region35: #{tpu_custom_call.1} parent=23 // pred_region
          %112 = dma.done [#allocation4], 128
        $region36: #{tpu_custom_call.1} parent=23 // pred_fallthru
          _
      $region24: #{tpu_custom_call.1} parent=5 // pred_fallthru
        _
      %p113 = scmp.le.s32.totalorder 2, %s9
      // Predicated region
      $region37: #{tpu_custom_call.1} parent=5 // pred_check
        %p114 = pneg %p113
      $region38: #{tpu_custom_call.1} parent=5 // pred_check_branch
        %116 = sbr.rel (%p114) target = $region40
      $region39: #{tpu_custom_call.1} parent=5 // pred_region
        %s117 = ssub.s32 %s9, 2
      $region40: #{tpu_custom_call.1} parent=5 // pred_fallthru
        _
    $region6: #{tpu_custom_call.1} parent=1 // loop_footer
      %s13 = sadd.s32 1, %s9
    $region7: #{tpu_custom_call.1} parent=1 // loop_footer_branch
      %8 = sbr.rel target = $region3
    $region8: #{tpu_custom_call.1} parent=1 // loop_exit
      _
    %118 = vsyncpa [#allocation3], 1
    %s119 = scalar_lea.sflag [#allocation3], 1
    %120 = vsyncpa %s119, 1
    %121 = vsyncpa [#allocation4], 1
    %s122 = scalar_lea.sflag [#allocation4], 1
    %123 = vsyncpa %s122, 1

</llo_original>
